<compile_context>
chip_gen: v5e
topology: v5e:2x2
jax: 0.10.0
libtpu: 0.0.40
codegen_flags: <defaults>
</compile_context>

<pallas_src>
import functools

import jax
import jax.numpy as jnp
from jax.experimental import pallas as pl
from jax.experimental.pallas import tpu as pltpu


# ----------------------------------------------------------------------------
# Fused kernel: per batch -> QKV projection (all heads), sparsemax attention
# per head, attention @ V, masked x-aggregation, fc_select softmax gating,
# per-agent head mixing, head-mean for remaining entities.
# ----------------------------------------------------------------------------
def _fused_kernel(x_ref, mask_ref, wqkv_ref, wsel_ref, bsel_ref, o_ref, *,
                  n_heads, n_agents, emb_dim, temperature):
    f32 = jnp.float32
    x = x_ref[0]                      # (T, E)  compute dtype (bf16 or f32)
    m = mask_ref[0]                   # (T, T)  f32, 1.0 == masked
    wqkv = wqkv_ref[...]              # (E, 3*H*E) compute dtype

    t = m.shape[0]
    e = emb_dim
    he = n_heads * e

    # --- fused Q/K/V projection for all heads: one lane-dense MXU matmul ----
    qkv = jnp.dot(x, wqkv, preferred_element_type=f32)       # (T, 3*H*E) f32
    q_all = qkv[:, 0:he] * jnp.float32(1.0 / temperature)    # (T, H*E)
    k_all = qkv[:, he:2 * he]                                 # (T, H*E)
    v_all = qkv[:, 2 * he:3 * he]                             # (T, H*E)

    masked = m > 0.5                                          # (T, T) bool
    row_all_masked = jnp.sum(m, axis=1, keepdims=True) >= jnp.float32(t)
    neg = jnp.float32(-1e30)   # finite stand-in for -inf (NaN-free arithmetic)

    head_outs = []
    for hh in range(n_heads):
        qh = q_all[:, hh * e:(hh + 1) * e]                    # (T, E)
        kh = k_all[:, hh * e:(hh + 1) * e]
        vh = v_all[:, hh * e:(hh + 1) * e]

        # scores = qh @ kh^T (contract last dims, no explicit transpose)
        scores = jax.lax.dot_general(
            qh, kh, dimension_numbers=(((1,), (1,)), ((), ())),
            preferred_element_type=f32)                       # (T, T)

        z = jnp.where(masked, neg, scores)
        # rows with every key masked -> fill with 0 before sparsemax
        z = jnp.where(row_all_masked, 0.0, z)

        # --- sparsemax along last axis, 2D-only (no (T,T,T) broadcast) -----
        # Static loop over pivot columns; T is a small compile-time constant.
        k_star = jnp.zeros((t, 1), f32)
        cz_cols = []
        for j in range(t):
            zj = z[:, j:j + 1]                                # (T, 1) pivot
            ge = (z >= zj).astype(f32)                        # (T, T)
            cj = jnp.sum(ge, axis=1, keepdims=True)           # rank (>=) count
            sj = jnp.sum(ge * z, axis=1, keepdims=True)       # partial sum
            validj = (1.0 + cj * zj > sj).astype(f32)
            k_star = jnp.maximum(k_star, cj * validj)         # support size
            cz_cols.append((cj, zj))
        s_star = jnp.zeros((t, 1), f32)
        for cj, zj in cz_cols:
            s_star = s_star + zj * (cj <= k_star).astype(f32)
        tau = (s_star - 1.0) / k_star
        attn = jnp.maximum(z - tau, 0.0)                      # (T, T)
        # --------------------------------------------------------------------

        attn = jnp.where(row_all_masked, 0.0, attn)
        head_outs.append(
            jnp.dot(attn, vh, preferred_element_type=f32))    # (T, E) f32

    # --- gating / combine (fused, per-head results stay on-chip) -----------
    notm = (1.0 - m).astype(x.dtype)                          # (~mask).float()
    sel = notm[:n_agents, :]                                  # (A, T)
    x_ag = jnp.dot(sel, x, preferred_element_type=f32)        # (A, E)

    logits = jnp.dot(x_ag, wsel_ref[...],
                     preferred_element_type=f32) + bsel_ref[...]   # (A, H)
    logits = logits - jnp.max(logits, axis=1, keepdims=True)
    p = jnp.exp(logits)
    gate = p / jnp.sum(p, axis=1, keepdims=True)              # softmax (A, H)

    out_agent = jnp.zeros((n_agents, e), f32)
    for hh in range(n_heads):
        out_agent = out_agent + gate[:, hh:hh + 1] * head_outs[hh][:n_agents]
    o_ref[0, :n_agents, :] = out_agent.astype(o_ref.dtype)

    if t > n_agents:   # static; guards the (empty-slice) T == n_agents case
        out_other = jnp.zeros((t - n_agents, e), f32)
        for hh in range(n_heads):
            out_other = out_other + head_outs[hh][n_agents:]
        out_other = out_other * jnp.float32(1.0 / n_heads)
        o_ref[0, n_agents:, :] = out_other.astype(o_ref.dtype)


# ----------------------------------------------------------------------------
# Parameter packing (done ONCE, outside the per-call path).
# ----------------------------------------------------------------------------
def pack_params(params, *, compute_dtype=jnp.bfloat16):
    """PyTorch Linear: y = x @ W^T.  Pack W_q/W_k/W_v into one (E, 3*H*E)."""
    wq_t = jnp.asarray(params["w_q"]).T       # (E, H*E)
    wk_t = jnp.asarray(params["w_k"]).T
    wv_t = jnp.asarray(params["w_v"]).T
    w_qkv = jnp.concatenate([wq_t, wk_t, wv_t], axis=1).astype(compute_dtype)
    w_sel = jnp.asarray(params["fc_select_w"]).T.astype(jnp.float32)   # (E, H)
    b_sel = jnp.asarray(params["fc_select_b"]).reshape(1, -1).astype(jnp.float32)
    return {"w_qkv": w_qkv, "w_sel": w_sel, "b_sel": b_sel}


# ----------------------------------------------------------------------------
# Wrapper
# ----------------------------------------------------------------------------
def multi_head_entity_opt_attention(x, h, mask_bool, packed, *, n_heads,
                                    n_agents, compute_dtype=jnp.bfloat16):
    """Pallas implementation of MultiHeadEntityOPTAttention.forward (mask given)."""
    del h  # h only feeds the use_pattern bookkeeping, not the forward output
    b, t, e = x.shape
    temperature = float(e) ** 0.5
    maskf = mask_bool.astype(jnp.float32)

    kernel = functools.partial(
        _fused_kernel, n_heads=n_heads, n_agents=n_agents, emb_dim=e,
        temperature=temperature)

    call = pl.pallas_call(
        kernel,
        out_shape=jax.ShapeDtypeStruct((b, t, e), jnp.float32),
        grid=(b,),
        in_specs=[
            pl.BlockSpec((1, t, e), lambda bi: (bi, 0, 0)),              # x
            pl.BlockSpec((1, t, t), lambda bi: (bi, 0, 0)),              # mask
            pl.BlockSpec((e, 3 * n_heads * e), lambda bi: (0, 0)),       # W_qkv
            pl.BlockSpec((e, n_heads), lambda bi: (0, 0)),               # W_sel^T
            pl.BlockSpec((1, n_heads), lambda bi: (0, 0)),               # b_sel
        ],
        out_specs=pl.BlockSpec((1, t, e), lambda bi: (bi, 0, 0)),
        compiler_params=pltpu.CompilerParams(
            dimension_semantics=("parallel",)),
    )
    return call(x.astype(compute_dtype), maskf, packed["w_qkv"],
                packed["w_sel"], packed["b_sel"])


# ----------------------------------------------------------------------------
# Pure-JAX reference (mirrors the PyTorch forward) for the correctness check.
# ----------------------------------------------------------------------------
def _sparsemax_ref(z):
    zs = jnp.sort(z, axis=-1)[..., ::-1]
    K = z.shape[-1]
    ks = jnp.arange(1, K + 1, dtype=z.dtype)
    css = jnp.cumsum(zs, axis=-1)
    cond = (1.0 + ks * zs > css).astype(z.dtype)
    k_star = jnp.sum(cond, axis=-1, keepdims=True)
    s_star = jnp.take_along_axis(css, k_star.astype(jnp.int32) - 1, axis=-1)
    tau = (s_star - 1.0) / k_star
    return jnp.maximum(z - tau, 0.0)


def _reference_forward(x, h, mask_bool, params, *, n_heads, n_agents):
    del h
    b, t, e = x.shape
    temp = float(e) ** 0.5

    def proj(w):
        y = jnp.einsum("bte,fe->btf", x, w).reshape(b, t, n_heads, e)
        return jnp.transpose(y, (2, 0, 1, 3)).reshape(n_heads * b, t, e)

    q = proj(params["w_q"]); k = proj(params["w_k"]); v = proj(params["w_v"])
    mrep = jnp.tile(mask_bool, (n_heads, 1, 1))
    attn = jnp.einsum("bte,bse->bts", q / temp, k)
    attn = jnp.where(mrep, -jnp.inf, attn)
    inf_mask = jnp.all(mrep, axis=2, keepdims=True)
    attn = jnp.where(inf_mask, 0.0, attn)
    attn = _sparsemax_ref(attn)
    attn = jnp.where(inf_mask, 0.0, attn)
    out = jnp.einsum("bts,bse->bte", attn, v)
    out = jnp.transpose(out.reshape(n_heads, b, t, e), (1, 2, 0, 3))  # (B,T,H,E)

    out_agent = out[:, :n_agents]
    out_other = out[:, n_agents:]
    xa = jnp.einsum("bat,bte->bae",
                    (~mask_bool)[:, :n_agents].astype(x.dtype), x)
    logits = jnp.einsum("bae,he->bah", xa, params["fc_select_w"]) + params["fc_select_b"]
    asel = jax.nn.softmax(logits, axis=2)
    out_agent = jnp.einsum("bah,bahe->bae", asel, out_agent)
    out_other = jnp.mean(out_other, axis=2)
    return jnp.concatenate([out_agent, out_other], axis=1)


# ----------------------------------------------------------------------------
if __name__ == "__main__":
    B, T, E = 2, 8, 32
    N_HEADS, N_AGENTS, RNN_HIDDEN = 4, 3, 16

    key = jax.random.PRNGKey(0)
    ks = jax.random.split(key, 8)
    scale = 1.0 / (E ** 0.5)

    params = {
        "w_q": jax.random.normal(ks[0], (N_HEADS * E, E), jnp.float32) * scale,
        "w_k": jax.random.normal(ks[1], (N_HEADS * E, E), jnp.float32) * scale,
        "w_v": jax.random.normal(ks[2], (N_HEADS * E, E), jnp.float32) * scale,
        "fc_select_w": jax.random.normal(ks[3], (N_HEADS, E), jnp.float32) * scale,
        "fc_select_b": jax.random.normal(ks[4], (N_HEADS,), jnp.float32) * 0.1,
        # TODO(synk): fc_latent / disentangle_classifier only feed the aux-loss
        # bookkeeping (use_pattern / cal_*_loss), not the forward output.
    }

    x = jax.random.normal(ks[5], (B, T, E), jnp.float32)
    h = jax.random.normal(ks[6], (B, N_AGENTS, RNN_HIDDEN), jnp.float32)

    # Entity-padding mask: True == masked. Batch 0 has 6 valid entities,
    # batch 1 has 5 (so some rows are fully masked -> exercises inf_mask path).
    valid_counts = jnp.array([6, 5])
    valid = jnp.arange(T)[None, :] < valid_counts[:, None]           # (B, T)
    mask_bool = (~valid)[:, :, None] | (~valid)[:, None, :]           # (B, T, T)

    ref = _reference_forward(
        x, h, mask_bool, params, n_heads=N_HEADS, n_agents=N_AGENTS)
    ref = jax.block_until_ready(ref)

    # 1) f32 MXU operands: exact numerical check against the reference.
    packed_f32 = pack_params(params, compute_dtype=jnp.float32)
    out_f32 = multi_head_entity_opt_attention(
        x, h, mask_bool, packed_f32, n_heads=N_HEADS, n_agents=N_AGENTS,
        compute_dtype=jnp.float32)
    out_f32 = jax.block_until_ready(out_f32)
    assert out_f32.shape == (B, T, E)
    assert jnp.allclose(out_f32, ref, rtol=1e-4, atol=1e-4), (
        f"max abs diff {jnp.max(jnp.abs(out_f32 - ref))}")

    # 2) bf16 MXU operands (performance default on v5e/v6e/v7x): sanity check.
    packed_bf16 = pack_params(params, compute_dtype=jnp.bfloat16)
    out_bf16 = multi_head_entity_opt_attention(
        x, h, mask_bool, packed_bf16, n_heads=N_HEADS, n_agents=N_AGENTS,
        compute_dtype=jnp.bfloat16)
    out_bf16 = jax.block_until_ready(out_bf16)
    assert out_bf16.shape == (B, T, E)
    assert bool(jnp.all(jnp.isfinite(out_bf16)))
    assert jnp.allclose(out_bf16, ref, rtol=1e-1, atol=1e-1), (
        f"max abs diff {jnp.max(jnp.abs(out_bf16 - ref))}")

    print("KERNEL_OK")
</pallas_src>

<mosaic_0001>
module attributes {stable_mosaic.version = 11 : i64} {
  func.func @_fused_kernel(%arg0: i32, %arg1: memref<1x8x32xf32, #tpu.memory_space<vmem>>, %arg2: memref<1x8x8xf32, #tpu.memory_space<vmem>>, %arg3: memref<32x384xf32, #tpu.memory_space<vmem>>, %arg4: memref<32x4xf32, #tpu.memory_space<vmem>>, %arg5: memref<1x4xf32, #tpu.memory_space<vmem>>, %arg6: memref<1x8x32xf32, #tpu.memory_space<vmem>>) attributes {dimension_semantics = [#tpu.dimension_semantics<parallel>], iteration_bounds = array<i64: 2>, scalar_prefetch = 0 : i64, scratch_operands = 0 : i64, tpu.core_type = #tpu.core_type<tc>, window_params = [{transform_indices = @transform_0, window_bounds = array<i64: 1, 8, 32>}, {transform_indices = @transform_1, window_bounds = array<i64: 1, 8, 8>}, {pipeline_mode = #tpu.pipeline_mode<synchronous>, transform_indices = @transform_2, window_bounds = array<i64: 32, 384>}, {pipeline_mode = #tpu.pipeline_mode<synchronous>, transform_indices = @transform_3, window_bounds = array<i64: 32, 4>}, {pipeline_mode = #tpu.pipeline_mode<synchronous>, transform_indices = @transform_4, window_bounds = array<i64: 1, 4>}, {transform_indices = @transform_5, window_bounds = array<i64: 1, 8, 32>}]} {
    %c0 = arith.constant 0 : index
    %c0_0 = arith.constant 0 : index
    %c0_1 = arith.constant 0 : index
    %0 = vector.load %arg1[%c0, %c0_0, %c0_1] : memref<1x8x32xf32, #tpu.memory_space<vmem>>, vector<1x8x32xf32>
    %1 = vector.shape_cast %0 : vector<1x8x32xf32> to vector<8x32xf32>
    %c0_2 = arith.constant 0 : index
    %c0_3 = arith.constant 0 : index
    %c0_4 = arith.constant 0 : index
    %2 = vector.load %arg2[%c0_2, %c0_3, %c0_4] : memref<1x8x8xf32, #tpu.memory_space<vmem>>, vector<1x8x8xf32>
    %3 = vector.shape_cast %2 : vector<1x8x8xf32> to vector<8x8xf32>
    %c0_5 = arith.constant 0 : index
    %c0_6 = arith.constant 0 : index
    %4 = vector.load %arg3[%c0_5, %c0_6] : memref<32x384xf32, #tpu.memory_space<vmem>>, vector<32x384xf32>
    %cst = arith.constant dense<0.000000e+00> : vector<8x384xf32>
    %5 = tpu.matmul %1, %4, %cst {dimension_numbers = #tpu.dot_dimension_numbers<[1], [0], [0], [1], [0, 0, 1, 1], [], []>} : vector<8x32xf32>, vector<32x384xf32>, vector<8x384xf32> -> vector<8x384xf32>
    %6 = vector.extract_strided_slice %5 {offsets = [0, 0], sizes = [8, 128], strides = [1, 1]} : vector<8x384xf32> to vector<8x128xf32>
    %cst_7 = arith.constant 0.176776692 : f32
    %7 = vector.broadcast %cst_7 : f32 to vector<8x128xf32>
    %8 = arith.mulf %6, %7 : vector<8x128xf32>
    %9 = vector.extract_strided_slice %5 {offsets = [0, 128], sizes = [8, 128], strides = [1, 1]} : vector<8x384xf32> to vector<8x128xf32>
    %10 = vector.extract_strided_slice %5 {offsets = [0, 256], sizes = [8, 128], strides = [1, 1]} : vector<8x384xf32> to vector<8x128xf32>
    %cst_8 = arith.constant 5.000000e-01 : f32
    %11 = vector.broadcast %cst_8 : f32 to vector<8x8xf32>
    %12 = arith.cmpf ogt, %3, %11 : vector<8x8xf32>
    %cst_9 = arith.constant dense<0.000000e+00> : vector<8xf32>
    %13 = vector.multi_reduction <add>, %3, %cst_9 [1] : vector<8x8xf32> to vector<8xf32>
    %14 = vector.shape_cast %13 : vector<8xf32> to vector<8x1xf32>
    %cst_10 = arith.constant 8.000000e+00 : f32
    %15 = vector.broadcast %cst_10 : f32 to vector<8x1xf32>
    %16 = arith.cmpf oge, %14, %15 : vector<8x1xf32>
    %17 = vector.extract_strided_slice %8 {offsets = [0, 0], sizes = [8, 32], strides = [1, 1]} : vector<8x128xf32> to vector<8x32xf32>
    %18 = vector.extract_strided_slice %9 {offsets = [0, 0], sizes = [8, 32], strides = [1, 1]} : vector<8x128xf32> to vector<8x32xf32>
    %19 = vector.extract_strided_slice %10 {offsets = [0, 0], sizes = [8, 32], strides = [1, 1]} : vector<8x128xf32> to vector<8x32xf32>
    %cst_11 = arith.constant dense<0.000000e+00> : vector<8x8xf32>
    %20 = tpu.matmul %17, %18, %cst_11 {dimension_numbers = #tpu.dot_dimension_numbers<[1], [1], [0], [0], [0, 0, 1, 0], [], []>} : vector<8x32xf32>, vector<8x32xf32>, vector<8x8xf32> -> vector<8x8xf32>
    %cst_12 = arith.constant -1.000000e+30 : f32
    %21 = vector.broadcast %cst_12 : f32 to vector<8x8xf32>
    %22 = arith.select %12, %21, %20 : vector<8x8xi1>, vector<8x8xf32>
    %cst_13 = arith.constant 0.000000e+00 : f32
    %23 = vector.shape_cast %16 : vector<8x1xi1> to vector<8x1xi1>
    %24 = vector.broadcast %23 : vector<8x1xi1> to vector<8x8xi1>
    %25 = vector.broadcast %cst_13 : f32 to vector<8x8xf32>
    %26 = arith.select %24, %25, %22 : vector<8x8xi1>, vector<8x8xf32>
    %cst_14 = arith.constant 0.000000e+00 : f32
    %27 = vector.broadcast %cst_14 : f32 to vector<8x1xf32>
    %28 = vector.extract_strided_slice %26 {offsets = [0, 0], sizes = [8, 1], strides = [1, 1]} : vector<8x8xf32> to vector<8x1xf32>
    %29 = vector.broadcast %28 : vector<8x1xf32> to vector<8x8xf32>
    %30 = arith.cmpf oge, %26, %29 : vector<8x8xf32>
    %31 = arith.extui %30 : vector<8x8xi1> to vector<8x8xi32>
    %32 = arith.sitofp %31 : vector<8x8xi32> to vector<8x8xf32>
    %cst_15 = arith.constant dense<0.000000e+00> : vector<8xf32>
    %33 = vector.multi_reduction <add>, %32, %cst_15 [1] : vector<8x8xf32> to vector<8xf32>
    %34 = vector.shape_cast %33 : vector<8xf32> to vector<8x1xf32>
    %35 = arith.mulf %32, %26 : vector<8x8xf32>
    %cst_16 = arith.constant dense<0.000000e+00> : vector<8xf32>
    %36 = vector.multi_reduction <add>, %35, %cst_16 [1] : vector<8x8xf32> to vector<8xf32>
    %37 = vector.shape_cast %36 : vector<8xf32> to vector<8x1xf32>
    %38 = arith.mulf %34, %28 : vector<8x1xf32>
    %cst_17 = arith.constant 1.000000e+00 : f32
    %39 = vector.broadcast %cst_17 : f32 to vector<8x1xf32>
    %40 = arith.addf %39, %38 : vector<8x1xf32>
    %41 = arith.cmpf ogt, %40, %37 : vector<8x1xf32>
    %42 = arith.extui %41 : vector<8x1xi1> to vector<8x1xi32>
    %43 = arith.sitofp %42 : vector<8x1xi32> to vector<8x1xf32>
    %44 = arith.mulf %34, %43 : vector<8x1xf32>
    %45 = arith.maximumf %27, %44 : vector<8x1xf32>
    %46 = vector.extract_strided_slice %26 {offsets = [0, 1], sizes = [8, 1], strides = [1, 1]} : vector<8x8xf32> to vector<8x1xf32>
    %47 = vector.broadcast %46 : vector<8x1xf32> to vector<8x8xf32>
    %48 = arith.cmpf oge, %26, %47 : vector<8x8xf32>
    %49 = arith.extui %48 : vector<8x8xi1> to vector<8x8xi32>
    %50 = arith.sitofp %49 : vector<8x8xi32> to vector<8x8xf32>
    %cst_18 = arith.constant dense<0.000000e+00> : vector<8xf32>
    %51 = vector.multi_reduction <add>, %50, %cst_18 [1] : vector<8x8xf32> to vector<8xf32>
    %52 = vector.shape_cast %51 : vector<8xf32> to vector<8x1xf32>
    %53 = arith.mulf %50, %26 : vector<8x8xf32>
    %cst_19 = arith.constant dense<0.000000e+00> : vector<8xf32>
    %54 = vector.multi_reduction <add>, %53, %cst_19 [1] : vector<8x8xf32> to vector<8xf32>
    %55 = vector.shape_cast %54 : vector<8xf32> to vector<8x1xf32>
    %56 = arith.mulf %52, %46 : vector<8x1xf32>
    %cst_20 = arith.constant 1.000000e+00 : f32
    %57 = vector.broadcast %cst_20 : f32 to vector<8x1xf32>
    %58 = arith.addf %57, %56 : vector<8x1xf32>
    %59 = arith.cmpf ogt, %58, %55 : vector<8x1xf32>
    %60 = arith.extui %59 : vector<8x1xi1> to vector<8x1xi32>
    %61 = arith.sitofp %60 : vector<8x1xi32> to vector<8x1xf32>
    %62 = arith.mulf %52, %61 : vector<8x1xf32>
    %63 = arith.maximumf %45, %62 : vector<8x1xf32>
    %64 = vector.extract_strided_slice %26 {offsets = [0, 2], sizes = [8, 1], strides = [1, 1]} : vector<8x8xf32> to vector<8x1xf32>
    %65 = vector.broadcast %64 : vector<8x1xf32> to vector<8x8xf32>
    %66 = arith.cmpf oge, %26, %65 : vector<8x8xf32>
    %67 = arith.extui %66 : vector<8x8xi1> to vector<8x8xi32>
    %68 = arith.sitofp %67 : vector<8x8xi32> to vector<8x8xf32>
    %cst_21 = arith.constant dense<0.000000e+00> : vector<8xf32>
    %69 = vector.multi_reduction <add>, %68, %cst_21 [1] : vector<8x8xf32> to vector<8xf32>
    %70 = vector.shape_cast %69 : vector<8xf32> to vector<8x1xf32>
    %71 = arith.mulf %68, %26 : vector<8x8xf32>
    %cst_22 = arith.constant dense<0.000000e+00> : vector<8xf32>
    %72 = vector.multi_reduction <add>, %71, %cst_22 [1] : vector<8x8xf32> to vector<8xf32>
    %73 = vector.shape_cast %72 : vector<8xf32> to vector<8x1xf32>
    %74 = arith.mulf %70, %64 : vector<8x1xf32>
    %cst_23 = arith.constant 1.000000e+00 : f32
    %75 = vector.broadcast %cst_23 : f32 to vector<8x1xf32>
    %76 = arith.addf %75, %74 : vector<8x1xf32>
    %77 = arith.cmpf ogt, %76, %73 : vector<8x1xf32>
    %78 = arith.extui %77 : vector<8x1xi1> to vector<8x1xi32>
    %79 = arith.sitofp %78 : vector<8x1xi32> to vector<8x1xf32>
    %80 = arith.mulf %70, %79 : vector<8x1xf32>
    %81 = arith.maximumf %63, %80 : vector<8x1xf32>
    %82 = vector.extract_strided_slice %26 {offsets = [0, 3], sizes = [8, 1], strides = [1, 1]} : vector<8x8xf32> to vector<8x1xf32>
    %83 = vector.broadcast %82 : vector<8x1xf32> to vector<8x8xf32>
    %84 = arith.cmpf oge, %26, %83 : vector<8x8xf32>
    %85 = arith.extui %84 : vector<8x8xi1> to vector<8x8xi32>
    %86 = arith.sitofp %85 : vector<8x8xi32> to vector<8x8xf32>
    %cst_24 = arith.constant dense<0.000000e+00> : vector<8xf32>
    %87 = vector.multi_reduction <add>, %86, %cst_24 [1] : vector<8x8xf32> to vector<8xf32>
    %88 = vector.shape_cast %87 : vector<8xf32> to vector<8x1xf32>
    %89 = arith.mulf %86, %26 : vector<8x8xf32>
    %cst_25 = arith.constant dense<0.000000e+00> : vector<8xf32>
    %90 = vector.multi_reduction <add>, %89, %cst_25 [1] : vector<8x8xf32> to vector<8xf32>
    %91 = vector.shape_cast %90 : vector<8xf32> to vector<8x1xf32>
    %92 = arith.mulf %88, %82 : vector<8x1xf32>
    %cst_26 = arith.constant 1.000000e+00 : f32
    %93 = vector.broadcast %cst_26 : f32 to vector<8x1xf32>
    %94 = arith.addf %93, %92 : vector<8x1xf32>
    %95 = arith.cmpf ogt, %94, %91 : vector<8x1xf32>
    %96 = arith.extui %95 : vector<8x1xi1> to vector<8x1xi32>
    %97 = arith.sitofp %96 : vector<8x1xi32> to vector<8x1xf32>
    %98 = arith.mulf %88, %97 : vector<8x1xf32>
    %99 = arith.maximumf %81, %98 : vector<8x1xf32>
    %100 = vector.extract_strided_slice %26 {offsets = [0, 4], sizes = [8, 1], strides = [1, 1]} : vector<8x8xf32> to vector<8x1xf32>
    %101 = vector.broadcast %100 : vector<8x1xf32> to vector<8x8xf32>
    %102 = arith.cmpf oge, %26, %101 : vector<8x8xf32>
    %103 = arith.extui %102 : vector<8x8xi1> to vector<8x8xi32>
    %104 = arith.sitofp %103 : vector<8x8xi32> to vector<8x8xf32>
    %cst_27 = arith.constant dense<0.000000e+00> : vector<8xf32>
    %105 = vector.multi_reduction <add>, %104, %cst_27 [1] : vector<8x8xf32> to vector<8xf32>
    %106 = vector.shape_cast %105 : vector<8xf32> to vector<8x1xf32>
    %107 = arith.mulf %104, %26 : vector<8x8xf32>
    %cst_28 = arith.constant dense<0.000000e+00> : vector<8xf32>
    %108 = vector.multi_reduction <add>, %107, %cst_28 [1] : vector<8x8xf32> to vector<8xf32>
    %109 = vector.shape_cast %108 : vector<8xf32> to vector<8x1xf32>
    %110 = arith.mulf %106, %100 : vector<8x1xf32>
    %cst_29 = arith.constant 1.000000e+00 : f32
    %111 = vector.broadcast %cst_29 : f32 to vector<8x1xf32>
    %112 = arith.addf %111, %110 : vector<8x1xf32>
    %113 = arith.cmpf ogt, %112, %109 : vector<8x1xf32>
    %114 = arith.extui %113 : vector<8x1xi1> to vector<8x1xi32>
    %115 = arith.sitofp %114 : vector<8x1xi32> to vector<8x1xf32>
    %116 = arith.mulf %106, %115 : vector<8x1xf32>
    %117 = arith.maximumf %99, %116 : vector<8x1xf32>
    %118 = vector.extract_strided_slice %26 {offsets = [0, 5], sizes = [8, 1], strides = [1, 1]} : vector<8x8xf32> to vector<8x1xf32>
    %119 = vector.broadcast %118 : vector<8x1xf32> to vector<8x8xf32>
    %120 = arith.cmpf oge, %26, %119 : vector<8x8xf32>
    %121 = arith.extui %120 : vector<8x8xi1> to vector<8x8xi32>
    %122 = arith.sitofp %121 : vector<8x8xi32> to vector<8x8xf32>
    %cst_30 = arith.constant dense<0.000000e+00> : vector<8xf32>
    %123 = vector.multi_reduction <add>, %122, %cst_30 [1] : vector<8x8xf32> to vector<8xf32>
    %124 = vector.shape_cast %123 : vector<8xf32> to vector<8x1xf32>
    %125 = arith.mulf %122, %26 : vector<8x8xf32>
    %cst_31 = arith.constant dense<0.000000e+00> : vector<8xf32>
    %126 = vector.multi_reduction <add>, %125, %cst_31 [1] : vector<8x8xf32> to vector<8xf32>
    %127 = vector.shape_cast %126 : vector<8xf32> to vector<8x1xf32>
    %128 = arith.mulf %124, %118 : vector<8x1xf32>
    %cst_32 = arith.constant 1.000000e+00 : f32
    %129 = vector.broadcast %cst_32 : f32 to vector<8x1xf32>
    %130 = arith.addf %129, %128 : vector<8x1xf32>
    %131 = arith.cmpf ogt, %130, %127 : vector<8x1xf32>
    %132 = arith.extui %131 : vector<8x1xi1> to vector<8x1xi32>
    %133 = arith.sitofp %132 : vector<8x1xi32> to vector<8x1xf32>
    %134 = arith.mulf %124, %133 : vector<8x1xf32>
    %135 = arith.maximumf %117, %134 : vector<8x1xf32>
    %136 = vector.extract_strided_slice %26 {offsets = [0, 6], sizes = [8, 1], strides = [1, 1]} : vector<8x8xf32> to vector<8x1xf32>
    %137 = vector.broadcast %136 : vector<8x1xf32> to vector<8x8xf32>
    %138 = arith.cmpf oge, %26, %137 : vector<8x8xf32>
    %139 = arith.extui %138 : vector<8x8xi1> to vector<8x8xi32>
    %140 = arith.sitofp %139 : vector<8x8xi32> to vector<8x8xf32>
    %cst_33 = arith.constant dense<0.000000e+00> : vector<8xf32>
    %141 = vector.multi_reduction <add>, %140, %cst_33 [1] : vector<8x8xf32> to vector<8xf32>
    %142 = vector.shape_cast %141 : vector<8xf32> to vector<8x1xf32>
    %143 = arith.mulf %140, %26 : vector<8x8xf32>
    %cst_34 = arith.constant dense<0.000000e+00> : vector<8xf32>
    %144 = vector.multi_reduction <add>, %143, %cst_34 [1] : vector<8x8xf32> to vector<8xf32>
    %145 = vector.shape_cast %144 : vector<8xf32> to vector<8x1xf32>
    %146 = arith.mulf %142, %136 : vector<8x1xf32>
    %cst_35 = arith.constant 1.000000e+00 : f32
    %147 = vector.broadcast %cst_35 : f32 to vector<8x1xf32>
    %148 = arith.addf %147, %146 : vector<8x1xf32>
    %149 = arith.cmpf ogt, %148, %145 : vector<8x1xf32>
    %150 = arith.extui %149 : vector<8x1xi1> to vector<8x1xi32>
    %151 = arith.sitofp %150 : vector<8x1xi32> to vector<8x1xf32>
    %152 = arith.mulf %142, %151 : vector<8x1xf32>
    %153 = arith.maximumf %135, %152 : vector<8x1xf32>
    %154 = vector.extract_strided_slice %26 {offsets = [0, 7], sizes = [8, 1], strides = [1, 1]} : vector<8x8xf32> to vector<8x1xf32>
    %155 = vector.broadcast %154 : vector<8x1xf32> to vector<8x8xf32>
    %156 = arith.cmpf oge, %26, %155 : vector<8x8xf32>
    %157 = arith.extui %156 : vector<8x8xi1> to vector<8x8xi32>
    %158 = arith.sitofp %157 : vector<8x8xi32> to vector<8x8xf32>
    %cst_36 = arith.constant dense<0.000000e+00> : vector<8xf32>
    %159 = vector.multi_reduction <add>, %158, %cst_36 [1] : vector<8x8xf32> to vector<8xf32>
    %160 = vector.shape_cast %159 : vector<8xf32> to vector<8x1xf32>
    %161 = arith.mulf %158, %26 : vector<8x8xf32>
    %cst_37 = arith.constant dense<0.000000e+00> : vector<8xf32>
    %162 = vector.multi_reduction <add>, %161, %cst_37 [1] : vector<8x8xf32> to vector<8xf32>
    %163 = vector.shape_cast %162 : vector<8xf32> to vector<8x1xf32>
    %164 = arith.mulf %160, %154 : vector<8x1xf32>
    %cst_38 = arith.constant 1.000000e+00 : f32
    %165 = vector.broadcast %cst_38 : f32 to vector<8x1xf32>
    %166 = arith.addf %165, %164 : vector<8x1xf32>
    %167 = arith.cmpf ogt, %166, %163 : vector<8x1xf32>
    %168 = arith.extui %167 : vector<8x1xi1> to vector<8x1xi32>
    %169 = arith.sitofp %168 : vector<8x1xi32> to vector<8x1xf32>
    %170 = arith.mulf %160, %169 : vector<8x1xf32>
    %171 = arith.maximumf %153, %170 : vector<8x1xf32>
    %cst_39 = arith.constant 0.000000e+00 : f32
    %172 = vector.broadcast %cst_39 : f32 to vector<8x1xf32>
    %173 = arith.cmpf ole, %34, %171 : vector<8x1xf32>
    %174 = arith.extui %173 : vector<8x1xi1> to vector<8x1xi32>
    %175 = arith.sitofp %174 : vector<8x1xi32> to vector<8x1xf32>
    %176 = arith.mulf %28, %175 : vector<8x1xf32>
    %177 = arith.addf %172, %176 : vector<8x1xf32>
    %178 = arith.cmpf ole, %52, %171 : vector<8x1xf32>
    %179 = arith.extui %178 : vector<8x1xi1> to vector<8x1xi32>
    %180 = arith.sitofp %179 : vector<8x1xi32> to vector<8x1xf32>
    %181 = arith.mulf %46, %180 : vector<8x1xf32>
    %182 = arith.addf %177, %181 : vector<8x1xf32>
    %183 = arith.cmpf ole, %70, %171 : vector<8x1xf32>
    %184 = arith.extui %183 : vector<8x1xi1> to vector<8x1xi32>
    %185 = arith.sitofp %184 : vector<8x1xi32> to vector<8x1xf32>
    %186 = arith.mulf %64, %185 : vector<8x1xf32>
    %187 = arith.addf %182, %186 : vector<8x1xf32>
    %188 = arith.cmpf ole, %88, %171 : vector<8x1xf32>
    %189 = arith.extui %188 : vector<8x1xi1> to vector<8x1xi32>
    %190 = arith.sitofp %189 : vector<8x1xi32> to vector<8x1xf32>
    %191 = arith.mulf %82, %190 : vector<8x1xf32>
    %192 = arith.addf %187, %191 : vector<8x1xf32>
    %193 = arith.cmpf ole, %106, %171 : vector<8x1xf32>
    %194 = arith.extui %193 : vector<8x1xi1> to vector<8x1xi32>
    %195 = arith.sitofp %194 : vector<8x1xi32> to vector<8x1xf32>
    %196 = arith.mulf %100, %195 : vector<8x1xf32>
    %197 = arith.addf %192, %196 : vector<8x1xf32>
    %198 = arith.cmpf ole, %124, %171 : vector<8x1xf32>
    %199 = arith.extui %198 : vector<8x1xi1> to vector<8x1xi32>
    %200 = arith.sitofp %199 : vector<8x1xi32> to vector<8x1xf32>
    %201 = arith.mulf %118, %200 : vector<8x1xf32>
    %202 = arith.addf %197, %201 : vector<8x1xf32>
    %203 = arith.cmpf ole, %142, %171 : vector<8x1xf32>
    %204 = arith.extui %203 : vector<8x1xi1> to vector<8x1xi32>
    %205 = arith.sitofp %204 : vector<8x1xi32> to vector<8x1xf32>
    %206 = arith.mulf %136, %205 : vector<8x1xf32>
    %207 = arith.addf %202, %206 : vector<8x1xf32>
    %208 = arith.cmpf ole, %160, %171 : vector<8x1xf32>
    %209 = arith.extui %208 : vector<8x1xi1> to vector<8x1xi32>
    %210 = arith.sitofp %209 : vector<8x1xi32> to vector<8x1xf32>
    %211 = arith.mulf %154, %210 : vector<8x1xf32>
    %212 = arith.addf %207, %211 : vector<8x1xf32>
    %cst_40 = arith.constant 1.000000e+00 : f32
    %213 = vector.broadcast %cst_40 : f32 to vector<8x1xf32>
    %214 = arith.subf %212, %213 : vector<8x1xf32>
    %215 = arith.divf %214, %171 : vector<8x1xf32>
    %216 = vector.broadcast %215 : vector<8x1xf32> to vector<8x8xf32>
    %217 = arith.subf %26, %216 : vector<8x8xf32>
    %cst_41 = arith.constant 0.000000e+00 : f32
    %218 = vector.broadcast %cst_41 : f32 to vector<8x8xf32>
    %219 = arith.maximumf %217, %218 : vector<8x8xf32>
    %cst_42 = arith.constant 0.000000e+00 : f32
    %220 = vector.shape_cast %16 : vector<8x1xi1> to vector<8x1xi1>
    %221 = vector.broadcast %220 : vector<8x1xi1> to vector<8x8xi1>
    %222 = vector.broadcast %cst_42 : f32 to vector<8x8xf32>
    %223 = arith.select %221, %222, %219 : vector<8x8xi1>, vector<8x8xf32>
    %cst_43 = arith.constant dense<0.000000e+00> : vector<8x32xf32>
    %224 = tpu.matmul %223, %19, %cst_43 {dimension_numbers = #tpu.dot_dimension_numbers<[1], [0], [0], [1], [0, 0, 1, 1], [], []>} : vector<8x8xf32>, vector<8x32xf32>, vector<8x32xf32> -> vector<8x32xf32>
    %225 = vector.extract_strided_slice %8 {offsets = [0, 32], sizes = [8, 32], strides = [1, 1]} : vector<8x128xf32> to vector<8x32xf32>
    %226 = vector.extract_strided_slice %9 {offsets = [0, 32], sizes = [8, 32], strides = [1, 1]} : vector<8x128xf32> to vector<8x32xf32>
    %227 = vector.extract_strided_slice %10 {offsets = [0, 32], sizes = [8, 32], strides = [1, 1]} : vector<8x128xf32> to vector<8x32xf32>
    %cst_44 = arith.constant dense<0.000000e+00> : vector<8x8xf32>
    %228 = tpu.matmul %225, %226, %cst_44 {dimension_numbers = #tpu.dot_dimension_numbers<[1], [1], [0], [0], [0, 0, 1, 0], [], []>} : vector<8x32xf32>, vector<8x32xf32>, vector<8x8xf32> -> vector<8x8xf32>
    %cst_45 = arith.constant -1.000000e+30 : f32
    %229 = vector.broadcast %cst_45 : f32 to vector<8x8xf32>
    %230 = arith.select %12, %229, %228 : vector<8x8xi1>, vector<8x8xf32>
    %cst_46 = arith.constant 0.000000e+00 : f32
    %231 = vector.shape_cast %16 : vector<8x1xi1> to vector<8x1xi1>
    %232 = vector.broadcast %231 : vector<8x1xi1> to vector<8x8xi1>
    %233 = vector.broadcast %cst_46 : f32 to vector<8x8xf32>
    %234 = arith.select %232, %233, %230 : vector<8x8xi1>, vector<8x8xf32>
    %cst_47 = arith.constant 0.000000e+00 : f32
    %235 = vector.broadcast %cst_47 : f32 to vector<8x1xf32>
    %236 = vector.extract_strided_slice %234 {offsets = [0, 0], sizes = [8, 1], strides = [1, 1]} : vector<8x8xf32> to vector<8x1xf32>
    %237 = vector.broadcast %236 : vector<8x1xf32> to vector<8x8xf32>
    %238 = arith.cmpf oge, %234, %237 : vector<8x8xf32>
    %239 = arith.extui %238 : vector<8x8xi1> to vector<8x8xi32>
    %240 = arith.sitofp %239 : vector<8x8xi32> to vector<8x8xf32>
    %cst_48 = arith.constant dense<0.000000e+00> : vector<8xf32>
    %241 = vector.multi_reduction <add>, %240, %cst_48 [1] : vector<8x8xf32> to vector<8xf32>
    %242 = vector.shape_cast %241 : vector<8xf32> to vector<8x1xf32>
    %243 = arith.mulf %240, %234 : vector<8x8xf32>
    %cst_49 = arith.constant dense<0.000000e+00> : vector<8xf32>
    %244 = vector.multi_reduction <add>, %243, %cst_49 [1] : vector<8x8xf32> to vector<8xf32>
    %245 = vector.shape_cast %244 : vector<8xf32> to vector<8x1xf32>
    %246 = arith.mulf %242, %236 : vector<8x1xf32>
    %cst_50 = arith.constant 1.000000e+00 : f32
    %247 = vector.broadcast %cst_50 : f32 to vector<8x1xf32>
    %248 = arith.addf %247, %246 : vector<8x1xf32>
    %249 = arith.cmpf ogt, %248, %245 : vector<8x1xf32>
    %250 = arith.extui %249 : vector<8x1xi1> to vector<8x1xi32>
    %251 = arith.sitofp %250 : vector<8x1xi32> to vector<8x1xf32>
    %252 = arith.mulf %242, %251 : vector<8x1xf32>
    %253 = arith.maximumf %235, %252 : vector<8x1xf32>
    %254 = vector.extract_strided_slice %234 {offsets = [0, 1], sizes = [8, 1], strides = [1, 1]} : vector<8x8xf32> to vector<8x1xf32>
    %255 = vector.broadcast %254 : vector<8x1xf32> to vector<8x8xf32>
    %256 = arith.cmpf oge, %234, %255 : vector<8x8xf32>
    %257 = arith.extui %256 : vector<8x8xi1> to vector<8x8xi32>
    %258 = arith.sitofp %257 : vector<8x8xi32> to vector<8x8xf32>
    %cst_51 = arith.constant dense<0.000000e+00> : vector<8xf32>
    %259 = vector.multi_reduction <add>, %258, %cst_51 [1] : vector<8x8xf32> to vector<8xf32>
    %260 = vector.shape_cast %259 : vector<8xf32> to vector<8x1xf32>
    %261 = arith.mulf %258, %234 : vector<8x8xf32>
    %cst_52 = arith.constant dense<0.000000e+00> : vector<8xf32>
    %262 = vector.multi_reduction <add>, %261, %cst_52 [1] : vector<8x8xf32> to vector<8xf32>
    %263 = vector.shape_cast %262 : vector<8xf32> to vector<8x1xf32>
    %264 = arith.mulf %260, %254 : vector<8x1xf32>
    %cst_53 = arith.constant 1.000000e+00 : f32
    %265 = vector.broadcast %cst_53 : f32 to vector<8x1xf32>
    %266 = arith.addf %265, %264 : vector<8x1xf32>
    %267 = arith.cmpf ogt, %266, %263 : vector<8x1xf32>
    %268 = arith.extui %267 : vector<8x1xi1> to vector<8x1xi32>
    %269 = arith.sitofp %268 : vector<8x1xi32> to vector<8x1xf32>
    %270 = arith.mulf %260, %269 : vector<8x1xf32>
    %271 = arith.maximumf %253, %270 : vector<8x1xf32>
    %272 = vector.extract_strided_slice %234 {offsets = [0, 2], sizes = [8, 1], strides = [1, 1]} : vector<8x8xf32> to vector<8x1xf32>
    %273 = vector.broadcast %272 : vector<8x1xf32> to vector<8x8xf32>
    %274 = arith.cmpf oge, %234, %273 : vector<8x8xf32>
    %275 = arith.extui %274 : vector<8x8xi1> to vector<8x8xi32>
    %276 = arith.sitofp %275 : vector<8x8xi32> to vector<8x8xf32>
    %cst_54 = arith.constant dense<0.000000e+00> : vector<8xf32>
    %277 = vector.multi_reduction <add>, %276, %cst_54 [1] : vector<8x8xf32> to vector<8xf32>
    %278 = vector.shape_cast %277 : vector<8xf32> to vector<8x1xf32>
    %279 = arith.mulf %276, %234 : vector<8x8xf32>
    %cst_55 = arith.constant dense<0.000000e+00> : vector<8xf32>
    %280 = vector.multi_reduction <add>, %279, %cst_55 [1] : vector<8x8xf32> to vector<8xf32>
    %281 = vector.shape_cast %280 : vector<8xf32> to vector<8x1xf32>
    %282 = arith.mulf %278, %272 : vector<8x1xf32>
    %cst_56 = arith.constant 1.000000e+00 : f32
    %283 = vector.broadcast %cst_56 : f32 to vector<8x1xf32>
    %284 = arith.addf %283, %282 : vector<8x1xf32>
    %285 = arith.cmpf ogt, %284, %281 : vector<8x1xf32>
    %286 = arith.extui %285 : vector<8x1xi1> to vector<8x1xi32>
    %287 = arith.sitofp %286 : vector<8x1xi32> to vector<8x1xf32>
    %288 = arith.mulf %278, %287 : vector<8x1xf32>
    %289 = arith.maximumf %271, %288 : vector<8x1xf32>
    %290 = vector.extract_strided_slice %234 {offsets = [0, 3], sizes = [8, 1], strides = [1, 1]} : vector<8x8xf32> to vector<8x1xf32>
    %291 = vector.broadcast %290 : vector<8x1xf32> to vector<8x8xf32>
    %292 = arith.cmpf oge, %234, %291 : vector<8x8xf32>
    %293 = arith.extui %292 : vector<8x8xi1> to vector<8x8xi32>
    %294 = arith.sitofp %293 : vector<8x8xi32> to vector<8x8xf32>
    %cst_57 = arith.constant dense<0.000000e+00> : vector<8xf32>
    %295 = vector.multi_reduction <add>, %294, %cst_57 [1] : vector<8x8xf32> to vector<8xf32>
    %296 = vector.shape_cast %295 : vector<8xf32> to vector<8x1xf32>
    %297 = arith.mulf %294, %234 : vector<8x8xf32>
    %cst_58 = arith.constant dense<0.000000e+00> : vector<8xf32>
    %298 = vector.multi_reduction <add>, %297, %cst_58 [1] : vector<8x8xf32> to vector<8xf32>
    %299 = vector.shape_cast %298 : vector<8xf32> to vector<8x1xf32>
    %300 = arith.mulf %296, %290 : vector<8x1xf32>
    %cst_59 = arith.constant 1.000000e+00 : f32
    %301 = vector.broadcast %cst_59 : f32 to vector<8x1xf32>
    %302 = arith.addf %301, %300 : vector<8x1xf32>
    %303 = arith.cmpf ogt, %302, %299 : vector<8x1xf32>
    %304 = arith.extui %303 : vector<8x1xi1> to vector<8x1xi32>
    %305 = arith.sitofp %304 : vector<8x1xi32> to vector<8x1xf32>
    %306 = arith.mulf %296, %305 : vector<8x1xf32>
    %307 = arith.maximumf %289, %306 : vector<8x1xf32>
    %308 = vector.extract_strided_slice %234 {offsets = [0, 4], sizes = [8, 1], strides = [1, 1]} : vector<8x8xf32> to vector<8x1xf32>
    %309 = vector.broadcast %308 : vector<8x1xf32> to vector<8x8xf32>
    %310 = arith.cmpf oge, %234, %309 : vector<8x8xf32>
    %311 = arith.extui %310 : vector<8x8xi1> to vector<8x8xi32>
    %312 = arith.sitofp %311 : vector<8x8xi32> to vector<8x8xf32>
    %cst_60 = arith.constant dense<0.000000e+00> : vector<8xf32>
    %313 = vector.multi_reduction <add>, %312, %cst_60 [1] : vector<8x8xf32> to vector<8xf32>
    %314 = vector.shape_cast %313 : vector<8xf32> to vector<8x1xf32>
    %315 = arith.mulf %312, %234 : vector<8x8xf32>
    %cst_61 = arith.constant dense<0.000000e+00> : vector<8xf32>
    %316 = vector.multi_reduction <add>, %315, %cst_61 [1] : vector<8x8xf32> to vector<8xf32>
    %317 = vector.shape_cast %316 : vector<8xf32> to vector<8x1xf32>
    %318 = arith.mulf %314, %308 : vector<8x1xf32>
    %cst_62 = arith.constant 1.000000e+00 : f32
    %319 = vector.broadcast %cst_62 : f32 to vector<8x1xf32>
    %320 = arith.addf %319, %318 : vector<8x1xf32>
    %321 = arith.cmpf ogt, %320, %317 : vector<8x1xf32>
    %322 = arith.extui %321 : vector<8x1xi1> to vector<8x1xi32>
    %323 = arith.sitofp %322 : vector<8x1xi32> to vector<8x1xf32>
    %324 = arith.mulf %314, %323 : vector<8x1xf32>
    %325 = arith.maximumf %307, %324 : vector<8x1xf32>
    %326 = vector.extract_strided_slice %234 {offsets = [0, 5], sizes = [8, 1], strides = [1, 1]} : vector<8x8xf32> to vector<8x1xf32>
    %327 = vector.broadcast %326 : vector<8x1xf32> to vector<8x8xf32>
    %328 = arith.cmpf oge, %234, %327 : vector<8x8xf32>
    %329 = arith.extui %328 : vector<8x8xi1> to vector<8x8xi32>
    %330 = arith.sitofp %329 : vector<8x8xi32> to vector<8x8xf32>
    %cst_63 = arith.constant dense<0.000000e+00> : vector<8xf32>
    %331 = vector.multi_reduction <add>, %330, %cst_63 [1] : vector<8x8xf32> to vector<8xf32>
    %332 = vector.shape_cast %331 : vector<8xf32> to vector<8x1xf32>
    %333 = arith.mulf %330, %234 : vector<8x8xf32>
    %cst_64 = arith.constant dense<0.000000e+00> : vector<8xf32>
    %334 = vector.multi_reduction <add>, %333, %cst_64 [1] : vector<8x8xf32> to vector<8xf32>
    %335 = vector.shape_cast %334 : vector<8xf32> to vector<8x1xf32>
    %336 = arith.mulf %332, %326 : vector<8x1xf32>
    %cst_65 = arith.constant 1.000000e+00 : f32
    %337 = vector.broadcast %cst_65 : f32 to vector<8x1xf32>
    %338 = arith.addf %337, %336 : vector<8x1xf32>
    %339 = arith.cmpf ogt, %338, %335 : vector<8x1xf32>
    %340 = arith.extui %339 : vector<8x1xi1> to vector<8x1xi32>
    %341 = arith.sitofp %340 : vector<8x1xi32> to vector<8x1xf32>
    %342 = arith.mulf %332, %341 : vector<8x1xf32>
    %343 = arith.maximumf %325, %342 : vector<8x1xf32>
    %344 = vector.extract_strided_slice %234 {offsets = [0, 6], sizes = [8, 1], strides = [1, 1]} : vector<8x8xf32> to vector<8x1xf32>
    %345 = vector.broadcast %344 : vector<8x1xf32> to vector<8x8xf32>
    %346 = arith.cmpf oge, %234, %345 : vector<8x8xf32>
    %347 = arith.extui %346 : vector<8x8xi1> to vector<8x8xi32>
    %348 = arith.sitofp %347 : vector<8x8xi32> to vector<8x8xf32>
    %cst_66 = arith.constant dense<0.000000e+00> : vector<8xf32>
    %349 = vector.multi_reduction <add>, %348, %cst_66 [1] : vector<8x8xf32> to vector<8xf32>
    %350 = vector.shape_cast %349 : vector<8xf32> to vector<8x1xf32>
    %351 = arith.mulf %348, %234 : vector<8x8xf32>
    %cst_67 = arith.constant dense<0.000000e+00> : vector<8xf32>
    %352 = vector.multi_reduction <add>, %351, %cst_67 [1] : vector<8x8xf32> to vector<8xf32>
    %353 = vector.shape_cast %352 : vector<8xf32> to vector<8x1xf32>
    %354 = arith.mulf %350, %344 : vector<8x1xf32>
    %cst_68 = arith.constant 1.000000e+00 : f32
    %355 = vector.broadcast %cst_68 : f32 to vector<8x1xf32>
    %356 = arith.addf %355, %354 : vector<8x1xf32>
    %357 = arith.cmpf ogt, %356, %353 : vector<8x1xf32>
    %358 = arith.extui %357 : vector<8x1xi1> to vector<8x1xi32>
    %359 = arith.sitofp %358 : vector<8x1xi32> to vector<8x1xf32>
    %360 = arith.mulf %350, %359 : vector<8x1xf32>
    %361 = arith.maximumf %343, %360 : vector<8x1xf32>
    %362 = vector.extract_strided_slice %234 {offsets = [0, 7], sizes = [8, 1], strides = [1, 1]} : vector<8x8xf32> to vector<8x1xf32>
    %363 = vector.broadcast %362 : vector<8x1xf32> to vector<8x8xf32>
    %364 = arith.cmpf oge, %234, %363 : vector<8x8xf32>
    %365 = arith.extui %364 : vector<8x8xi1> to vector<8x8xi32>
    %366 = arith.sitofp %365 : vector<8x8xi32> to vector<8x8xf32>
    %cst_69 = arith.constant dense<0.000000e+00> : vector<8xf32>
    %367 = vector.multi_reduction <add>, %366, %cst_69 [1] : vector<8x8xf32> to vector<8xf32>
    %368 = vector.shape_cast %367 : vector<8xf32> to vector<8x1xf32>
    %369 = arith.mulf %366, %234 : vector<8x8xf32>
    %cst_70 = arith.constant dense<0.000000e+00> : vector<8xf32>
    %370 = vector.multi_reduction <add>, %369, %cst_70 [1] : vector<8x8xf32> to vector<8xf32>
    %371 = vector.shape_cast %370 : vector<8xf32> to vector<8x1xf32>
    %372 = arith.mulf %368, %362 : vector<8x1xf32>
    %cst_71 = arith.constant 1.000000e+00 : f32
    %373 = vector.broadcast %cst_71 : f32 to vector<8x1xf32>
    %374 = arith.addf %373, %372 : vector<8x1xf32>
    %375 = arith.cmpf ogt, %374, %371 : vector<8x1xf32>
    %376 = arith.extui %375 : vector<8x1xi1> to vector<8x1xi32>
    %377 = arith.sitofp %376 : vector<8x1xi32> to vector<8x1xf32>
    %378 = arith.mulf %368, %377 : vector<8x1xf32>
    %379 = arith.maximumf %361, %378 : vector<8x1xf32>
    %cst_72 = arith.constant 0.000000e+00 : f32
    %380 = vector.broadcast %cst_72 : f32 to vector<8x1xf32>
    %381 = arith.cmpf ole, %242, %379 : vector<8x1xf32>
    %382 = arith.extui %381 : vector<8x1xi1> to vector<8x1xi32>
    %383 = arith.sitofp %382 : vector<8x1xi32> to vector<8x1xf32>
    %384 = arith.mulf %236, %383 : vector<8x1xf32>
    %385 = arith.addf %380, %384 : vector<8x1xf32>
    %386 = arith.cmpf ole, %260, %379 : vector<8x1xf32>
    %387 = arith.extui %386 : vector<8x1xi1> to vector<8x1xi32>
    %388 = arith.sitofp %387 : vector<8x1xi32> to vector<8x1xf32>
    %389 = arith.mulf %254, %388 : vector<8x1xf32>
    %390 = arith.addf %385, %389 : vector<8x1xf32>
    %391 = arith.cmpf ole, %278, %379 : vector<8x1xf32>
    %392 = arith.extui %391 : vector<8x1xi1> to vector<8x1xi32>
    %393 = arith.sitofp %392 : vector<8x1xi32> to vector<8x1xf32>
    %394 = arith.mulf %272, %393 : vector<8x1xf32>
    %395 = arith.addf %390, %394 : vector<8x1xf32>
    %396 = arith.cmpf ole, %296, %379 : vector<8x1xf32>
    %397 = arith.extui %396 : vector<8x1xi1> to vector<8x1xi32>
    %398 = arith.sitofp %397 : vector<8x1xi32> to vector<8x1xf32>
    %399 = arith.mulf %290, %398 : vector<8x1xf32>
    %400 = arith.addf %395, %399 : vector<8x1xf32>
    %401 = arith.cmpf ole, %314, %379 : vector<8x1xf32>
    %402 = arith.extui %401 : vector<8x1xi1> to vector<8x1xi32>
    %403 = arith.sitofp %402 : vector<8x1xi32> to vector<8x1xf32>
    %404 = arith.mulf %308, %403 : vector<8x1xf32>
    %405 = arith.addf %400, %404 : vector<8x1xf32>
    %406 = arith.cmpf ole, %332, %379 : vector<8x1xf32>
    %407 = arith.extui %406 : vector<8x1xi1> to vector<8x1xi32>
    %408 = arith.sitofp %407 : vector<8x1xi32> to vector<8x1xf32>
    %409 = arith.mulf %326, %408 : vector<8x1xf32>
    %410 = arith.addf %405, %409 : vector<8x1xf32>
    %411 = arith.cmpf ole, %350, %379 : vector<8x1xf32>
    %412 = arith.extui %411 : vector<8x1xi1> to vector<8x1xi32>
    %413 = arith.sitofp %412 : vector<8x1xi32> to vector<8x1xf32>
    %414 = arith.mulf %344, %413 : vector<8x1xf32>
    %415 = arith.addf %410, %414 : vector<8x1xf32>
    %416 = arith.cmpf ole, %368, %379 : vector<8x1xf32>
    %417 = arith.extui %416 : vector<8x1xi1> to vector<8x1xi32>
    %418 = arith.sitofp %417 : vector<8x1xi32> to vector<8x1xf32>
    %419 = arith.mulf %362, %418 : vector<8x1xf32>
    %420 = arith.addf %415, %419 : vector<8x1xf32>
    %cst_73 = arith.constant 1.000000e+00 : f32
    %421 = vector.broadcast %cst_73 : f32 to vector<8x1xf32>
    %422 = arith.subf %420, %421 : vector<8x1xf32>
    %423 = arith.divf %422, %379 : vector<8x1xf32>
    %424 = vector.broadcast %423 : vector<8x1xf32> to vector<8x8xf32>
    %425 = arith.subf %234, %424 : vector<8x8xf32>
    %cst_74 = arith.constant 0.000000e+00 : f32
    %426 = vector.broadcast %cst_74 : f32 to vector<8x8xf32>
    %427 = arith.maximumf %425, %426 : vector<8x8xf32>
    %cst_75 = arith.constant 0.000000e+00 : f32
    %428 = vector.shape_cast %16 : vector<8x1xi1> to vector<8x1xi1>
    %429 = vector.broadcast %428 : vector<8x1xi1> to vector<8x8xi1>
    %430 = vector.broadcast %cst_75 : f32 to vector<8x8xf32>
    %431 = arith.select %429, %430, %427 : vector<8x8xi1>, vector<8x8xf32>
    %cst_76 = arith.constant dense<0.000000e+00> : vector<8x32xf32>
    %432 = tpu.matmul %431, %227, %cst_76 {dimension_numbers = #tpu.dot_dimension_numbers<[1], [0], [0], [1], [0, 0, 1, 1], [], []>} : vector<8x8xf32>, vector<8x32xf32>, vector<8x32xf32> -> vector<8x32xf32>
    %433 = vector.extract_strided_slice %8 {offsets = [0, 64], sizes = [8, 32], strides = [1, 1]} : vector<8x128xf32> to vector<8x32xf32>
    %434 = vector.extract_strided_slice %9 {offsets = [0, 64], sizes = [8, 32], strides = [1, 1]} : vector<8x128xf32> to vector<8x32xf32>
    %435 = vector.extract_strided_slice %10 {offsets = [0, 64], sizes = [8, 32], strides = [1, 1]} : vector<8x128xf32> to vector<8x32xf32>
    %cst_77 = arith.constant dense<0.000000e+00> : vector<8x8xf32>
    %436 = tpu.matmul %433, %434, %cst_77 {dimension_numbers = #tpu.dot_dimension_numbers<[1], [1], [0], [0], [0, 0, 1, 0], [], []>} : vector<8x32xf32>, vector<8x32xf32>, vector<8x8xf32> -> vector<8x8xf32>
    %cst_78 = arith.constant -1.000000e+30 : f32
    %437 = vector.broadcast %cst_78 : f32 to vector<8x8xf32>
    %438 = arith.select %12, %437, %436 : vector<8x8xi1>, vector<8x8xf32>
    %cst_79 = arith.constant 0.000000e+00 : f32
    %439 = vector.shape_cast %16 : vector<8x1xi1> to vector<8x1xi1>
    %440 = vector.broadcast %439 : vector<8x1xi1> to vector<8x8xi1>
    %441 = vector.broadcast %cst_79 : f32 to vector<8x8xf32>
    %442 = arith.select %440, %441, %438 : vector<8x8xi1>, vector<8x8xf32>
    %cst_80 = arith.constant 0.000000e+00 : f32
    %443 = vector.broadcast %cst_80 : f32 to vector<8x1xf32>
    %444 = vector.extract_strided_slice %442 {offsets = [0, 0], sizes = [8, 1], strides = [1, 1]} : vector<8x8xf32> to vector<8x1xf32>
    %445 = vector.broadcast %444 : vector<8x1xf32> to vector<8x8xf32>
    %446 = arith.cmpf oge, %442, %445 : vector<8x8xf32>
    %447 = arith.extui %446 : vector<8x8xi1> to vector<8x8xi32>
    %448 = arith.sitofp %447 : vector<8x8xi32> to vector<8x8xf32>
    %cst_81 = arith.constant dense<0.000000e+00> : vector<8xf32>
    %449 = vector.multi_reduction <add>, %448, %cst_81 [1] : vector<8x8xf32> to vector<8xf32>
    %450 = vector.shape_cast %449 : vector<8xf32> to vector<8x1xf32>
    %451 = arith.mulf %448, %442 : vector<8x8xf32>
    %cst_82 = arith.constant dense<0.000000e+00> : vector<8xf32>
    %452 = vector.multi_reduction <add>, %451, %cst_82 [1] : vector<8x8xf32> to vector<8xf32>
    %453 = vector.shape_cast %452 : vector<8xf32> to vector<8x1xf32>
    %454 = arith.mulf %450, %444 : vector<8x1xf32>
    %cst_83 = arith.constant 1.000000e+00 : f32
    %455 = vector.broadcast %cst_83 : f32 to vector<8x1xf32>
    %456 = arith.addf %455, %454 : vector<8x1xf32>
    %457 = arith.cmpf ogt, %456, %453 : vector<8x1xf32>
    %458 = arith.extui %457 : vector<8x1xi1> to vector<8x1xi32>
    %459 = arith.sitofp %458 : vector<8x1xi32> to vector<8x1xf32>
    %460 = arith.mulf %450, %459 : vector<8x1xf32>
    %461 = arith.maximumf %443, %460 : vector<8x1xf32>
    %462 = vector.extract_strided_slice %442 {offsets = [0, 1], sizes = [8, 1], strides = [1, 1]} : vector<8x8xf32> to vector<8x1xf32>
    %463 = vector.broadcast %462 : vector<8x1xf32> to vector<8x8xf32>
    %464 = arith.cmpf oge, %442, %463 : vector<8x8xf32>
    %465 = arith.extui %464 : vector<8x8xi1> to vector<8x8xi32>
    %466 = arith.sitofp %465 : vector<8x8xi32> to vector<8x8xf32>
    %cst_84 = arith.constant dense<0.000000e+00> : vector<8xf32>
    %467 = vector.multi_reduction <add>, %466, %cst_84 [1] : vector<8x8xf32> to vector<8xf32>
    %468 = vector.shape_cast %467 : vector<8xf32> to vector<8x1xf32>
    %469 = arith.mulf %466, %442 : vector<8x8xf32>
    %cst_85 = arith.constant dense<0.000000e+00> : vector<8xf32>
    %470 = vector.multi_reduction <add>, %469, %cst_85 [1] : vector<8x8xf32> to vector<8xf32>
    %471 = vector.shape_cast %470 : vector<8xf32> to vector<8x1xf32>
    %472 = arith.mulf %468, %462 : vector<8x1xf32>
    %cst_86 = arith.constant 1.000000e+00 : f32
    %473 = vector.broadcast %cst_86 : f32 to vector<8x1xf32>
    %474 = arith.addf %473, %472 : vector<8x1xf32>
    %475 = arith.cmpf ogt, %474, %471 : vector<8x1xf32>
    %476 = arith.extui %475 : vector<8x1xi1> to vector<8x1xi32>
    %477 = arith.sitofp %476 : vector<8x1xi32> to vector<8x1xf32>
    %478 = arith.mulf %468, %477 : vector<8x1xf32>
    %479 = arith.maximumf %461, %478 : vector<8x1xf32>
    %480 = vector.extract_strided_slice %442 {offsets = [0, 2], sizes = [8, 1], strides = [1, 1]} : vector<8x8xf32> to vector<8x1xf32>
    %481 = vector.broadcast %480 : vector<8x1xf32> to vector<8x8xf32>
    %482 = arith.cmpf oge, %442, %481 : vector<8x8xf32>
    %483 = arith.extui %482 : vector<8x8xi1> to vector<8x8xi32>
    %484 = arith.sitofp %483 : vector<8x8xi32> to vector<8x8xf32>
    %cst_87 = arith.constant dense<0.000000e+00> : vector<8xf32>
    %485 = vector.multi_reduction <add>, %484, %cst_87 [1] : vector<8x8xf32> to vector<8xf32>
    %486 = vector.shape_cast %485 : vector<8xf32> to vector<8x1xf32>
    %487 = arith.mulf %484, %442 : vector<8x8xf32>
    %cst_88 = arith.constant dense<0.000000e+00> : vector<8xf32>
    %488 = vector.multi_reduction <add>, %487, %cst_88 [1] : vector<8x8xf32> to vector<8xf32>
    %489 = vector.shape_cast %488 : vector<8xf32> to vector<8x1xf32>
    %490 = arith.mulf %486, %480 : vector<8x1xf32>
    %cst_89 = arith.constant 1.000000e+00 : f32
    %491 = vector.broadcast %cst_89 : f32 to vector<8x1xf32>
    %492 = arith.addf %491, %490 : vector<8x1xf32>
    %493 = arith.cmpf ogt, %492, %489 : vector<8x1xf32>
    %494 = arith.extui %493 : vector<8x1xi1> to vector<8x1xi32>
    %495 = arith.sitofp %494 : vector<8x1xi32> to vector<8x1xf32>
    %496 = arith.mulf %486, %495 : vector<8x1xf32>
    %497 = arith.maximumf %479, %496 : vector<8x1xf32>
    %498 = vector.extract_strided_slice %442 {offsets = [0, 3], sizes = [8, 1], strides = [1, 1]} : vector<8x8xf32> to vector<8x1xf32>
    %499 = vector.broadcast %498 : vector<8x1xf32> to vector<8x8xf32>
    %500 = arith.cmpf oge, %442, %499 : vector<8x8xf32>
    %501 = arith.extui %500 : vector<8x8xi1> to vector<8x8xi32>
    %502 = arith.sitofp %501 : vector<8x8xi32> to vector<8x8xf32>
    %cst_90 = arith.constant dense<0.000000e+00> : vector<8xf32>
    %503 = vector.multi_reduction <add>, %502, %cst_90 [1] : vector<8x8xf32> to vector<8xf32>
    %504 = vector.shape_cast %503 : vector<8xf32> to vector<8x1xf32>
    %505 = arith.mulf %502, %442 : vector<8x8xf32>
    %cst_91 = arith.constant dense<0.000000e+00> : vector<8xf32>
    %506 = vector.multi_reduction <add>, %505, %cst_91 [1] : vector<8x8xf32> to vector<8xf32>
    %507 = vector.shape_cast %506 : vector<8xf32> to vector<8x1xf32>
    %508 = arith.mulf %504, %498 : vector<8x1xf32>
    %cst_92 = arith.constant 1.000000e+00 : f32
    %509 = vector.broadcast %cst_92 : f32 to vector<8x1xf32>
    %510 = arith.addf %509, %508 : vector<8x1xf32>
    %511 = arith.cmpf ogt, %510, %507 : vector<8x1xf32>
    %512 = arith.extui %511 : vector<8x1xi1> to vector<8x1xi32>
    %513 = arith.sitofp %512 : vector<8x1xi32> to vector<8x1xf32>
    %514 = arith.mulf %504, %513 : vector<8x1xf32>
    %515 = arith.maximumf %497, %514 : vector<8x1xf32>
    %516 = vector.extract_strided_slice %442 {offsets = [0, 4], sizes = [8, 1], strides = [1, 1]} : vector<8x8xf32> to vector<8x1xf32>
    %517 = vector.broadcast %516 : vector<8x1xf32> to vector<8x8xf32>
    %518 = arith.cmpf oge, %442, %517 : vector<8x8xf32>
    %519 = arith.extui %518 : vector<8x8xi1> to vector<8x8xi32>
    %520 = arith.sitofp %519 : vector<8x8xi32> to vector<8x8xf32>
    %cst_93 = arith.constant dense<0.000000e+00> : vector<8xf32>
    %521 = vector.multi_reduction <add>, %520, %cst_93 [1] : vector<8x8xf32> to vector<8xf32>
    %522 = vector.shape_cast %521 : vector<8xf32> to vector<8x1xf32>
    %523 = arith.mulf %520, %442 : vector<8x8xf32>
    %cst_94 = arith.constant dense<0.000000e+00> : vector<8xf32>
    %524 = vector.multi_reduction <add>, %523, %cst_94 [1] : vector<8x8xf32> to vector<8xf32>
    %525 = vector.shape_cast %524 : vector<8xf32> to vector<8x1xf32>
    %526 = arith.mulf %522, %516 : vector<8x1xf32>
    %cst_95 = arith.constant 1.000000e+00 : f32
    %527 = vector.broadcast %cst_95 : f32 to vector<8x1xf32>
    %528 = arith.addf %527, %526 : vector<8x1xf32>
    %529 = arith.cmpf ogt, %528, %525 : vector<8x1xf32>
    %530 = arith.extui %529 : vector<8x1xi1> to vector<8x1xi32>
    %531 = arith.sitofp %530 : vector<8x1xi32> to vector<8x1xf32>
    %532 = arith.mulf %522, %531 : vector<8x1xf32>
    %533 = arith.maximumf %515, %532 : vector<8x1xf32>
    %534 = vector.extract_strided_slice %442 {offsets = [0, 5], sizes = [8, 1], strides = [1, 1]} : vector<8x8xf32> to vector<8x1xf32>
    %535 = vector.broadcast %534 : vector<8x1xf32> to vector<8x8xf32>
    %536 = arith.cmpf oge, %442, %535 : vector<8x8xf32>
    %537 = arith.extui %536 : vector<8x8xi1> to vector<8x8xi32>
    %538 = arith.sitofp %537 : vector<8x8xi32> to vector<8x8xf32>
    %cst_96 = arith.constant dense<0.000000e+00> : vector<8xf32>
    %539 = vector.multi_reduction <add>, %538, %cst_96 [1] : vector<8x8xf32> to vector<8xf32>
    %540 = vector.shape_cast %539 : vector<8xf32> to vector<8x1xf32>
    %541 = arith.mulf %538, %442 : vector<8x8xf32>
    %cst_97 = arith.constant dense<0.000000e+00> : vector<8xf32>
    %542 = vector.multi_reduction <add>, %541, %cst_97 [1] : vector<8x8xf32> to vector<8xf32>
    %543 = vector.shape_cast %542 : vector<8xf32> to vector<8x1xf32>
    %544 = arith.mulf %540, %534 : vector<8x1xf32>
    %cst_98 = arith.constant 1.000000e+00 : f32
    %545 = vector.broadcast %cst_98 : f32 to vector<8x1xf32>
    %546 = arith.addf %545, %544 : vector<8x1xf32>
    %547 = arith.cmpf ogt, %546, %543 : vector<8x1xf32>
    %548 = arith.extui %547 : vector<8x1xi1> to vector<8x1xi32>
    %549 = arith.sitofp %548 : vector<8x1xi32> to vector<8x1xf32>
    %550 = arith.mulf %540, %549 : vector<8x1xf32>
    %551 = arith.maximumf %533, %550 : vector<8x1xf32>
    %552 = vector.extract_strided_slice %442 {offsets = [0, 6], sizes = [8, 1], strides = [1, 1]} : vector<8x8xf32> to vector<8x1xf32>
    %553 = vector.broadcast %552 : vector<8x1xf32> to vector<8x8xf32>
    %554 = arith.cmpf oge, %442, %553 : vector<8x8xf32>
    %555 = arith.extui %554 : vector<8x8xi1> to vector<8x8xi32>
    %556 = arith.sitofp %555 : vector<8x8xi32> to vector<8x8xf32>
    %cst_99 = arith.constant dense<0.000000e+00> : vector<8xf32>
    %557 = vector.multi_reduction <add>, %556, %cst_99 [1] : vector<8x8xf32> to vector<8xf32>
    %558 = vector.shape_cast %557 : vector<8xf32> to vector<8x1xf32>
    %559 = arith.mulf %556, %442 : vector<8x8xf32>
    %cst_100 = arith.constant dense<0.000000e+00> : vector<8xf32>
    %560 = vector.multi_reduction <add>, %559, %cst_100 [1] : vector<8x8xf32> to vector<8xf32>
    %561 = vector.shape_cast %560 : vector<8xf32> to vector<8x1xf32>
    %562 = arith.mulf %558, %552 : vector<8x1xf32>
    %cst_101 = arith.constant 1.000000e+00 : f32
    %563 = vector.broadcast %cst_101 : f32 to vector<8x1xf32>
    %564 = arith.addf %563, %562 : vector<8x1xf32>
    %565 = arith.cmpf ogt, %564, %561 : vector<8x1xf32>
    %566 = arith.extui %565 : vector<8x1xi1> to vector<8x1xi32>
    %567 = arith.sitofp %566 : vector<8x1xi32> to vector<8x1xf32>
    %568 = arith.mulf %558, %567 : vector<8x1xf32>
    %569 = arith.maximumf %551, %568 : vector<8x1xf32>
    %570 = vector.extract_strided_slice %442 {offsets = [0, 7], sizes = [8, 1], strides = [1, 1]} : vector<8x8xf32> to vector<8x1xf32>
    %571 = vector.broadcast %570 : vector<8x1xf32> to vector<8x8xf32>
    %572 = arith.cmpf oge, %442, %571 : vector<8x8xf32>
    %573 = arith.extui %572 : vector<8x8xi1> to vector<8x8xi32>
    %574 = arith.sitofp %573 : vector<8x8xi32> to vector<8x8xf32>
    %cst_102 = arith.constant dense<0.000000e+00> : vector<8xf32>
    %575 = vector.multi_reduction <add>, %574, %cst_102 [1] : vector<8x8xf32> to vector<8xf32>
    %576 = vector.shape_cast %575 : vector<8xf32> to vector<8x1xf32>
    %577 = arith.mulf %574, %442 : vector<8x8xf32>
    %cst_103 = arith.constant dense<0.000000e+00> : vector<8xf32>
    %578 = vector.multi_reduction <add>, %577, %cst_103 [1] : vector<8x8xf32> to vector<8xf32>
    %579 = vector.shape_cast %578 : vector<8xf32> to vector<8x1xf32>
    %580 = arith.mulf %576, %570 : vector<8x1xf32>
    %cst_104 = arith.constant 1.000000e+00 : f32
    %581 = vector.broadcast %cst_104 : f32 to vector<8x1xf32>
    %582 = arith.addf %581, %580 : vector<8x1xf32>
    %583 = arith.cmpf ogt, %582, %579 : vector<8x1xf32>
    %584 = arith.extui %583 : vector<8x1xi1> to vector<8x1xi32>
    %585 = arith.sitofp %584 : vector<8x1xi32> to vector<8x1xf32>
    %586 = arith.mulf %576, %585 : vector<8x1xf32>
    %587 = arith.maximumf %569, %586 : vector<8x1xf32>
    %cst_105 = arith.constant 0.000000e+00 : f32
    %588 = vector.broadcast %cst_105 : f32 to vector<8x1xf32>
    %589 = arith.cmpf ole, %450, %587 : vector<8x1xf32>
    %590 = arith.extui %589 : vector<8x1xi1> to vector<8x1xi32>
    %591 = arith.sitofp %590 : vector<8x1xi32> to vector<8x1xf32>
    %592 = arith.mulf %444, %591 : vector<8x1xf32>
    %593 = arith.addf %588, %592 : vector<8x1xf32>
    %594 = arith.cmpf ole, %468, %587 : vector<8x1xf32>
    %595 = arith.extui %594 : vector<8x1xi1> to vector<8x1xi32>
    %596 = arith.sitofp %595 : vector<8x1xi32> to vector<8x1xf32>
    %597 = arith.mulf %462, %596 : vector<8x1xf32>
    %598 = arith.addf %593, %597 : vector<8x1xf32>
    %599 = arith.cmpf ole, %486, %587 : vector<8x1xf32>
    %600 = arith.extui %599 : vector<8x1xi1> to vector<8x1xi32>
    %601 = arith.sitofp %600 : vector<8x1xi32> to vector<8x1xf32>
    %602 = arith.mulf %480, %601 : vector<8x1xf32>
    %603 = arith.addf %598, %602 : vector<8x1xf32>
    %604 = arith.cmpf ole, %504, %587 : vector<8x1xf32>
    %605 = arith.extui %604 : vector<8x1xi1> to vector<8x1xi32>
    %606 = arith.sitofp %605 : vector<8x1xi32> to vector<8x1xf32>
    %607 = arith.mulf %498, %606 : vector<8x1xf32>
    %608 = arith.addf %603, %607 : vector<8x1xf32>
    %609 = arith.cmpf ole, %522, %587 : vector<8x1xf32>
    %610 = arith.extui %609 : vector<8x1xi1> to vector<8x1xi32>
    %611 = arith.sitofp %610 : vector<8x1xi32> to vector<8x1xf32>
    %612 = arith.mulf %516, %611 : vector<8x1xf32>
    %613 = arith.addf %608, %612 : vector<8x1xf32>
    %614 = arith.cmpf ole, %540, %587 : vector<8x1xf32>
    %615 = arith.extui %614 : vector<8x1xi1> to vector<8x1xi32>
    %616 = arith.sitofp %615 : vector<8x1xi32> to vector<8x1xf32>
    %617 = arith.mulf %534, %616 : vector<8x1xf32>
    %618 = arith.addf %613, %617 : vector<8x1xf32>
    %619 = arith.cmpf ole, %558, %587 : vector<8x1xf32>
    %620 = arith.extui %619 : vector<8x1xi1> to vector<8x1xi32>
    %621 = arith.sitofp %620 : vector<8x1xi32> to vector<8x1xf32>
    %622 = arith.mulf %552, %621 : vector<8x1xf32>
    %623 = arith.addf %618, %622 : vector<8x1xf32>
    %624 = arith.cmpf ole, %576, %587 : vector<8x1xf32>
    %625 = arith.extui %624 : vector<8x1xi1> to vector<8x1xi32>
    %626 = arith.sitofp %625 : vector<8x1xi32> to vector<8x1xf32>
    %627 = arith.mulf %570, %626 : vector<8x1xf32>
    %628 = arith.addf %623, %627 : vector<8x1xf32>
    %cst_106 = arith.constant 1.000000e+00 : f32
    %629 = vector.broadcast %cst_106 : f32 to vector<8x1xf32>
    %630 = arith.subf %628, %629 : vector<8x1xf32>
    %631 = arith.divf %630, %587 : vector<8x1xf32>
    %632 = vector.broadcast %631 : vector<8x1xf32> to vector<8x8xf32>
    %633 = arith.subf %442, %632 : vector<8x8xf32>
    %cst_107 = arith.constant 0.000000e+00 : f32
    %634 = vector.broadcast %cst_107 : f32 to vector<8x8xf32>
    %635 = arith.maximumf %633, %634 : vector<8x8xf32>
    %cst_108 = arith.constant 0.000000e+00 : f32
    %636 = vector.shape_cast %16 : vector<8x1xi1> to vector<8x1xi1>
    %637 = vector.broadcast %636 : vector<8x1xi1> to vector<8x8xi1>
    %638 = vector.broadcast %cst_108 : f32 to vector<8x8xf32>
    %639 = arith.select %637, %638, %635 : vector<8x8xi1>, vector<8x8xf32>
    %cst_109 = arith.constant dense<0.000000e+00> : vector<8x32xf32>
    %640 = tpu.matmul %639, %435, %cst_109 {dimension_numbers = #tpu.dot_dimension_numbers<[1], [0], [0], [1], [0, 0, 1, 1], [], []>} : vector<8x8xf32>, vector<8x32xf32>, vector<8x32xf32> -> vector<8x32xf32>
    %641 = vector.extract_strided_slice %8 {offsets = [0, 96], sizes = [8, 32], strides = [1, 1]} : vector<8x128xf32> to vector<8x32xf32>
    %642 = vector.extract_strided_slice %9 {offsets = [0, 96], sizes = [8, 32], strides = [1, 1]} : vector<8x128xf32> to vector<8x32xf32>
    %643 = vector.extract_strided_slice %10 {offsets = [0, 96], sizes = [8, 32], strides = [1, 1]} : vector<8x128xf32> to vector<8x32xf32>
    %cst_110 = arith.constant dense<0.000000e+00> : vector<8x8xf32>
    %644 = tpu.matmul %641, %642, %cst_110 {dimension_numbers = #tpu.dot_dimension_numbers<[1], [1], [0], [0], [0, 0, 1, 0], [], []>} : vector<8x32xf32>, vector<8x32xf32>, vector<8x8xf32> -> vector<8x8xf32>
    %cst_111 = arith.constant -1.000000e+30 : f32
    %645 = vector.broadcast %cst_111 : f32 to vector<8x8xf32>
    %646 = arith.select %12, %645, %644 : vector<8x8xi1>, vector<8x8xf32>
    %cst_112 = arith.constant 0.000000e+00 : f32
    %647 = vector.shape_cast %16 : vector<8x1xi1> to vector<8x1xi1>
    %648 = vector.broadcast %647 : vector<8x1xi1> to vector<8x8xi1>
    %649 = vector.broadcast %cst_112 : f32 to vector<8x8xf32>
    %650 = arith.select %648, %649, %646 : vector<8x8xi1>, vector<8x8xf32>
    %cst_113 = arith.constant 0.000000e+00 : f32
    %651 = vector.broadcast %cst_113 : f32 to vector<8x1xf32>
    %652 = vector.extract_strided_slice %650 {offsets = [0, 0], sizes = [8, 1], strides = [1, 1]} : vector<8x8xf32> to vector<8x1xf32>
    %653 = vector.broadcast %652 : vector<8x1xf32> to vector<8x8xf32>
    %654 = arith.cmpf oge, %650, %653 : vector<8x8xf32>
    %655 = arith.extui %654 : vector<8x8xi1> to vector<8x8xi32>
    %656 = arith.sitofp %655 : vector<8x8xi32> to vector<8x8xf32>
    %cst_114 = arith.constant dense<0.000000e+00> : vector<8xf32>
    %657 = vector.multi_reduction <add>, %656, %cst_114 [1] : vector<8x8xf32> to vector<8xf32>
    %658 = vector.shape_cast %657 : vector<8xf32> to vector<8x1xf32>
    %659 = arith.mulf %656, %650 : vector<8x8xf32>
    %cst_115 = arith.constant dense<0.000000e+00> : vector<8xf32>
    %660 = vector.multi_reduction <add>, %659, %cst_115 [1] : vector<8x8xf32> to vector<8xf32>
    %661 = vector.shape_cast %660 : vector<8xf32> to vector<8x1xf32>
    %662 = arith.mulf %658, %652 : vector<8x1xf32>
    %cst_116 = arith.constant 1.000000e+00 : f32
    %663 = vector.broadcast %cst_116 : f32 to vector<8x1xf32>
    %664 = arith.addf %663, %662 : vector<8x1xf32>
    %665 = arith.cmpf ogt, %664, %661 : vector<8x1xf32>
    %666 = arith.extui %665 : vector<8x1xi1> to vector<8x1xi32>
    %667 = arith.sitofp %666 : vector<8x1xi32> to vector<8x1xf32>
    %668 = arith.mulf %658, %667 : vector<8x1xf32>
    %669 = arith.maximumf %651, %668 : vector<8x1xf32>
    %670 = vector.extract_strided_slice %650 {offsets = [0, 1], sizes = [8, 1], strides = [1, 1]} : vector<8x8xf32> to vector<8x1xf32>
    %671 = vector.broadcast %670 : vector<8x1xf32> to vector<8x8xf32>
    %672 = arith.cmpf oge, %650, %671 : vector<8x8xf32>
    %673 = arith.extui %672 : vector<8x8xi1> to vector<8x8xi32>
    %674 = arith.sitofp %673 : vector<8x8xi32> to vector<8x8xf32>
    %cst_117 = arith.constant dense<0.000000e+00> : vector<8xf32>
    %675 = vector.multi_reduction <add>, %674, %cst_117 [1] : vector<8x8xf32> to vector<8xf32>
    %676 = vector.shape_cast %675 : vector<8xf32> to vector<8x1xf32>
    %677 = arith.mulf %674, %650 : vector<8x8xf32>
    %cst_118 = arith.constant dense<0.000000e+00> : vector<8xf32>
    %678 = vector.multi_reduction <add>, %677, %cst_118 [1] : vector<8x8xf32> to vector<8xf32>
    %679 = vector.shape_cast %678 : vector<8xf32> to vector<8x1xf32>
    %680 = arith.mulf %676, %670 : vector<8x1xf32>
    %cst_119 = arith.constant 1.000000e+00 : f32
    %681 = vector.broadcast %cst_119 : f32 to vector<8x1xf32>
    %682 = arith.addf %681, %680 : vector<8x1xf32>
    %683 = arith.cmpf ogt, %682, %679 : vector<8x1xf32>
    %684 = arith.extui %683 : vector<8x1xi1> to vector<8x1xi32>
    %685 = arith.sitofp %684 : vector<8x1xi32> to vector<8x1xf32>
    %686 = arith.mulf %676, %685 : vector<8x1xf32>
    %687 = arith.maximumf %669, %686 : vector<8x1xf32>
    %688 = vector.extract_strided_slice %650 {offsets = [0, 2], sizes = [8, 1], strides = [1, 1]} : vector<8x8xf32> to vector<8x1xf32>
    %689 = vector.broadcast %688 : vector<8x1xf32> to vector<8x8xf32>
    %690 = arith.cmpf oge, %650, %689 : vector<8x8xf32>
    %691 = arith.extui %690 : vector<8x8xi1> to vector<8x8xi32>
    %692 = arith.sitofp %691 : vector<8x8xi32> to vector<8x8xf32>
    %cst_120 = arith.constant dense<0.000000e+00> : vector<8xf32>
    %693 = vector.multi_reduction <add>, %692, %cst_120 [1] : vector<8x8xf32> to vector<8xf32>
    %694 = vector.shape_cast %693 : vector<8xf32> to vector<8x1xf32>
    %695 = arith.mulf %692, %650 : vector<8x8xf32>
    %cst_121 = arith.constant dense<0.000000e+00> : vector<8xf32>
    %696 = vector.multi_reduction <add>, %695, %cst_121 [1] : vector<8x8xf32> to vector<8xf32>
    %697 = vector.shape_cast %696 : vector<8xf32> to vector<8x1xf32>
    %698 = arith.mulf %694, %688 : vector<8x1xf32>
    %cst_122 = arith.constant 1.000000e+00 : f32
    %699 = vector.broadcast %cst_122 : f32 to vector<8x1xf32>
    %700 = arith.addf %699, %698 : vector<8x1xf32>
    %701 = arith.cmpf ogt, %700, %697 : vector<8x1xf32>
    %702 = arith.extui %701 : vector<8x1xi1> to vector<8x1xi32>
    %703 = arith.sitofp %702 : vector<8x1xi32> to vector<8x1xf32>
    %704 = arith.mulf %694, %703 : vector<8x1xf32>
    %705 = arith.maximumf %687, %704 : vector<8x1xf32>
    %706 = vector.extract_strided_slice %650 {offsets = [0, 3], sizes = [8, 1], strides = [1, 1]} : vector<8x8xf32> to vector<8x1xf32>
    %707 = vector.broadcast %706 : vector<8x1xf32> to vector<8x8xf32>
    %708 = arith.cmpf oge, %650, %707 : vector<8x8xf32>
    %709 = arith.extui %708 : vector<8x8xi1> to vector<8x8xi32>
    %710 = arith.sitofp %709 : vector<8x8xi32> to vector<8x8xf32>
    %cst_123 = arith.constant dense<0.000000e+00> : vector<8xf32>
    %711 = vector.multi_reduction <add>, %710, %cst_123 [1] : vector<8x8xf32> to vector<8xf32>
    %712 = vector.shape_cast %711 : vector<8xf32> to vector<8x1xf32>
    %713 = arith.mulf %710, %650 : vector<8x8xf32>
    %cst_124 = arith.constant dense<0.000000e+00> : vector<8xf32>
    %714 = vector.multi_reduction <add>, %713, %cst_124 [1] : vector<8x8xf32> to vector<8xf32>
    %715 = vector.shape_cast %714 : vector<8xf32> to vector<8x1xf32>
    %716 = arith.mulf %712, %706 : vector<8x1xf32>
    %cst_125 = arith.constant 1.000000e+00 : f32
    %717 = vector.broadcast %cst_125 : f32 to vector<8x1xf32>
    %718 = arith.addf %717, %716 : vector<8x1xf32>
    %719 = arith.cmpf ogt, %718, %715 : vector<8x1xf32>
    %720 = arith.extui %719 : vector<8x1xi1> to vector<8x1xi32>
    %721 = arith.sitofp %720 : vector<8x1xi32> to vector<8x1xf32>
    %722 = arith.mulf %712, %721 : vector<8x1xf32>
    %723 = arith.maximumf %705, %722 : vector<8x1xf32>
    %724 = vector.extract_strided_slice %650 {offsets = [0, 4], sizes = [8, 1], strides = [1, 1]} : vector<8x8xf32> to vector<8x1xf32>
    %725 = vector.broadcast %724 : vector<8x1xf32> to vector<8x8xf32>
    %726 = arith.cmpf oge, %650, %725 : vector<8x8xf32>
    %727 = arith.extui %726 : vector<8x8xi1> to vector<8x8xi32>
    %728 = arith.sitofp %727 : vector<8x8xi32> to vector<8x8xf32>
    %cst_126 = arith.constant dense<0.000000e+00> : vector<8xf32>
    %729 = vector.multi_reduction <add>, %728, %cst_126 [1] : vector<8x8xf32> to vector<8xf32>
    %730 = vector.shape_cast %729 : vector<8xf32> to vector<8x1xf32>
    %731 = arith.mulf %728, %650 : vector<8x8xf32>
    %cst_127 = arith.constant dense<0.000000e+00> : vector<8xf32>
    %732 = vector.multi_reduction <add>, %731, %cst_127 [1] : vector<8x8xf32> to vector<8xf32>
    %733 = vector.shape_cast %732 : vector<8xf32> to vector<8x1xf32>
    %734 = arith.mulf %730, %724 : vector<8x1xf32>
    %cst_128 = arith.constant 1.000000e+00 : f32
    %735 = vector.broadcast %cst_128 : f32 to vector<8x1xf32>
    %736 = arith.addf %735, %734 : vector<8x1xf32>
    %737 = arith.cmpf ogt, %736, %733 : vector<8x1xf32>
    %738 = arith.extui %737 : vector<8x1xi1> to vector<8x1xi32>
    %739 = arith.sitofp %738 : vector<8x1xi32> to vector<8x1xf32>
    %740 = arith.mulf %730, %739 : vector<8x1xf32>
    %741 = arith.maximumf %723, %740 : vector<8x1xf32>
    %742 = vector.extract_strided_slice %650 {offsets = [0, 5], sizes = [8, 1], strides = [1, 1]} : vector<8x8xf32> to vector<8x1xf32>
    %743 = vector.broadcast %742 : vector<8x1xf32> to vector<8x8xf32>
    %744 = arith.cmpf oge, %650, %743 : vector<8x8xf32>
    %745 = arith.extui %744 : vector<8x8xi1> to vector<8x8xi32>
    %746 = arith.sitofp %745 : vector<8x8xi32> to vector<8x8xf32>
    %cst_129 = arith.constant dense<0.000000e+00> : vector<8xf32>
    %747 = vector.multi_reduction <add>, %746, %cst_129 [1] : vector<8x8xf32> to vector<8xf32>
    %748 = vector.shape_cast %747 : vector<8xf32> to vector<8x1xf32>
    %749 = arith.mulf %746, %650 : vector<8x8xf32>
    %cst_130 = arith.constant dense<0.000000e+00> : vector<8xf32>
    %750 = vector.multi_reduction <add>, %749, %cst_130 [1] : vector<8x8xf32> to vector<8xf32>
    %751 = vector.shape_cast %750 : vector<8xf32> to vector<8x1xf32>
    %752 = arith.mulf %748, %742 : vector<8x1xf32>
    %cst_131 = arith.constant 1.000000e+00 : f32
    %753 = vector.broadcast %cst_131 : f32 to vector<8x1xf32>
    %754 = arith.addf %753, %752 : vector<8x1xf32>
    %755 = arith.cmpf ogt, %754, %751 : vector<8x1xf32>
    %756 = arith.extui %755 : vector<8x1xi1> to vector<8x1xi32>
    %757 = arith.sitofp %756 : vector<8x1xi32> to vector<8x1xf32>
    %758 = arith.mulf %748, %757 : vector<8x1xf32>
    %759 = arith.maximumf %741, %758 : vector<8x1xf32>
    %760 = vector.extract_strided_slice %650 {offsets = [0, 6], sizes = [8, 1], strides = [1, 1]} : vector<8x8xf32> to vector<8x1xf32>
    %761 = vector.broadcast %760 : vector<8x1xf32> to vector<8x8xf32>
    %762 = arith.cmpf oge, %650, %761 : vector<8x8xf32>
    %763 = arith.extui %762 : vector<8x8xi1> to vector<8x8xi32>
    %764 = arith.sitofp %763 : vector<8x8xi32> to vector<8x8xf32>
    %cst_132 = arith.constant dense<0.000000e+00> : vector<8xf32>
    %765 = vector.multi_reduction <add>, %764, %cst_132 [1] : vector<8x8xf32> to vector<8xf32>
    %766 = vector.shape_cast %765 : vector<8xf32> to vector<8x1xf32>
    %767 = arith.mulf %764, %650 : vector<8x8xf32>
    %cst_133 = arith.constant dense<0.000000e+00> : vector<8xf32>
    %768 = vector.multi_reduction <add>, %767, %cst_133 [1] : vector<8x8xf32> to vector<8xf32>
    %769 = vector.shape_cast %768 : vector<8xf32> to vector<8x1xf32>
    %770 = arith.mulf %766, %760 : vector<8x1xf32>
    %cst_134 = arith.constant 1.000000e+00 : f32
    %771 = vector.broadcast %cst_134 : f32 to vector<8x1xf32>
    %772 = arith.addf %771, %770 : vector<8x1xf32>
    %773 = arith.cmpf ogt, %772, %769 : vector<8x1xf32>
    %774 = arith.extui %773 : vector<8x1xi1> to vector<8x1xi32>
    %775 = arith.sitofp %774 : vector<8x1xi32> to vector<8x1xf32>
    %776 = arith.mulf %766, %775 : vector<8x1xf32>
    %777 = arith.maximumf %759, %776 : vector<8x1xf32>
    %778 = vector.extract_strided_slice %650 {offsets = [0, 7], sizes = [8, 1], strides = [1, 1]} : vector<8x8xf32> to vector<8x1xf32>
    %779 = vector.broadcast %778 : vector<8x1xf32> to vector<8x8xf32>
    %780 = arith.cmpf oge, %650, %779 : vector<8x8xf32>
    %781 = arith.extui %780 : vector<8x8xi1> to vector<8x8xi32>
    %782 = arith.sitofp %781 : vector<8x8xi32> to vector<8x8xf32>
    %cst_135 = arith.constant dense<0.000000e+00> : vector<8xf32>
    %783 = vector.multi_reduction <add>, %782, %cst_135 [1] : vector<8x8xf32> to vector<8xf32>
    %784 = vector.shape_cast %783 : vector<8xf32> to vector<8x1xf32>
    %785 = arith.mulf %782, %650 : vector<8x8xf32>
    %cst_136 = arith.constant dense<0.000000e+00> : vector<8xf32>
    %786 = vector.multi_reduction <add>, %785, %cst_136 [1] : vector<8x8xf32> to vector<8xf32>
    %787 = vector.shape_cast %786 : vector<8xf32> to vector<8x1xf32>
    %788 = arith.mulf %784, %778 : vector<8x1xf32>
    %cst_137 = arith.constant 1.000000e+00 : f32
    %789 = vector.broadcast %cst_137 : f32 to vector<8x1xf32>
    %790 = arith.addf %789, %788 : vector<8x1xf32>
    %791 = arith.cmpf ogt, %790, %787 : vector<8x1xf32>
    %792 = arith.extui %791 : vector<8x1xi1> to vector<8x1xi32>
    %793 = arith.sitofp %792 : vector<8x1xi32> to vector<8x1xf32>
    %794 = arith.mulf %784, %793 : vector<8x1xf32>
    %795 = arith.maximumf %777, %794 : vector<8x1xf32>
    %cst_138 = arith.constant 0.000000e+00 : f32
    %796 = vector.broadcast %cst_138 : f32 to vector<8x1xf32>
    %797 = arith.cmpf ole, %658, %795 : vector<8x1xf32>
    %798 = arith.extui %797 : vector<8x1xi1> to vector<8x1xi32>
    %799 = arith.sitofp %798 : vector<8x1xi32> to vector<8x1xf32>
    %800 = arith.mulf %652, %799 : vector<8x1xf32>
    %801 = arith.addf %796, %800 : vector<8x1xf32>
    %802 = arith.cmpf ole, %676, %795 : vector<8x1xf32>
    %803 = arith.extui %802 : vector<8x1xi1> to vector<8x1xi32>
    %804 = arith.sitofp %803 : vector<8x1xi32> to vector<8x1xf32>
    %805 = arith.mulf %670, %804 : vector<8x1xf32>
    %806 = arith.addf %801, %805 : vector<8x1xf32>
    %807 = arith.cmpf ole, %694, %795 : vector<8x1xf32>
    %808 = arith.extui %807 : vector<8x1xi1> to vector<8x1xi32>
    %809 = arith.sitofp %808 : vector<8x1xi32> to vector<8x1xf32>
    %810 = arith.mulf %688, %809 : vector<8x1xf32>
    %811 = arith.addf %806, %810 : vector<8x1xf32>
    %812 = arith.cmpf ole, %712, %795 : vector<8x1xf32>
    %813 = arith.extui %812 : vector<8x1xi1> to vector<8x1xi32>
    %814 = arith.sitofp %813 : vector<8x1xi32> to vector<8x1xf32>
    %815 = arith.mulf %706, %814 : vector<8x1xf32>
    %816 = arith.addf %811, %815 : vector<8x1xf32>
    %817 = arith.cmpf ole, %730, %795 : vector<8x1xf32>
    %818 = arith.extui %817 : vector<8x1xi1> to vector<8x1xi32>
    %819 = arith.sitofp %818 : vector<8x1xi32> to vector<8x1xf32>
    %820 = arith.mulf %724, %819 : vector<8x1xf32>
    %821 = arith.addf %816, %820 : vector<8x1xf32>
    %822 = arith.cmpf ole, %748, %795 : vector<8x1xf32>
    %823 = arith.extui %822 : vector<8x1xi1> to vector<8x1xi32>
    %824 = arith.sitofp %823 : vector<8x1xi32> to vector<8x1xf32>
    %825 = arith.mulf %742, %824 : vector<8x1xf32>
    %826 = arith.addf %821, %825 : vector<8x1xf32>
    %827 = arith.cmpf ole, %766, %795 : vector<8x1xf32>
    %828 = arith.extui %827 : vector<8x1xi1> to vector<8x1xi32>
    %829 = arith.sitofp %828 : vector<8x1xi32> to vector<8x1xf32>
    %830 = arith.mulf %760, %829 : vector<8x1xf32>
    %831 = arith.addf %826, %830 : vector<8x1xf32>
    %832 = arith.cmpf ole, %784, %795 : vector<8x1xf32>
    %833 = arith.extui %832 : vector<8x1xi1> to vector<8x1xi32>
    %834 = arith.sitofp %833 : vector<8x1xi32> to vector<8x1xf32>
    %835 = arith.mulf %778, %834 : vector<8x1xf32>
    %836 = arith.addf %831, %835 : vector<8x1xf32>
    %cst_139 = arith.constant 1.000000e+00 : f32
    %837 = vector.broadcast %cst_139 : f32 to vector<8x1xf32>
    %838 = arith.subf %836, %837 : vector<8x1xf32>
    %839 = arith.divf %838, %795 : vector<8x1xf32>
    %840 = vector.broadcast %839 : vector<8x1xf32> to vector<8x8xf32>
    %841 = arith.subf %650, %840 : vector<8x8xf32>
    %cst_140 = arith.constant 0.000000e+00 : f32
    %842 = vector.broadcast %cst_140 : f32 to vector<8x8xf32>
    %843 = arith.maximumf %841, %842 : vector<8x8xf32>
    %cst_141 = arith.constant 0.000000e+00 : f32
    %844 = vector.shape_cast %16 : vector<8x1xi1> to vector<8x1xi1>
    %845 = vector.broadcast %844 : vector<8x1xi1> to vector<8x8xi1>
    %846 = vector.broadcast %cst_141 : f32 to vector<8x8xf32>
    %847 = arith.select %845, %846, %843 : vector<8x8xi1>, vector<8x8xf32>
    %cst_142 = arith.constant dense<0.000000e+00> : vector<8x32xf32>
    %848 = tpu.matmul %847, %643, %cst_142 {dimension_numbers = #tpu.dot_dimension_numbers<[1], [0], [0], [1], [0, 0, 1, 1], [], []>} : vector<8x8xf32>, vector<8x32xf32>, vector<8x32xf32> -> vector<8x32xf32>
    %cst_143 = arith.constant 1.000000e+00 : f32
    %849 = vector.broadcast %cst_143 : f32 to vector<8x8xf32>
    %850 = arith.subf %849, %3 : vector<8x8xf32>
    %851 = vector.extract_strided_slice %850 {offsets = [0, 0], sizes = [3, 8], strides = [1, 1]} : vector<8x8xf32> to vector<3x8xf32>
    %cst_144 = arith.constant dense<0.000000e+00> : vector<3x32xf32>
    %852 = tpu.matmul %851, %1, %cst_144 {dimension_numbers = #tpu.dot_dimension_numbers<[1], [0], [0], [1], [0, 0, 1, 1], [], []>} : vector<3x8xf32>, vector<8x32xf32>, vector<3x32xf32> -> vector<3x32xf32>
    %c0_145 = arith.constant 0 : index
    %c0_146 = arith.constant 0 : index
    %853 = vector.load %arg4[%c0_145, %c0_146] : memref<32x4xf32, #tpu.memory_space<vmem>>, vector<32x4xf32>
    %cst_147 = arith.constant dense<0.000000e+00> : vector<3x4xf32>
    %854 = tpu.matmul %852, %853, %cst_147 {dimension_numbers = #tpu.dot_dimension_numbers<[1], [0], [0], [1], [0, 0, 1, 1], [], []>} : vector<3x32xf32>, vector<32x4xf32>, vector<3x4xf32> -> vector<3x4xf32>
    %c0_148 = arith.constant 0 : index
    %c0_149 = arith.constant 0 : index
    %855 = vector.load %arg5[%c0_148, %c0_149] : memref<1x4xf32, #tpu.memory_space<vmem>>, vector<1x4xf32>
    %856 = vector.broadcast %855 : vector<1x4xf32> to vector<3x4xf32>
    %857 = arith.addf %854, %856 : vector<3x4xf32>
    %cst_150 = arith.constant dense<0xFF800000> : vector<3xf32>
    %858 = vector.multi_reduction <maximumf>, %857, %cst_150 [1] : vector<3x4xf32> to vector<3xf32>
    %859 = vector.shape_cast %858 : vector<3xf32> to vector<3x1xf32>
    %860 = vector.broadcast %859 : vector<3x1xf32> to vector<3x4xf32>
    %861 = arith.subf %857, %860 : vector<3x4xf32>
    %862 = math.exp %861 : vector<3x4xf32>
    %cst_151 = arith.constant dense<0.000000e+00> : vector<3xf32>
    %863 = vector.multi_reduction <add>, %862, %cst_151 [1] : vector<3x4xf32> to vector<3xf32>
    %864 = vector.shape_cast %863 : vector<3xf32> to vector<3x1xf32>
    %865 = vector.broadcast %864 : vector<3x1xf32> to vector<3x4xf32>
    %866 = arith.divf %862, %865 : vector<3x4xf32>
    %cst_152 = arith.constant 0.000000e+00 : f32
    %867 = vector.broadcast %cst_152 : f32 to vector<3x32xf32>
    %868 = vector.extract_strided_slice %866 {offsets = [0, 0], sizes = [3, 1], strides = [1, 1]} : vector<3x4xf32> to vector<3x1xf32>
    %869 = vector.extract_strided_slice %224 {offsets = [0, 0], sizes = [3, 32], strides = [1, 1]} : vector<8x32xf32> to vector<3x32xf32>
    %870 = vector.broadcast %868 : vector<3x1xf32> to vector<3x32xf32>
    %871 = arith.mulf %870, %869 : vector<3x32xf32>
    %872 = arith.addf %867, %871 : vector<3x32xf32>
    %873 = vector.extract_strided_slice %866 {offsets = [0, 1], sizes = [3, 1], strides = [1, 1]} : vector<3x4xf32> to vector<3x1xf32>
    %874 = vector.extract_strided_slice %432 {offsets = [0, 0], sizes = [3, 32], strides = [1, 1]} : vector<8x32xf32> to vector<3x32xf32>
    %875 = vector.broadcast %873 : vector<3x1xf32> to vector<3x32xf32>
    %876 = arith.mulf %875, %874 : vector<3x32xf32>
    %877 = arith.addf %872, %876 : vector<3x32xf32>
    %878 = vector.extract_strided_slice %866 {offsets = [0, 2], sizes = [3, 1], strides = [1, 1]} : vector<3x4xf32> to vector<3x1xf32>
    %879 = vector.extract_strided_slice %640 {offsets = [0, 0], sizes = [3, 32], strides = [1, 1]} : vector<8x32xf32> to vector<3x32xf32>
    %880 = vector.broadcast %878 : vector<3x1xf32> to vector<3x32xf32>
    %881 = arith.mulf %880, %879 : vector<3x32xf32>
    %882 = arith.addf %877, %881 : vector<3x32xf32>
    %883 = vector.extract_strided_slice %866 {offsets = [0, 3], sizes = [3, 1], strides = [1, 1]} : vector<3x4xf32> to vector<3x1xf32>
    %884 = vector.extract_strided_slice %848 {offsets = [0, 0], sizes = [3, 32], strides = [1, 1]} : vector<8x32xf32> to vector<3x32xf32>
    %885 = vector.broadcast %883 : vector<3x1xf32> to vector<3x32xf32>
    %886 = arith.mulf %885, %884 : vector<3x32xf32>
    %887 = arith.addf %882, %886 : vector<3x32xf32>
    %c0_153 = arith.constant 0 : index
    %c0_154 = arith.constant 0 : index
    %c0_155 = arith.constant 0 : index
    %888 = vector.load %arg6[%c0_153, %c0_154, %c0_155] : memref<1x8x32xf32, #tpu.memory_space<vmem>>, vector<1x3x32xf32>
    %889 = vector.shape_cast %888 : vector<1x3x32xf32> to vector<3x32xf32>
    %890 = vector.shape_cast %887 : vector<3x32xf32> to vector<1x3x32xf32>
    tpu.vector_store %arg6[%c0_153, %c0_154, %c0_155], %890 {strides = array<i32>} : memref<1x8x32xf32, #tpu.memory_space<vmem>>, vector<1x3x32xf32>,
    %cst_156 = arith.constant 0.000000e+00 : f32
    %891 = vector.broadcast %cst_156 : f32 to vector<5x32xf32>
    %892 = vector.extract_strided_slice %224 {offsets = [3, 0], sizes = [5, 32], strides = [1, 1]} : vector<8x32xf32> to vector<5x32xf32>
    %893 = arith.addf %891, %892 : vector<5x32xf32>
    %894 = vector.extract_strided_slice %432 {offsets = [3, 0], sizes = [5, 32], strides = [1, 1]} : vector<8x32xf32> to vector<5x32xf32>
    %895 = arith.addf %893, %894 : vector<5x32xf32>
    %896 = vector.extract_strided_slice %640 {offsets = [3, 0], sizes = [5, 32], strides = [1, 1]} : vector<8x32xf32> to vector<5x32xf32>
    %897 = arith.addf %895, %896 : vector<5x32xf32>
    %898 = vector.extract_strided_slice %848 {offsets = [3, 0], sizes = [5, 32], strides = [1, 1]} : vector<8x32xf32> to vector<5x32xf32>
    %899 = arith.addf %897, %898 : vector<5x32xf32>
    %cst_157 = arith.constant 2.500000e-01 : f32
    %900 = vector.broadcast %cst_157 : f32 to vector<5x32xf32>
    %901 = arith.mulf %899, %900 : vector<5x32xf32>
    %c0_158 = arith.constant 0 : index
    %c3 = arith.constant 3 : index
    %c0_159 = arith.constant 0 : index
    %902 = vector.load %arg6[%c0_158, %c3, %c0_159] : memref<1x8x32xf32, #tpu.memory_space<vmem>>, vector<1x5x32xf32>
    %903 = vector.shape_cast %902 : vector<1x5x32xf32> to vector<5x32xf32>
    %904 = vector.shape_cast %901 : vector<5x32xf32> to vector<1x5x32xf32>
    tpu.vector_store %arg6[%c0_158, %c3, %c0_159], %904 {strides = array<i32>} : memref<1x8x32xf32, #tpu.memory_space<vmem>>, vector<1x5x32xf32>,
    return
  }
  func.func @transform_0(%arg0: i32) -> (i32, i32, i32) {
    %c0_i32 = arith.constant 0 : i32
    %c0_i32_0 = arith.constant 0 : i32
    %c0_i32_1 = arith.constant 0 : i32
    return %arg0, %c0_i32, %c0_i32_0 : i32, i32, i32
  }
  func.func @transform_1(%arg0: i32) -> (i32, i32, i32) {
    %c0_i32 = arith.constant 0 : i32
    %c0_i32_0 = arith.constant 0 : i32
    %c0_i32_1 = arith.constant 0 : i32
    return %arg0, %c0_i32, %c0_i32_0 : i32, i32, i32
  }
  func.func @transform_2(%arg0: i32) -> (i32, i32) {
    %c0_i32 = arith.constant 0 : i32
    %c0_i32_0 = arith.constant 0 : i32
    %c0_i32_1 = arith.constant 0 : i32
    return %c0_i32, %c0_i32_0 : i32, i32
  }
  func.func @transform_3(%arg0: i32) -> (i32, i32) {
    %c0_i32 = arith.constant 0 : i32
    %c0_i32_0 = arith.constant 0 : i32
    %c0_i32_1 = arith.constant 0 : i32
    return %c0_i32, %c0_i32_0 : i32, i32
  }
  func.func @transform_4(%arg0: i32) -> (i32, i32) {
    %c0_i32 = arith.constant 0 : i32
    %c0_i32_0 = arith.constant 0 : i32
    %c0_i32_1 = arith.constant 0 : i32
    return %c0_i32, %c0_i32_0 : i32, i32
  }
  func.func @transform_5(%arg0: i32) -> (i32, i32, i32) {
    %c0_i32 = arith.constant 0 : i32
    %c0_i32_0 = arith.constant 0 : i32
    %c0_i32_1 = arith.constant 0 : i32
    return %arg0, %c0_i32, %c0_i32_0 : i32, i32, i32
  }
}

</mosaic_0001>

<llo_original>
// kernel: tpu_custom_call.1
$region0: #{tpu_custom_call.1}
  #allocation0 [shape = 'u32[]', space=smem, size = 0x4, offset = 0x4, fixed_abs, tag = 'smem constant byte address 0x4 - core index']
  #allocation1 [shape = 'u32[72,128]{1,0:T(1,128)}', space=vmem, size = 0x9000, scoped, tag = 'internal scratch']
  %s0 = inlined_call_operand.vmem [shape: f32[2,8,32], index: 0, kind: input, shape index: {}]
  %s1 = inlined_call_operand.vmem [shape: f32[2,8,8], index: 1, kind: input, shape index: {}]
  %s2 = inlined_call_operand.hbm [shape: f32[32,384], index: 2, kind: input, shape index: {}]
  %s3 = inlined_call_operand.vmem [shape: f32[32,4], index: 3, kind: input, shape index: {}]
  %s4 = inlined_call_operand.vmem [shape: f32[1,4], index: 4, kind: input, shape index: {}]
  %s5 = inlined_call_operand.hbm [shape: f32[2,8,32], index: 5, kind: output, shape index: {}]
  %s6 = sld [smem:[#allocation0]]
  $region57: #{tpu_custom_call.1} parent=0
    _
  %s8 = ssub.s32 1, %s6
  %s9 = scalar_select 0, %s8, %s6
  $region1: #{tpu_custom_call.1} parent=0
    #allocation2 [shape = 'u8[49152]{0}', space=vmem, size = 0xc000, scoped, tag = 'input window, operand 2, single buffered']
    #allocation3 [shape = 's32[2]{0}', space=sflag, size = 0x8, scoped, tag = 'scoped memory for tpu_custom_call.1']
    #allocation4 [shape = 's32[2]{0}', space=sflag, size = 0x8, scoped, tag = 'scoped memory for tpu_custom_call.1']
    #allocation5 [shape = 'u8[8192]{0}', space=vmem, size = 0x2000, scoped, tag = 'output window, operand 0']
    %10 = vsyncpa [#allocation3], 0
    %11 = vsyncpa [#allocation4], 0
    %s12 = scalar_lea.sflag [#allocation4], 1
    %13 = vsyncpa %s12, 0
    loop: start=0, step=1, limit=4
    $region2: #{tpu_custom_call.1} parent=1 // loop_pre_header
      _
    $region3: #{tpu_custom_call.1} parent=1 // loop_header
      %s15 = sphi 0, %s19
      %p16 = scmp.ge.s32.totalorder %s15, 4
      %s25 = sphi 0, %s27
      %s28 = sphi 0, %s25
      %s29 = sphi 0, %s28
      %s45 = sphi 0, %s29
      %s51 = sphi 0, %s53
      %s54 = sphi 0, %s51
      %s55 = sphi 0, %s54
      %s71 = sphi 0, %s55
      %s75 = sphi 0, %s75
      %s77 = sphi 0, %s75
      %s78 = sphi 0, %s77
      %s92 = sphi 0, %s78
      %s96 = sphi 0, %s96
      %s98 = sphi 0, %s96
      %s99 = sphi 0, %s98
      %s113 = sphi 0, %s99
      %s117 = sphi 0, %s117
      %s119 = sphi 0, %s117
      %s120 = sphi 0, %s119
      %s134 = sphi 0, %s120
      %s140 = sphi 0, %s142
      %s143 = sphi 0, %s140
      %s144 = sphi 0, %s143
      %s160 = sphi 0, %s144
    $region4: #{tpu_custom_call.1} parent=1 // loop_header_branch
      %18 = sbr.rel (%p16) target = $region8
    $region5: #{tpu_custom_call.1} parent=1 // loop_body
      %s20 = ssub.s32 %s15, 1
      %s21 = ssub.s32 %s15, 2
      %s22 = sadd.s32 %s15, 1
      %s23 = ssub.s32 %s15, %s22
      %p24 = scmp.eq.s32.totalorder %s23, 0
      %s26 = sadd.s32 %s25, 1
      %s27 = scalar_select %p24, %s25, %s26
      %p30 = pneg %p24
      %p31 = scmp.eq.s32.totalorder %s15, 1
      %p32 = por %p30, %p31
      %p33 = scmp.ne.s32.totalorder %s25, %s28
      %p34 = scmp.eq.s32.totalorder %s15, 0
      %p35 = por %p33, %p34
      %p36 = scmp.ne.s32.totalorder %s25, %s28
      %p37 = scmp.eq.s32.totalorder %s20, 1
      %p38 = por %p36, %p37
      %p39 = scmp.ne.s32.totalorder %s28, %s29
      %p40 = scmp.eq.s32.totalorder %s20, 0
      %p41 = por %p39, %p40
      %p42 = scmp.ne.s32.totalorder %s28, %s29
      %p43 = scmp.eq.s32.totalorder %s21, 1
      %p44 = por %p42, %p43
      %p46 = scmp.ne.s32.totalorder %s29, %s45
      %p47 = scmp.eq.s32.totalorder %s21, 0
      %p48 = por %p46, %p47
      %s49 = ssub.s32 %s15, %s22
      %p50 = scmp.eq.s32.totalorder %s49, 0
      %s52 = sadd.s32 %s51, 1
      %s53 = scalar_select %p50, %s51, %s52
      %p56 = pneg %p50
      %p57 = scmp.eq.s32.totalorder %s15, 1
      %p58 = por %p56, %p57
      %p59 = scmp.ne.s32.totalorder %s51, %s54
      %p60 = scmp.eq.s32.totalorder %s15, 0
      %p61 = por %p59, %p60
      %p62 = scmp.ne.s32.totalorder %s51, %s54
      %p63 = scmp.eq.s32.totalorder %s20, 1
      %p64 = por %p62, %p63
      %p65 = scmp.ne.s32.totalorder %s54, %s55
      %p66 = scmp.eq.s32.totalorder %s20, 0
      %p67 = por %p65, %p66
      %p68 = scmp.ne.s32.totalorder %s54, %s55
      %p69 = scmp.eq.s32.totalorder %s21, 1
      %p70 = por %p68, %p69
      %p72 = scmp.ne.s32.totalorder %s55, %s71
      %p73 = scmp.eq.s32.totalorder %s21, 0
      %p74 = por %p72, %p73
      %s76 = sadd.s32 %s75, 1
      %p79 = scmp.eq.s32.totalorder %s15, 1
      %p80 = scmp.ne.s32.totalorder %s75, %s77
      %p81 = scmp.eq.s32.totalorder %s15, 0
      %p82 = por %p80, %p81
      %p83 = scmp.ne.s32.totalorder %s75, %s77
      %p84 = scmp.eq.s32.totalorder %s20, 1
      %p85 = por %p83, %p84
      %p86 = scmp.ne.s32.totalorder %s77, %s78
      %p87 = scmp.eq.s32.totalorder %s20, 0
      %p88 = por %p86, %p87
      %p89 = scmp.ne.s32.totalorder %s77, %s78
      %p90 = scmp.eq.s32.totalorder %s21, 1
      %p91 = por %p89, %p90
      %p93 = scmp.ne.s32.totalorder %s78, %s92
      %p94 = scmp.eq.s32.totalorder %s21, 0
      %p95 = por %p93, %p94
      %s97 = sadd.s32 %s96, 1
      %p100 = scmp.eq.s32.totalorder %s15, 1
      %p101 = scmp.ne.s32.totalorder %s96, %s98
      %p102 = scmp.eq.s32.totalorder %s15, 0
      %p103 = por %p101, %p102
      %p104 = scmp.ne.s32.totalorder %s96, %s98
      %p105 = scmp.eq.s32.totalorder %s20, 1
      %p106 = por %p104, %p105
      %p107 = scmp.ne.s32.totalorder %s98, %s99
      %p108 = scmp.eq.s32.totalorder %s20, 0
      %p109 = por %p107, %p108
      %p110 = scmp.ne.s32.totalorder %s98, %s99
      %p111 = scmp.eq.s32.totalorder %s21, 1
      %p112 = por %p110, %p111
      %p114 = scmp.ne.s32.totalorder %s99, %s113
      %p115 = scmp.eq.s32.totalorder %s21, 0
      %p116 = por %p114, %p115
      %s118 = sadd.s32 %s117, 1
      %p121 = scmp.eq.s32.totalorder %s15, 1
      %p122 = scmp.ne.s32.totalorder %s117, %s119
      %p123 = scmp.eq.s32.totalorder %s15, 0
      %p124 = por %p122, %p123
      %p125 = scmp.ne.s32.totalorder %s117, %s119
      %p126 = scmp.eq.s32.totalorder %s20, 1
      %p127 = por %p125, %p126
      %p128 = scmp.ne.s32.totalorder %s119, %s120
      %p129 = scmp.eq.s32.totalorder %s20, 0
      %p130 = por %p128, %p129
      %p131 = scmp.ne.s32.totalorder %s119, %s120
      %p132 = scmp.eq.s32.totalorder %s21, 1
      %p133 = por %p131, %p132
      %p135 = scmp.ne.s32.totalorder %s120, %s134
      %p136 = scmp.eq.s32.totalorder %s21, 0
      %p137 = por %p135, %p136
      %s138 = ssub.s32 %s15, %s22
      %p139 = scmp.eq.s32.totalorder %s138, 0
      %s141 = sadd.s32 %s140, 1
      %s142 = scalar_select %p139, %s140, %s141
      %p145 = pneg %p139
      %p146 = scmp.eq.s32.totalorder %s15, 1
      %p147 = por %p145, %p146
      %p148 = scmp.ne.s32.totalorder %s140, %s143
      %p149 = scmp.eq.s32.totalorder %s15, 0
      %p150 = por %p148, %p149
      %p151 = scmp.ne.s32.totalorder %s140, %s143
      %p152 = scmp.eq.s32.totalorder %s20, 1
      %p153 = por %p151, %p152
      %p154 = scmp.ne.s32.totalorder %s143, %s144
      %p155 = scmp.eq.s32.totalorder %s20, 0
      %p156 = por %p154, %p155
      %p157 = scmp.ne.s32.totalorder %s143, %s144
      %p158 = scmp.eq.s32.totalorder %s21, 1
      %p159 = por %p157, %p158
      %p161 = scmp.ne.s32.totalorder %s144, %s160
      %p162 = scmp.eq.s32.totalorder %s21, 0
      %p163 = por %p161, %p162
      %p164 = scmp.le.s32.totalorder 1, %s15
      %p165 = scmp.lt.s32.totalorder %s15, 3
      %p166 = pnand %p164, %p165
      %p167 = pneg %p166
      // Predicated region
      $region9: #{tpu_custom_call.1} parent=5 // pred_check
        _
      $region10: #{tpu_custom_call.1} parent=5 // pred_check_branch
        %169 = sbr.rel (%p166) target = $region12
      $region11: #{tpu_custom_call.1} parent=5 // pred_region
        %s170 = ssub.s32 %s15, 1
        // Predicated region
        $region13: #{tpu_custom_call.1} parent=11 // pred_check
          %p171 = pneg %p88
        $region14: #{tpu_custom_call.1} parent=11 // pred_check_branch
          %173 = sbr.rel (%p171) target = $region16
        $region15: #{tpu_custom_call.1} parent=11 // pred_region
          %175 = vsyncadd [#allocation3], 0
          %s176 = sshll.u32 %s2, 4
          %s177 = int_to_ptr.hbm [resolvable:$true] %s176
          %s178 = sshll.u32 [#allocation2], 4
          %s179 = int_to_ptr.vmem [resolvable:$true] %s178
          %184 = dma.hbm_to_vmem [thread:$0]  %s177, 1536, %s179, [#allocation3], 384, 384, 24
        $region16: #{tpu_custom_call.1} parent=11 // pred_fallthru
          _
        // Predicated region
        $region17: #{tpu_custom_call.1} parent=11 // pred_check
          %p185 = pneg %p109
        $region18: #{tpu_custom_call.1} parent=11 // pred_check_branch
          %187 = sbr.rel (%p185) target = $region20
        $region19: #{tpu_custom_call.1} parent=11 // pred_region
          _
        $region20: #{tpu_custom_call.1} parent=11 // pred_fallthru
          _
        // Predicated region
        $region21: #{tpu_custom_call.1} parent=11 // pred_check
          %p188 = pneg %p130
        $region22: #{tpu_custom_call.1} parent=11 // pred_check_branch
          %190 = sbr.rel (%p188) target = $region24
        $region23: #{tpu_custom_call.1} parent=11 // pred_region
          _
        $region24: #{tpu_custom_call.1} parent=11 // pred_fallthru
          _
      $region12: #{tpu_custom_call.1} parent=5 // pred_fallthru
        _
      %p191 = scmp.lt.s32.totalorder %s15, 2
      // Predicated region
      $region25: #{tpu_custom_call.1} parent=5 // pred_check
        %p192 = pneg %p191
      $region26: #{tpu_custom_call.1} parent=5 // pred_check_branch
        %194 = sbr.rel (%p192) target = $region28
      $region27: #{tpu_custom_call.1} parent=5 // pred_region
        // Predicated region
        $region29: #{tpu_custom_call.1} parent=27 // pred_check
          %p195 = pneg %p35
        $region30: #{tpu_custom_call.1} parent=27 // pred_check_branch
          %197 = sbr.rel (%p195) target = $region32
        $region31: #{tpu_custom_call.1} parent=27 // pred_region
          %p198 = scmp.lt.s32.totalorder %s15, 1
          %s199 = scalar_select %p198, %s15, 1
          %s200 = smul.addr %s199, 8
          %s201 = scalar_lea.vmem %s0, %s200
        $region32: #{tpu_custom_call.1} parent=27 // pred_fallthru
          _
        // Predicated region
        $region33: #{tpu_custom_call.1} parent=27 // pred_check
          %p202 = pneg %p61
        $region34: #{tpu_custom_call.1} parent=27 // pred_check_branch
          %204 = sbr.rel (%p202) target = $region36
        $region35: #{tpu_custom_call.1} parent=27 // pred_region
          %p205 = scmp.lt.s32.totalorder %s15, 1
          %s206 = scalar_select %p205, %s15, 1
          %s207 = smul.addr %s206, 8
          %s208 = scalar_lea.vmem %s1, %s207
        $region36: #{tpu_custom_call.1} parent=27 // pred_fallthru
          _
      $region28: #{tpu_custom_call.1} parent=5 // pred_fallthru
        _
      %p209 = scmp.le.s32.totalorder 1, %s15
      %p210 = scmp.lt.s32.totalorder %s15, 3
      %p211 = pnand %p209, %p210
      %p212 = pneg %p211
      // Predicated region
      $region37: #{tpu_custom_call.1} parent=5 // pred_check
        _
      $region38: #{tpu_custom_call.1} parent=5 // pred_check_branch
        %214 = sbr.rel (%p211) target = $region40
      $region39: #{tpu_custom_call.1} parent=5 // pred_region
        %s215 = ssub.s32 %s15, 1
        // Predicated region
        $region41: #{tpu_custom_call.1} parent=39 // pred_check
          %p216 = pneg %p88
        $region42: #{tpu_custom_call.1} parent=39 // pred_check_branch
          %218 = sbr.rel (%p216) target = $region44
        $region43: #{tpu_custom_call.1} parent=39 // pred_region
          %220 = dma.done [#allocation3], 1536
        $region44: #{tpu_custom_call.1} parent=39 // pred_fallthru
          _
        %p221 = scmp.lt.s32.totalorder %s20, 1
        %s222 = scalar_select %p221, %s20, 1
        %s223 = smul.addr %s222, 8
        %s224 = scalar_lea.vmem %s0, %s223
        %p225 = pneg %p41
        %p226 = pneg %p38
        %p227 = scmp.lt.s32.totalorder %s20, 1
        %s228 = scalar_select %p227, %s20, 1
        %s229 = smul.addr %s228, 8
        %s230 = scalar_lea.vmem %s1, %s229
        %p231 = pneg %p67
        %p232 = pneg %p64
        %p233 = pneg %p88
        %p234 = pneg %p85
        %p235 = pneg %p109
        %p236 = pneg %p106
        %p237 = pneg %p130
        %p238 = pneg %p127
        %p239 = pneg %p156
        %p240 = pneg %p153
        %s241 = sand.u32 %s143, 1
        %s242 = scalar_lea.sflag [#allocation4], %s241
        %s243 = sand.u32 %s143, 1
        %s244 = smul.addr %s243, 8
        %s245 = scalar_lea.vmem [#allocation5], %s244
        %p246 = scmp.lt.s32.totalorder %s20, 1
        %s247 = scalar_select %p246, %s20, 1
        %s248 = smul.addr %s247, 8
        %s249 = scalar_lea.vmem %s0, %s248
        %p250 = scmp.lt.s32.totalorder %s20, 1
        %s251 = scalar_select %p250, %s20, 1
        %s252 = smul.addr %s251, 8
        %s253 = scalar_lea.vmem %s1, %s252
        %v254 = vld [vmem:[%s249] sm:$0xff]
        %v255 = vld [vmem:[%s253] sm:$0xff]
        %v256 = vld [vmem:[#allocation2] sm:$0xff]
        %v257 = vld [vmem:[#allocation2 + $0x8] sm:$0xff]
        %v258 = vld [vmem:[#allocation2 + $0x10] sm:$0xff]
        %v259 = vld [vmem:[#allocation2 + $0x18] sm:$0xff]
        %v260 = vld [vmem:[#allocation2 + $0x20] sm:$0xff]
        %v261 = vld [vmem:[#allocation2 + $0x28] sm:$0xff]
        %v262 = vld [vmem:[#allocation2 + $0x30] sm:$0xff]
        %v263 = vld [vmem:[#allocation2 + $0x38] sm:$0xff]
        %v264 = vld [vmem:[#allocation2 + $0x40] sm:$0xff]
        %v265 = vld [vmem:[#allocation2 + $0x48] sm:$0xff]
        %v266 = vld [vmem:[#allocation2 + $0x50] sm:$0xff]
        %v267 = vld [vmem:[#allocation2 + $0x58] sm:$0xff]
        %vm268 = vcmask 261120
        %v270 = vsel %vm268, %v254, 0
        %272 = vmatpush.msra.mxu0 0.0
        %273 = vmatpush.msra.mxu0 0.0
        %274 = vmatpush.msra.mxu0 0.0
        %275 = vmatpush.msra.mxu0 0.0
        %276 = vmatpush.msra.mxu0 0.0
        %277 = vmatpush.msra.mxu0 0.0
        %278 = vmatpush.msra.mxu0 0.0
        %279 = vmatpush.msra.mxu0 0.0
        %280 = vmatpush.msra.mxu0 0.0
        %281 = vmatpush.msra.mxu0 0.0
        %282 = vmatpush.msra.mxu0 0.0
        %283 = vmatpush.msra.mxu0 0.0
        %284 = vmatpush.msra.mxu0 %v265
        %285 = vmatpush.msra.mxu0 %v262
        %286 = vmatpush.msra.mxu0 %v259
        %287 = vmatpush.msra.mxu0 %v256
        %288 = vmatmul.f32.gmra.mxu0 %v270
        %v289 = vpop.f32.mrf.mxu0
        %v290 = vadd.f32 0.0, %v289
        %291 = vdwg.mxu0
        %292 = vmatpush.msra.mxu0 0.0
        %293 = vmatpush.msra.mxu0 0.0
        %294 = vmatpush.msra.mxu0 0.0
        %295 = vmatpush.msra.mxu0 0.0
        %296 = vmatpush.msra.mxu0 0.0
        %297 = vmatpush.msra.mxu0 0.0
        %298 = vmatpush.msra.mxu0 0.0
        %299 = vmatpush.msra.mxu0 0.0
        %300 = vmatpush.msra.mxu0 0.0
        %301 = vmatpush.msra.mxu0 0.0
        %302 = vmatpush.msra.mxu0 0.0
        %303 = vmatpush.msra.mxu0 0.0
        %304 = vmatpush.msra.mxu0 %v266
        %305 = vmatpush.msra.mxu0 %v263
        %306 = vmatpush.msra.mxu0 %v260
        %307 = vmatpush.msra.mxu0 %v257
        %308 = vmatmul.f32.gmra.mxu0 %v270
        %v309 = vpop.f32.mrf.mxu0
        %v310 = vadd.f32 0.0, %v309
        %311 = vdwg.mxu0
        %312 = vmatpush.msra.mxu0 0.0
        %313 = vmatpush.msra.mxu0 0.0
        %314 = vmatpush.msra.mxu0 0.0
        %315 = vmatpush.msra.mxu0 0.0
        %316 = vmatpush.msra.mxu0 0.0
        %317 = vmatpush.msra.mxu0 0.0
        %318 = vmatpush.msra.mxu0 0.0
        %319 = vmatpush.msra.mxu0 0.0
        %320 = vmatpush.msra.mxu0 0.0
        %321 = vmatpush.msra.mxu0 0.0
        %322 = vmatpush.msra.mxu0 0.0
        %323 = vmatpush.msra.mxu0 0.0
        %324 = vmatpush.msra.mxu0 %v267
        %325 = vmatpush.msra.mxu0 %v264
        %326 = vmatpush.msra.mxu0 %v261
        %327 = vmatpush.msra.mxu0 %v258
        %328 = vmatmul.f32.gmra.mxu0 %v270
        %v329 = vpop.f32.mrf.mxu0
        %v330 = vadd.f32 0.0, %v329
        %331 = vdwg.mxu0
        %v332 = vmul.f32 %v290, 0.17677669
        %vm333 = vcmp.gt.f32.partialorder %v255, 0.5
        %vm334 = vcmask 64512
        %v335 = vsel %vm334, %v255, 0.0
        %336 = vadd.xlane.f32.xlu0 %v335
        %v337 = vpop.xlane.xlu0 %336
        %vm338 = vcmp.ge.f32.partialorder %v337, 8.0
        %v340 = vsel %vm268, %v332, 0
        %v343 = vsel %vm268, %v310, 0
        %345 = vmatpush.xpose.msra.mxu0 0.0
        %346 = vmatpush.xpose.msra.mxu0 0.0
        %347 = vmatpush.xpose.msra.mxu0 0.0
        %348 = vmatpush.xpose.msra.mxu0 0.0
        %349 = vmatpush.xpose.msra.mxu0 0.0
        %350 = vmatpush.xpose.msra.mxu0 0.0
        %351 = vmatpush.xpose.msra.mxu0 0.0
        %352 = vmatpush.xpose.msra.mxu0 0.0
        %353 = vmatpush.xpose.msra.mxu0 0.0
        %354 = vmatpush.xpose.msra.mxu0 0.0
        %355 = vmatpush.xpose.msra.mxu0 0.0
        %356 = vmatpush.xpose.msra.mxu0 0.0
        %357 = vmatpush.xpose.msra.mxu0 0.0
        %358 = vmatpush.xpose.msra.mxu0 0.0
        %359 = vmatpush.xpose.msra.mxu0 0.0
        %360 = vmatpush.xpose.msra.mxu0 %v343
        %361 = vmatmul.f32.gmra.mxu0 %v340
        %v362 = vpop.f32.mrf.mxu0
        %v363 = vadd.f32 0.0, %v362
        %364 = vdwg.mxu0
        %v365 = vsel %vm333, -1e+30, %v363
        %v366 = vsel %vm338, 1, 0
        %vm367 = vcmp.eq.s32.totalorder %v366, 1
        %v368 = vsel %vm367, 0.0, %v365
        %370 = vset.pattern.permute.xlu0 0
        %371 = vperm.xlu0 %370, %v368
        %v372 = vpop.permute.xlu0 %371
        %vm374 = vcmp.ge.f32.partialorder %v368, %v372
        %v375 = vsel %vm374, 1, 0
        %v376 = vcvt.s32.f32 %v375
        %v377 = vsel %vm334, %v376, 0.0
        %378 = vadd.xlane.f32.xlu0 %v377
        %v379 = vpop.xlane.xlu0 %378
        %v380 = vmul.f32 %v376, %v368
        %v381 = vsel %vm334, %v380, 0.0
        %382 = vadd.xlane.f32.xlu0 %v381
        %v383 = vpop.xlane.xlu0 %382
        %v384 = vmul.f32 %v379, %v368
        %v385 = vadd.f32 %v384, 1.0
        %vm386 = vcmp.gt.f32.partialorder %v385, %v383
        %v387 = vsel %vm386, 1, 0
        %v388 = vcvt.s32.f32 %v387
        %v389 = vmul.f32 %v379, %v388
        %v390 = vmax.f32 %v389, 0.0
        %391 = vset.pattern.permute.xlu0 1
        %392 = vperm.xlu0 %391, %v368
        %v393 = vpop.permute.xlu0 %392
        %vm395 = vcmp.ge.f32.partialorder %v368, %v393
        %v396 = vsel %vm395, 1, 0
        %v397 = vcvt.s32.f32 %v396
        %v398 = vsel %vm334, %v397, 0.0
        %399 = vadd.xlane.f32.xlu0 %v398
        %v400 = vpop.xlane.xlu0 %399
        %v401 = vmul.f32 %v397, %v368
        %v402 = vsel %vm334, %v401, 0.0
        %403 = vadd.xlane.f32.xlu0 %v402
        %v404 = vpop.xlane.xlu0 %403
        %v405 = vmul.f32 %v400, %v368
        %v406 = vadd.f32 %v405, 1.0
        %vm407 = vcmp.gt.f32.partialorder %v406, %v404
        %v408 = vsel %vm407, 1, 0
        %v409 = vcvt.s32.f32 %v408
        %v410 = vmul.f32 %v400, %v409
        %412 = vrot.lane.b32.xlu0 %v410, 127
        %v413 = vpop.permute.xlu0 %412
        %v415 = vmax.f32 %v390, %v413
        %416 = vset.pattern.permute.xlu0 2
        %417 = vperm.xlu0 %416, %v368
        %v418 = vpop.permute.xlu0 %417
        %vm420 = vcmp.ge.f32.partialorder %v368, %v418
        %v421 = vsel %vm420, 1, 0
        %v422 = vcvt.s32.f32 %v421
        %v423 = vsel %vm334, %v422, 0.0
        %424 = vadd.xlane.f32.xlu0 %v423
        %v425 = vpop.xlane.xlu0 %424
        %v426 = vmul.f32 %v422, %v368
        %v427 = vsel %vm334, %v426, 0.0
        %428 = vadd.xlane.f32.xlu0 %v427
        %v429 = vpop.xlane.xlu0 %428
        %v430 = vmul.f32 %v425, %v368
        %v431 = vadd.f32 %v430, 1.0
        %vm432 = vcmp.gt.f32.partialorder %v431, %v429
        %v433 = vsel %vm432, 1, 0
        %v434 = vcvt.s32.f32 %v433
        %v435 = vmul.f32 %v425, %v434
        %437 = vrot.lane.b32.xlu0 %v435, 126
        %v438 = vpop.permute.xlu0 %437
        %v440 = vmax.f32 %v415, %v438
        %441 = vset.pattern.permute.xlu0 3
        %442 = vperm.xlu0 %441, %v368
        %v443 = vpop.permute.xlu0 %442
        %vm445 = vcmp.ge.f32.partialorder %v368, %v443
        %v446 = vsel %vm445, 1, 0
        %v447 = vcvt.s32.f32 %v446
        %v448 = vsel %vm334, %v447, 0.0
        %449 = vadd.xlane.f32.xlu0 %v448
        %v450 = vpop.xlane.xlu0 %449
        %v451 = vmul.f32 %v447, %v368
        %v452 = vsel %vm334, %v451, 0.0
        %453 = vadd.xlane.f32.xlu0 %v452
        %v454 = vpop.xlane.xlu0 %453
        %v455 = vmul.f32 %v450, %v368
        %v456 = vadd.f32 %v455, 1.0
        %vm457 = vcmp.gt.f32.partialorder %v456, %v454
        %v458 = vsel %vm457, 1, 0
        %v459 = vcvt.s32.f32 %v458
        %v460 = vmul.f32 %v450, %v459
        %462 = vrot.lane.b32.xlu0 %v460, 125
        %v463 = vpop.permute.xlu0 %462
        %v465 = vmax.f32 %v440, %v463
        %466 = vset.pattern.permute.xlu0 4
        %467 = vperm.xlu0 %466, %v368
        %v468 = vpop.permute.xlu0 %467
        %vm470 = vcmp.ge.f32.partialorder %v368, %v468
        %v471 = vsel %vm470, 1, 0
        %v472 = vcvt.s32.f32 %v471
        %v473 = vsel %vm334, %v472, 0.0
        %474 = vadd.xlane.f32.xlu0 %v473
        %v475 = vpop.xlane.xlu0 %474
        %v476 = vmul.f32 %v472, %v368
        %v477 = vsel %vm334, %v476, 0.0
        %478 = vadd.xlane.f32.xlu0 %v477
        %v479 = vpop.xlane.xlu0 %478
        %v480 = vmul.f32 %v475, %v368
        %v481 = vadd.f32 %v480, 1.0
        %vm482 = vcmp.gt.f32.partialorder %v481, %v479
        %v483 = vsel %vm482, 1, 0
        %v484 = vcvt.s32.f32 %v483
        %v485 = vmul.f32 %v475, %v484
        %487 = vrot.lane.b32.xlu0 %v485, 124
        %v488 = vpop.permute.xlu0 %487
        %v490 = vmax.f32 %v465, %v488
        %491 = vset.pattern.permute.xlu0 5
        %492 = vperm.xlu0 %491, %v368
        %v493 = vpop.permute.xlu0 %492
        %vm495 = vcmp.ge.f32.partialorder %v368, %v493
        %v496 = vsel %vm495, 1, 0
        %v497 = vcvt.s32.f32 %v496
        %v498 = vsel %vm334, %v497, 0.0
        %499 = vadd.xlane.f32.xlu0 %v498
        %v500 = vpop.xlane.xlu0 %499
        %v501 = vmul.f32 %v497, %v368
        %v502 = vsel %vm334, %v501, 0.0
        %503 = vadd.xlane.f32.xlu0 %v502
        %v504 = vpop.xlane.xlu0 %503
        %v505 = vmul.f32 %v500, %v368
        %v506 = vadd.f32 %v505, 1.0
        %vm507 = vcmp.gt.f32.partialorder %v506, %v504
        %v508 = vsel %vm507, 1, 0
        %v509 = vcvt.s32.f32 %v508
        %v510 = vmul.f32 %v500, %v509
        %512 = vrot.lane.b32.xlu0 %v510, 123
        %v513 = vpop.permute.xlu0 %512
        %v515 = vmax.f32 %v490, %v513
        %516 = vset.pattern.permute.xlu0 6
        %517 = vperm.xlu0 %516, %v368
        %v518 = vpop.permute.xlu0 %517
        %vm520 = vcmp.ge.f32.partialorder %v368, %v518
        %v521 = vsel %vm520, 1, 0
        %v522 = vcvt.s32.f32 %v521
        %v523 = vsel %vm334, %v522, 0.0
        %524 = vadd.xlane.f32.xlu0 %v523
        %v525 = vpop.xlane.xlu0 %524
        %v526 = vmul.f32 %v522, %v368
        %v527 = vsel %vm334, %v526, 0.0
        %528 = vadd.xlane.f32.xlu0 %v527
        %v529 = vpop.xlane.xlu0 %528
        %v530 = vmul.f32 %v525, %v368
        %v531 = vadd.f32 %v530, 1.0
        %vm532 = vcmp.gt.f32.partialorder %v531, %v529
        %v533 = vsel %vm532, 1, 0
        %v534 = vcvt.s32.f32 %v533
        %v535 = vmul.f32 %v525, %v534
        %537 = vrot.lane.b32.xlu0 %v535, 122
        %v538 = vpop.permute.xlu0 %537
        %v540 = vmax.f32 %v515, %v538
        %541 = vset.pattern.permute.xlu0 7
        %542 = vperm.xlu0 %541, %v368
        %v543 = vpop.permute.xlu0 %542
        %vm545 = vcmp.ge.f32.partialorder %v368, %v543
        %v546 = vsel %vm545, 1, 0
        %v547 = vcvt.s32.f32 %v546
        %v548 = vsel %vm334, %v547, 0.0
        %549 = vadd.xlane.f32.xlu0 %v548
        %v550 = vpop.xlane.xlu0 %549
        %v551 = vmul.f32 %v547, %v368
        %v552 = vsel %vm334, %v551, 0.0
        %553 = vadd.xlane.f32.xlu0 %v552
        %v554 = vpop.xlane.xlu0 %553
        %v555 = vmul.f32 %v550, %v368
        %v556 = vadd.f32 %v555, 1.0
        %vm557 = vcmp.gt.f32.partialorder %v556, %v554
        %v558 = vsel %vm557, 1, 0
        %v559 = vcvt.s32.f32 %v558
        %v560 = vmul.f32 %v550, %v559
        %562 = vrot.lane.b32.xlu0 %v560, 121
        %v563 = vpop.permute.xlu0 %562
        %v565 = vmax.f32 %v540, %v563
        %vm566 = vcmp.le.f32.partialorder %v379, %v565
        %v567 = vsel %vm566, 1, 0
        %v568 = vcvt.s32.f32 %v567
        %v569 = vmul.f32 %v368, %v568
        %v570 = vadd.f32 %v569, 0.0
        %vm571 = vcmp.le.f32.partialorder %v400, %v565
        %v572 = vsel %vm571, 1, 0
        %v573 = vcvt.s32.f32 %v572
        %575 = vrot.lane.b32.xlu0 %v573, 1
        %v576 = vpop.permute.xlu0 %575
        %v578 = vmul.f32 %v368, %v576
        %580 = vrot.lane.b32.xlu0 %v578, 127
        %v581 = vpop.permute.xlu0 %580
        %v583 = vadd.f32 %v570, %v581
        %vm584 = vcmp.le.f32.partialorder %v425, %v565
        %v585 = vsel %vm584, 1, 0
        %v586 = vcvt.s32.f32 %v585
        %588 = vrot.lane.b32.xlu0 %v586, 2
        %v589 = vpop.permute.xlu0 %588
        %v591 = vmul.f32 %v368, %v589
        %593 = vrot.lane.b32.xlu0 %v591, 126
        %v594 = vpop.permute.xlu0 %593
        %v596 = vadd.f32 %v583, %v594
        %vm597 = vcmp.le.f32.partialorder %v450, %v565
        %v598 = vsel %vm597, 1, 0
        %v599 = vcvt.s32.f32 %v598
        %601 = vrot.lane.b32.xlu0 %v599, 3
        %v602 = vpop.permute.xlu0 %601
        %v604 = vmul.f32 %v368, %v602
        %606 = vrot.lane.b32.xlu0 %v604, 125
        %v607 = vpop.permute.xlu0 %606
        %v609 = vadd.f32 %v596, %v607
        %vm610 = vcmp.le.f32.partialorder %v475, %v565
        %v611 = vsel %vm610, 1, 0
        %v612 = vcvt.s32.f32 %v611
        %614 = vrot.lane.b32.xlu0 %v612, 4
        %v615 = vpop.permute.xlu0 %614
        %v617 = vmul.f32 %v368, %v615
        %619 = vrot.lane.b32.xlu0 %v617, 124
        %v620 = vpop.permute.xlu0 %619
        %v622 = vadd.f32 %v609, %v620
        %vm623 = vcmp.le.f32.partialorder %v500, %v565
        %v624 = vsel %vm623, 1, 0
        %v625 = vcvt.s32.f32 %v624
        %627 = vrot.lane.b32.xlu0 %v625, 5
        %v628 = vpop.permute.xlu0 %627
        %v630 = vmul.f32 %v368, %v628
        %632 = vrot.lane.b32.xlu0 %v630, 123
        %v633 = vpop.permute.xlu0 %632
        %v635 = vadd.f32 %v622, %v633
        %vm636 = vcmp.le.f32.partialorder %v525, %v565
        %v637 = vsel %vm636, 1, 0
        %v638 = vcvt.s32.f32 %v637
        %640 = vrot.lane.b32.xlu0 %v638, 6
        %v641 = vpop.permute.xlu0 %640
        %v643 = vmul.f32 %v368, %v641
        %645 = vrot.lane.b32.xlu0 %v643, 122
        %v646 = vpop.permute.xlu0 %645
        %v648 = vadd.f32 %v635, %v646
        %vm649 = vcmp.le.f32.partialorder %v550, %v565
        %v650 = vsel %vm649, 1, 0
        %v651 = vcvt.s32.f32 %v650
        %653 = vrot.lane.b32.xlu0 %v651, 7
        %v654 = vpop.permute.xlu0 %653
        %v656 = vmul.f32 %v368, %v654
        %658 = vrot.lane.b32.xlu0 %v656, 121
        %v659 = vpop.permute.xlu0 %658
        %v661 = vadd.f32 %v648, %v659
        %v662 = vsub.f32 %v661, 1.0
        %v663 = vrcp.pop %v565
        %v664 = vmul.f32 %v565, %v663
        %v665 = vsub.f32 1.0, %v664
        %v666 = vmul.f32 %v663, %v665
        %v667 = vadd.f32 %v663, %v666
        %vm668 = vweird.f32 %v565
        %vm669 = vweird.f32 %v663
        %vm670 = vmor %vm668, %vm669
        %v671 = vsel %vm670, %v663, %v667
        %v672 = vand.u32 2147483647, %v565
        %vm673 = vcmp.eq.f32.partialorder %v672, 8.507059e+37
        %v674 = vand.u32 %v565, 2147483648
        %v675 = vor.u32 1.1754944e-38, %v674
        %v676 = vsel %vm673, %v675, %v671
        %v677 = vmul.f32 %v662, %v676
        %679 = vset.pattern.permute.xlu0 0
        %680 = vperm.xlu0 %679, %v677
        %v681 = vpop.permute.xlu0 %680
        %v683 = vsub.f32 %v368, %v681
        %v684 = vmax.f32 %v683, 0.0
        %v685 = vsel %vm367, 0.0, %v684
        %v687 = vsel %vm334, %v685, 0
        %689 = vmatpush.msra.mxu0 0.0
        %690 = vmatpush.msra.mxu0 0.0
        %691 = vmatpush.msra.mxu0 0.0
        %692 = vmatpush.msra.mxu0 0.0
        %693 = vmatpush.msra.mxu0 0.0
        %694 = vmatpush.msra.mxu0 0.0
        %695 = vmatpush.msra.mxu0 0.0
        %696 = vmatpush.msra.mxu0 0.0
        %697 = vmatpush.msra.mxu0 0.0
        %698 = vmatpush.msra.mxu0 0.0
        %699 = vmatpush.msra.mxu0 0.0
        %700 = vmatpush.msra.mxu0 0.0
        %701 = vmatpush.msra.mxu0 0.0
        %702 = vmatpush.msra.mxu0 0.0
        %703 = vmatpush.msra.mxu0 0.0
        %704 = vmatpush.msra.mxu0 %v330
        %705 = vmatmul.f32.gmra.mxu0 %v687
        %v706 = vpop.f32.mrf.mxu0
        %v707 = vadd.f32 0.0, %v706
        %708 = vdwg.mxu0
        %709 = vrot.lane.b32.xlu0 %v332, 96
        %v710 = vpop.permute.xlu0 %709
        %711 = vrot.lane.b32.xlu0 %v310, 96
        %v712 = vpop.permute.xlu0 %711
        %v713 = vsel %vm268, %v710, 0
        %v715 = vsel %vm268, %v712, 0
        %717 = vmatpush.xpose.msra.mxu0 0.0
        %718 = vmatpush.xpose.msra.mxu0 0.0
        %719 = vmatpush.xpose.msra.mxu0 0.0
        %720 = vmatpush.xpose.msra.mxu0 0.0
        %721 = vmatpush.xpose.msra.mxu0 0.0
        %722 = vmatpush.xpose.msra.mxu0 0.0
        %723 = vmatpush.xpose.msra.mxu0 0.0
        %724 = vmatpush.xpose.msra.mxu0 0.0
        %725 = vmatpush.xpose.msra.mxu0 0.0
        %726 = vmatpush.xpose.msra.mxu0 0.0
        %727 = vmatpush.xpose.msra.mxu0 0.0
        %728 = vmatpush.xpose.msra.mxu0 0.0
        %729 = vmatpush.xpose.msra.mxu0 0.0
        %730 = vmatpush.xpose.msra.mxu0 0.0
        %731 = vmatpush.xpose.msra.mxu0 0.0
        %732 = vmatpush.xpose.msra.mxu0 %v715
        %733 = vmatmul.f32.gmra.mxu0 %v713
        %v734 = vpop.f32.mrf.mxu0
        %v735 = vadd.f32 0.0, %v734
        %736 = vdwg.mxu0
        %v737 = vsel %vm333, -1e+30, %v735
        %v738 = vsel %vm367, 0.0, %v737
        %740 = vset.pattern.permute.xlu0 0
        %741 = vperm.xlu0 %740, %v738
        %v742 = vpop.permute.xlu0 %741
        %vm744 = vcmp.ge.f32.partialorder %v738, %v742
        %v745 = vsel %vm744, 1, 0
        %v746 = vcvt.s32.f32 %v745
        %v747 = vsel %vm334, %v746, 0.0
        %748 = vadd.xlane.f32.xlu0 %v747
        %v749 = vpop.xlane.xlu0 %748
        %v750 = vmul.f32 %v746, %v738
        %v751 = vsel %vm334, %v750, 0.0
        %752 = vadd.xlane.f32.xlu0 %v751
        %v753 = vpop.xlane.xlu0 %752
        %v754 = vmul.f32 %v749, %v738
        %v755 = vadd.f32 %v754, 1.0
        %vm756 = vcmp.gt.f32.partialorder %v755, %v753
        %v757 = vsel %vm756, 1, 0
        %v758 = vcvt.s32.f32 %v757
        %v759 = vmul.f32 %v749, %v758
        %v760 = vmax.f32 %v759, 0.0
        %761 = vset.pattern.permute.xlu0 1
        %762 = vperm.xlu0 %761, %v738
        %v763 = vpop.permute.xlu0 %762
        %vm765 = vcmp.ge.f32.partialorder %v738, %v763
        %v766 = vsel %vm765, 1, 0
        %v767 = vcvt.s32.f32 %v766
        %v768 = vsel %vm334, %v767, 0.0
        %769 = vadd.xlane.f32.xlu0 %v768
        %v770 = vpop.xlane.xlu0 %769
        %v771 = vmul.f32 %v767, %v738
        %v772 = vsel %vm334, %v771, 0.0
        %773 = vadd.xlane.f32.xlu0 %v772
        %v774 = vpop.xlane.xlu0 %773
        %v775 = vmul.f32 %v770, %v738
        %v776 = vadd.f32 %v775, 1.0
        %vm777 = vcmp.gt.f32.partialorder %v776, %v774
        %v778 = vsel %vm777, 1, 0
        %v779 = vcvt.s32.f32 %v778
        %v780 = vmul.f32 %v770, %v779
        %782 = vrot.lane.b32.xlu0 %v780, 127
        %v783 = vpop.permute.xlu0 %782
        %v785 = vmax.f32 %v760, %v783
        %786 = vset.pattern.permute.xlu0 2
        %787 = vperm.xlu0 %786, %v738
        %v788 = vpop.permute.xlu0 %787
        %vm790 = vcmp.ge.f32.partialorder %v738, %v788
        %v791 = vsel %vm790, 1, 0
        %v792 = vcvt.s32.f32 %v791
        %v793 = vsel %vm334, %v792, 0.0
        %794 = vadd.xlane.f32.xlu0 %v793
        %v795 = vpop.xlane.xlu0 %794
        %v796 = vmul.f32 %v792, %v738
        %v797 = vsel %vm334, %v796, 0.0
        %798 = vadd.xlane.f32.xlu0 %v797
        %v799 = vpop.xlane.xlu0 %798
        %v800 = vmul.f32 %v795, %v738
        %v801 = vadd.f32 %v800, 1.0
        %vm802 = vcmp.gt.f32.partialorder %v801, %v799
        %v803 = vsel %vm802, 1, 0
        %v804 = vcvt.s32.f32 %v803
        %v805 = vmul.f32 %v795, %v804
        %807 = vrot.lane.b32.xlu0 %v805, 126
        %v808 = vpop.permute.xlu0 %807
        %v810 = vmax.f32 %v785, %v808
        %811 = vset.pattern.permute.xlu0 3
        %812 = vperm.xlu0 %811, %v738
        %v813 = vpop.permute.xlu0 %812
        %vm815 = vcmp.ge.f32.partialorder %v738, %v813
        %v816 = vsel %vm815, 1, 0
        %v817 = vcvt.s32.f32 %v816
        %v818 = vsel %vm334, %v817, 0.0
        %819 = vadd.xlane.f32.xlu0 %v818
        %v820 = vpop.xlane.xlu0 %819
        %v821 = vmul.f32 %v817, %v738
        %v822 = vsel %vm334, %v821, 0.0
        %823 = vadd.xlane.f32.xlu0 %v822
        %v824 = vpop.xlane.xlu0 %823
        %v825 = vmul.f32 %v820, %v738
        %v826 = vadd.f32 %v825, 1.0
        %vm827 = vcmp.gt.f32.partialorder %v826, %v824
        %v828 = vsel %vm827, 1, 0
        %v829 = vcvt.s32.f32 %v828
        %v830 = vmul.f32 %v820, %v829
        %832 = vrot.lane.b32.xlu0 %v830, 125
        %v833 = vpop.permute.xlu0 %832
        %v835 = vmax.f32 %v810, %v833
        %836 = vset.pattern.permute.xlu0 4
        %837 = vperm.xlu0 %836, %v738
        %v838 = vpop.permute.xlu0 %837
        %vm840 = vcmp.ge.f32.partialorder %v738, %v838
        %v841 = vsel %vm840, 1, 0
        %v842 = vcvt.s32.f32 %v841
        %v843 = vsel %vm334, %v842, 0.0
        %844 = vadd.xlane.f32.xlu0 %v843
        %v845 = vpop.xlane.xlu0 %844
        %v846 = vmul.f32 %v842, %v738
        %v847 = vsel %vm334, %v846, 0.0
        %848 = vadd.xlane.f32.xlu0 %v847
        %v849 = vpop.xlane.xlu0 %848
        %v850 = vmul.f32 %v845, %v738
        %v851 = vadd.f32 %v850, 1.0
        %vm852 = vcmp.gt.f32.partialorder %v851, %v849
        %v853 = vsel %vm852, 1, 0
        %v854 = vcvt.s32.f32 %v853
        %v855 = vmul.f32 %v845, %v854
        %857 = vrot.lane.b32.xlu0 %v855, 124
        %v858 = vpop.permute.xlu0 %857
        %v860 = vmax.f32 %v835, %v858
        %861 = vset.pattern.permute.xlu0 5
        %862 = vperm.xlu0 %861, %v738
        %v863 = vpop.permute.xlu0 %862
        %vm865 = vcmp.ge.f32.partialorder %v738, %v863
        %v866 = vsel %vm865, 1, 0
        %v867 = vcvt.s32.f32 %v866
        %v868 = vsel %vm334, %v867, 0.0
        %869 = vadd.xlane.f32.xlu0 %v868
        %v870 = vpop.xlane.xlu0 %869
        %v871 = vmul.f32 %v867, %v738
        %v872 = vsel %vm334, %v871, 0.0
        %873 = vadd.xlane.f32.xlu0 %v872
        %v874 = vpop.xlane.xlu0 %873
        %v875 = vmul.f32 %v870, %v738
        %v876 = vadd.f32 %v875, 1.0
        %vm877 = vcmp.gt.f32.partialorder %v876, %v874
        %v878 = vsel %vm877, 1, 0
        %v879 = vcvt.s32.f32 %v878
        %v880 = vmul.f32 %v870, %v879
        %882 = vrot.lane.b32.xlu0 %v880, 123
        %v883 = vpop.permute.xlu0 %882
        %v885 = vmax.f32 %v860, %v883
        %886 = vset.pattern.permute.xlu0 6
        %887 = vperm.xlu0 %886, %v738
        %v888 = vpop.permute.xlu0 %887
        %vm890 = vcmp.ge.f32.partialorder %v738, %v888
        %v891 = vsel %vm890, 1, 0
        %v892 = vcvt.s32.f32 %v891
        %v893 = vsel %vm334, %v892, 0.0
        %894 = vadd.xlane.f32.xlu0 %v893
        %v895 = vpop.xlane.xlu0 %894
        %v896 = vmul.f32 %v892, %v738
        %v897 = vsel %vm334, %v896, 0.0
        %898 = vadd.xlane.f32.xlu0 %v897
        %v899 = vpop.xlane.xlu0 %898
        %v900 = vmul.f32 %v895, %v738
        %v901 = vadd.f32 %v900, 1.0
        %vm902 = vcmp.gt.f32.partialorder %v901, %v899
        %v903 = vsel %vm902, 1, 0
        %v904 = vcvt.s32.f32 %v903
        %v905 = vmul.f32 %v895, %v904
        %907 = vrot.lane.b32.xlu0 %v905, 122
        %v908 = vpop.permute.xlu0 %907
        %v910 = vmax.f32 %v885, %v908
        %911 = vset.pattern.permute.xlu0 7
        %912 = vperm.xlu0 %911, %v738
        %v913 = vpop.permute.xlu0 %912
        %vm915 = vcmp.ge.f32.partialorder %v738, %v913
        %v916 = vsel %vm915, 1, 0
        %v917 = vcvt.s32.f32 %v916
        %v918 = vsel %vm334, %v917, 0.0
        %919 = vadd.xlane.f32.xlu0 %v918
        %v920 = vpop.xlane.xlu0 %919
        %v921 = vmul.f32 %v917, %v738
        %v922 = vsel %vm334, %v921, 0.0
        %923 = vadd.xlane.f32.xlu0 %v922
        %v924 = vpop.xlane.xlu0 %923
        %v925 = vmul.f32 %v920, %v738
        %v926 = vadd.f32 %v925, 1.0
        %vm927 = vcmp.gt.f32.partialorder %v926, %v924
        %v928 = vsel %vm927, 1, 0
        %v929 = vcvt.s32.f32 %v928
        %v930 = vmul.f32 %v920, %v929
        %932 = vrot.lane.b32.xlu0 %v930, 121
        %v933 = vpop.permute.xlu0 %932
        %v935 = vmax.f32 %v910, %v933
        %vm936 = vcmp.le.f32.partialorder %v749, %v935
        %v937 = vsel %vm936, 1, 0
        %v938 = vcvt.s32.f32 %v937
        %v939 = vmul.f32 %v738, %v938
        %v940 = vadd.f32 %v939, 0.0
        %vm941 = vcmp.le.f32.partialorder %v770, %v935
        %v942 = vsel %vm941, 1, 0
        %v943 = vcvt.s32.f32 %v942
        %945 = vrot.lane.b32.xlu0 %v943, 1
        %v946 = vpop.permute.xlu0 %945
        %v948 = vmul.f32 %v738, %v946
        %950 = vrot.lane.b32.xlu0 %v948, 127
        %v951 = vpop.permute.xlu0 %950
        %v953 = vadd.f32 %v940, %v951
        %vm954 = vcmp.le.f32.partialorder %v795, %v935
        %v955 = vsel %vm954, 1, 0
        %v956 = vcvt.s32.f32 %v955
        %958 = vrot.lane.b32.xlu0 %v956, 2
        %v959 = vpop.permute.xlu0 %958
        %v961 = vmul.f32 %v738, %v959
        %963 = vrot.lane.b32.xlu0 %v961, 126
        %v964 = vpop.permute.xlu0 %963
        %v966 = vadd.f32 %v953, %v964
        %vm967 = vcmp.le.f32.partialorder %v820, %v935
        %v968 = vsel %vm967, 1, 0
        %v969 = vcvt.s32.f32 %v968
        %971 = vrot.lane.b32.xlu0 %v969, 3
        %v972 = vpop.permute.xlu0 %971
        %v974 = vmul.f32 %v738, %v972
        %976 = vrot.lane.b32.xlu0 %v974, 125
        %v977 = vpop.permute.xlu0 %976
        %v979 = vadd.f32 %v966, %v977
        %vm980 = vcmp.le.f32.partialorder %v845, %v935
        %v981 = vsel %vm980, 1, 0
        %v982 = vcvt.s32.f32 %v981
        %984 = vrot.lane.b32.xlu0 %v982, 4
        %v985 = vpop.permute.xlu0 %984
        %v987 = vmul.f32 %v738, %v985
        %989 = vrot.lane.b32.xlu0 %v987, 124
        %v990 = vpop.permute.xlu0 %989
        %v992 = vadd.f32 %v979, %v990
        %vm993 = vcmp.le.f32.partialorder %v870, %v935
        %v994 = vsel %vm993, 1, 0
        %v995 = vcvt.s32.f32 %v994
        %997 = vrot.lane.b32.xlu0 %v995, 5
        %v998 = vpop.permute.xlu0 %997
        %v1000 = vmul.f32 %v738, %v998
        %1002 = vrot.lane.b32.xlu0 %v1000, 123
        %v1003 = vpop.permute.xlu0 %1002
        %v1005 = vadd.f32 %v992, %v1003
        %vm1006 = vcmp.le.f32.partialorder %v895, %v935
        %v1007 = vsel %vm1006, 1, 0
        %v1008 = vcvt.s32.f32 %v1007
        %1010 = vrot.lane.b32.xlu0 %v1008, 6
        %v1011 = vpop.permute.xlu0 %1010
        %v1013 = vmul.f32 %v738, %v1011
        %1015 = vrot.lane.b32.xlu0 %v1013, 122
        %v1016 = vpop.permute.xlu0 %1015
        %v1018 = vadd.f32 %v1005, %v1016
        %vm1019 = vcmp.le.f32.partialorder %v920, %v935
        %v1020 = vsel %vm1019, 1, 0
        %v1021 = vcvt.s32.f32 %v1020
        %1023 = vrot.lane.b32.xlu0 %v1021, 7
        %v1024 = vpop.permute.xlu0 %1023
        %v1026 = vmul.f32 %v738, %v1024
        %1028 = vrot.lane.b32.xlu0 %v1026, 121
        %v1029 = vpop.permute.xlu0 %1028
        %v1031 = vadd.f32 %v1018, %v1029
        %v1032 = vsub.f32 %v1031, 1.0
        %v1033 = vrcp.pop %v935
        %v1034 = vmul.f32 %v935, %v1033
        %v1035 = vsub.f32 1.0, %v1034
        %v1036 = vmul.f32 %v1033, %v1035
        %v1037 = vadd.f32 %v1033, %v1036
        %vm1038 = vweird.f32 %v935
        %vm1039 = vweird.f32 %v1033
        %vm1040 = vmor %vm1038, %vm1039
        %v1041 = vsel %vm1040, %v1033, %v1037
        %v1042 = vand.u32 2147483647, %v935
        %vm1043 = vcmp.eq.f32.partialorder %v1042, 8.507059e+37
        %v1044 = vand.u32 %v935, 2147483648
        %v1045 = vor.u32 1.1754944e-38, %v1044
        %v1046 = vsel %vm1043, %v1045, %v1041
        %v1047 = vmul.f32 %v1032, %v1046
        %1049 = vset.pattern.permute.xlu0 0
        %1050 = vperm.xlu0 %1049, %v1047
        %v1051 = vpop.permute.xlu0 %1050
        %v1053 = vsub.f32 %v738, %v1051
        %v1054 = vmax.f32 %v1053, 0.0
        %v1055 = vsel %vm367, 0.0, %v1054
        %1057 = vrot.lane.b32.xlu0 %v330, 96
        %v1058 = vpop.permute.xlu0 %1057
        %v1061 = vsel %vm334, %v1055, 0
        %1063 = vmatpush.msra.mxu0 0.0
        %1064 = vmatpush.msra.mxu0 0.0
        %1065 = vmatpush.msra.mxu0 0.0
        %1066 = vmatpush.msra.mxu0 0.0
        %1067 = vmatpush.msra.mxu0 0.0
        %1068 = vmatpush.msra.mxu0 0.0
        %1069 = vmatpush.msra.mxu0 0.0
        %1070 = vmatpush.msra.mxu0 0.0
        %1071 = vmatpush.msra.mxu0 0.0
        %1072 = vmatpush.msra.mxu0 0.0
        %1073 = vmatpush.msra.mxu0 0.0
        %1074 = vmatpush.msra.mxu0 0.0
        %1075 = vmatpush.msra.mxu0 0.0
        %1076 = vmatpush.msra.mxu0 0.0
        %1077 = vmatpush.msra.mxu0 0.0
        %1078 = vmatpush.msra.mxu0 %v1058
        %1079 = vmatmul.f32.gmra.mxu0 %v1061
        %v1080 = vpop.f32.mrf.mxu0
        %v1081 = vadd.f32 0.0, %v1080
        %1082 = vdwg.mxu0
        %1083 = vrot.lane.b32.xlu0 %v332, 64
        %v1084 = vpop.permute.xlu0 %1083
        %1085 = vrot.lane.b32.xlu0 %v310, 64
        %v1086 = vpop.permute.xlu0 %1085
        %v1087 = vsel %vm268, %v1084, 0
        %v1089 = vsel %vm268, %v1086, 0
        %1091 = vmatpush.xpose.msra.mxu0 0.0
        %1092 = vmatpush.xpose.msra.mxu0 0.0
        %1093 = vmatpush.xpose.msra.mxu0 0.0
        %1094 = vmatpush.xpose.msra.mxu0 0.0
        %1095 = vmatpush.xpose.msra.mxu0 0.0
        %1096 = vmatpush.xpose.msra.mxu0 0.0
        %1097 = vmatpush.xpose.msra.mxu0 0.0
        %1098 = vmatpush.xpose.msra.mxu0 0.0
        %1099 = vmatpush.xpose.msra.mxu0 0.0
        %1100 = vmatpush.xpose.msra.mxu0 0.0
        %1101 = vmatpush.xpose.msra.mxu0 0.0
        %1102 = vmatpush.xpose.msra.mxu0 0.0
        %1103 = vmatpush.xpose.msra.mxu0 0.0
        %1104 = vmatpush.xpose.msra.mxu0 0.0
        %1105 = vmatpush.xpose.msra.mxu0 0.0
        %1106 = vmatpush.xpose.msra.mxu0 %v1089
        %1107 = vmatmul.f32.gmra.mxu0 %v1087
        %v1108 = vpop.f32.mrf.mxu0
        %v1109 = vadd.f32 0.0, %v1108
        %1110 = vdwg.mxu0
        %v1111 = vsel %vm333, -1e+30, %v1109
        %v1112 = vsel %vm367, 0.0, %v1111
        %1114 = vset.pattern.permute.xlu0 0
        %1115 = vperm.xlu0 %1114, %v1112
        %v1116 = vpop.permute.xlu0 %1115
        %vm1118 = vcmp.ge.f32.partialorder %v1112, %v1116
        %v1119 = vsel %vm1118, 1, 0
        %v1120 = vcvt.s32.f32 %v1119
        %v1121 = vsel %vm334, %v1120, 0.0
        %1122 = vadd.xlane.f32.xlu0 %v1121
        %v1123 = vpop.xlane.xlu0 %1122
        %v1124 = vmul.f32 %v1120, %v1112
        %v1125 = vsel %vm334, %v1124, 0.0
        %1126 = vadd.xlane.f32.xlu0 %v1125
        %v1127 = vpop.xlane.xlu0 %1126
        %v1128 = vmul.f32 %v1123, %v1112
        %v1129 = vadd.f32 %v1128, 1.0
        %vm1130 = vcmp.gt.f32.partialorder %v1129, %v1127
        %v1131 = vsel %vm1130, 1, 0
        %v1132 = vcvt.s32.f32 %v1131
        %v1133 = vmul.f32 %v1123, %v1132
        %v1134 = vmax.f32 %v1133, 0.0
        %1135 = vset.pattern.permute.xlu0 1
        %1136 = vperm.xlu0 %1135, %v1112
        %v1137 = vpop.permute.xlu0 %1136
        %vm1139 = vcmp.ge.f32.partialorder %v1112, %v1137
        %v1140 = vsel %vm1139, 1, 0
        %v1141 = vcvt.s32.f32 %v1140
        %v1142 = vsel %vm334, %v1141, 0.0
        %1143 = vadd.xlane.f32.xlu0 %v1142
        %v1144 = vpop.xlane.xlu0 %1143
        %v1145 = vmul.f32 %v1141, %v1112
        %v1146 = vsel %vm334, %v1145, 0.0
        %1147 = vadd.xlane.f32.xlu0 %v1146
        %v1148 = vpop.xlane.xlu0 %1147
        %v1149 = vmul.f32 %v1144, %v1112
        %v1150 = vadd.f32 %v1149, 1.0
        %vm1151 = vcmp.gt.f32.partialorder %v1150, %v1148
        %v1152 = vsel %vm1151, 1, 0
        %v1153 = vcvt.s32.f32 %v1152
        %v1154 = vmul.f32 %v1144, %v1153
        %1156 = vrot.lane.b32.xlu0 %v1154, 127
        %v1157 = vpop.permute.xlu0 %1156
        %v1159 = vmax.f32 %v1134, %v1157
        %1160 = vset.pattern.permute.xlu0 2
        %1161 = vperm.xlu0 %1160, %v1112
        %v1162 = vpop.permute.xlu0 %1161
        %vm1164 = vcmp.ge.f32.partialorder %v1112, %v1162
        %v1165 = vsel %vm1164, 1, 0
        %v1166 = vcvt.s32.f32 %v1165
        %v1167 = vsel %vm334, %v1166, 0.0
        %1168 = vadd.xlane.f32.xlu0 %v1167
        %v1169 = vpop.xlane.xlu0 %1168
        %v1170 = vmul.f32 %v1166, %v1112
        %v1171 = vsel %vm334, %v1170, 0.0
        %1172 = vadd.xlane.f32.xlu0 %v1171
        %v1173 = vpop.xlane.xlu0 %1172
        %v1174 = vmul.f32 %v1169, %v1112
        %v1175 = vadd.f32 %v1174, 1.0
        %vm1176 = vcmp.gt.f32.partialorder %v1175, %v1173
        %v1177 = vsel %vm1176, 1, 0
        %v1178 = vcvt.s32.f32 %v1177
        %v1179 = vmul.f32 %v1169, %v1178
        %1181 = vrot.lane.b32.xlu0 %v1179, 126
        %v1182 = vpop.permute.xlu0 %1181
        %v1184 = vmax.f32 %v1159, %v1182
        %1185 = vset.pattern.permute.xlu0 3
        %1186 = vperm.xlu0 %1185, %v1112
        %v1187 = vpop.permute.xlu0 %1186
        %vm1189 = vcmp.ge.f32.partialorder %v1112, %v1187
        %v1190 = vsel %vm1189, 1, 0
        %v1191 = vcvt.s32.f32 %v1190
        %v1192 = vsel %vm334, %v1191, 0.0
        %1193 = vadd.xlane.f32.xlu0 %v1192
        %v1194 = vpop.xlane.xlu0 %1193
        %v1195 = vmul.f32 %v1191, %v1112
        %v1196 = vsel %vm334, %v1195, 0.0
        %1197 = vadd.xlane.f32.xlu0 %v1196
        %v1198 = vpop.xlane.xlu0 %1197
        %v1199 = vmul.f32 %v1194, %v1112
        %v1200 = vadd.f32 %v1199, 1.0
        %vm1201 = vcmp.gt.f32.partialorder %v1200, %v1198
        %v1202 = vsel %vm1201, 1, 0
        %v1203 = vcvt.s32.f32 %v1202
        %v1204 = vmul.f32 %v1194, %v1203
        %1206 = vrot.lane.b32.xlu0 %v1204, 125
        %v1207 = vpop.permute.xlu0 %1206
        %v1209 = vmax.f32 %v1184, %v1207
        %1210 = vset.pattern.permute.xlu0 4
        %1211 = vperm.xlu0 %1210, %v1112
        %v1212 = vpop.permute.xlu0 %1211
        %vm1214 = vcmp.ge.f32.partialorder %v1112, %v1212
        %v1215 = vsel %vm1214, 1, 0
        %v1216 = vcvt.s32.f32 %v1215
        %v1217 = vsel %vm334, %v1216, 0.0
        %1218 = vadd.xlane.f32.xlu0 %v1217
        %v1219 = vpop.xlane.xlu0 %1218
        %v1220 = vmul.f32 %v1216, %v1112
        %v1221 = vsel %vm334, %v1220, 0.0
        %1222 = vadd.xlane.f32.xlu0 %v1221
        %v1223 = vpop.xlane.xlu0 %1222
        %v1224 = vmul.f32 %v1219, %v1112
        %v1225 = vadd.f32 %v1224, 1.0
        %vm1226 = vcmp.gt.f32.partialorder %v1225, %v1223
        %v1227 = vsel %vm1226, 1, 0
        %v1228 = vcvt.s32.f32 %v1227
        %v1229 = vmul.f32 %v1219, %v1228
        %1231 = vrot.lane.b32.xlu0 %v1229, 124
        %v1232 = vpop.permute.xlu0 %1231
        %v1234 = vmax.f32 %v1209, %v1232
        %1235 = vset.pattern.permute.xlu0 5
        %1236 = vperm.xlu0 %1235, %v1112
        %v1237 = vpop.permute.xlu0 %1236
        %vm1239 = vcmp.ge.f32.partialorder %v1112, %v1237
        %v1240 = vsel %vm1239, 1, 0
        %v1241 = vcvt.s32.f32 %v1240
        %v1242 = vsel %vm334, %v1241, 0.0
        %1243 = vadd.xlane.f32.xlu0 %v1242
        %v1244 = vpop.xlane.xlu0 %1243
        %v1245 = vmul.f32 %v1241, %v1112
        %v1246 = vsel %vm334, %v1245, 0.0
        %1247 = vadd.xlane.f32.xlu0 %v1246
        %v1248 = vpop.xlane.xlu0 %1247
        %v1249 = vmul.f32 %v1244, %v1112
        %v1250 = vadd.f32 %v1249, 1.0
        %vm1251 = vcmp.gt.f32.partialorder %v1250, %v1248
        %v1252 = vsel %vm1251, 1, 0
        %v1253 = vcvt.s32.f32 %v1252
        %v1254 = vmul.f32 %v1244, %v1253
        %1256 = vrot.lane.b32.xlu0 %v1254, 123
        %v1257 = vpop.permute.xlu0 %1256
        %v1259 = vmax.f32 %v1234, %v1257
        %1260 = vset.pattern.permute.xlu0 6
        %1261 = vperm.xlu0 %1260, %v1112
        %v1262 = vpop.permute.xlu0 %1261
        %vm1264 = vcmp.ge.f32.partialorder %v1112, %v1262
        %v1265 = vsel %vm1264, 1, 0
        %v1266 = vcvt.s32.f32 %v1265
        %v1267 = vsel %vm334, %v1266, 0.0
        %1268 = vadd.xlane.f32.xlu0 %v1267
        %v1269 = vpop.xlane.xlu0 %1268
        %v1270 = vmul.f32 %v1266, %v1112
        %v1271 = vsel %vm334, %v1270, 0.0
        %1272 = vadd.xlane.f32.xlu0 %v1271
        %v1273 = vpop.xlane.xlu0 %1272
        %v1274 = vmul.f32 %v1269, %v1112
        %v1275 = vadd.f32 %v1274, 1.0
        %vm1276 = vcmp.gt.f32.partialorder %v1275, %v1273
        %v1277 = vsel %vm1276, 1, 0
        %v1278 = vcvt.s32.f32 %v1277
        %v1279 = vmul.f32 %v1269, %v1278
        %1281 = vrot.lane.b32.xlu0 %v1279, 122
        %v1282 = vpop.permute.xlu0 %1281
        %v1284 = vmax.f32 %v1259, %v1282
        %1285 = vset.pattern.permute.xlu0 7
        %1286 = vperm.xlu0 %1285, %v1112
        %v1287 = vpop.permute.xlu0 %1286
        %vm1289 = vcmp.ge.f32.partialorder %v1112, %v1287
        %v1290 = vsel %vm1289, 1, 0
        %v1291 = vcvt.s32.f32 %v1290
        %v1292 = vsel %vm334, %v1291, 0.0
        %1293 = vadd.xlane.f32.xlu0 %v1292
        %v1294 = vpop.xlane.xlu0 %1293
        %v1295 = vmul.f32 %v1291, %v1112
        %v1296 = vsel %vm334, %v1295, 0.0
        %1297 = vadd.xlane.f32.xlu0 %v1296
        %v1298 = vpop.xlane.xlu0 %1297
        %v1299 = vmul.f32 %v1294, %v1112
        %v1300 = vadd.f32 %v1299, 1.0
        %vm1301 = vcmp.gt.f32.partialorder %v1300, %v1298
        %v1302 = vsel %vm1301, 1, 0
        %v1303 = vcvt.s32.f32 %v1302
        %v1304 = vmul.f32 %v1294, %v1303
        %1306 = vrot.lane.b32.xlu0 %v1304, 121
        %v1307 = vpop.permute.xlu0 %1306
        %v1309 = vmax.f32 %v1284, %v1307
        %vm1310 = vcmp.le.f32.partialorder %v1123, %v1309
        %v1311 = vsel %vm1310, 1, 0
        %v1312 = vcvt.s32.f32 %v1311
        %v1313 = vmul.f32 %v1112, %v1312
        %v1314 = vadd.f32 %v1313, 0.0
        %vm1315 = vcmp.le.f32.partialorder %v1144, %v1309
        %v1316 = vsel %vm1315, 1, 0
        %v1317 = vcvt.s32.f32 %v1316
        %1319 = vrot.lane.b32.xlu0 %v1317, 1
        %v1320 = vpop.permute.xlu0 %1319
        %v1322 = vmul.f32 %v1112, %v1320
        %1324 = vrot.lane.b32.xlu0 %v1322, 127
        %v1325 = vpop.permute.xlu0 %1324
        %v1327 = vadd.f32 %v1314, %v1325
        %vm1328 = vcmp.le.f32.partialorder %v1169, %v1309
        %v1329 = vsel %vm1328, 1, 0
        %v1330 = vcvt.s32.f32 %v1329
        %1332 = vrot.lane.b32.xlu0 %v1330, 2
        %v1333 = vpop.permute.xlu0 %1332
        %v1335 = vmul.f32 %v1112, %v1333
        %1337 = vrot.lane.b32.xlu0 %v1335, 126
        %v1338 = vpop.permute.xlu0 %1337
        %v1340 = vadd.f32 %v1327, %v1338
        %vm1341 = vcmp.le.f32.partialorder %v1194, %v1309
        %v1342 = vsel %vm1341, 1, 0
        %v1343 = vcvt.s32.f32 %v1342
        %1345 = vrot.lane.b32.xlu0 %v1343, 3
        %v1346 = vpop.permute.xlu0 %1345
        %v1348 = vmul.f32 %v1112, %v1346
        %1350 = vrot.lane.b32.xlu0 %v1348, 125
        %v1351 = vpop.permute.xlu0 %1350
        %v1353 = vadd.f32 %v1340, %v1351
        %vm1354 = vcmp.le.f32.partialorder %v1219, %v1309
        %v1355 = vsel %vm1354, 1, 0
        %v1356 = vcvt.s32.f32 %v1355
        %1358 = vrot.lane.b32.xlu0 %v1356, 4
        %v1359 = vpop.permute.xlu0 %1358
        %v1361 = vmul.f32 %v1112, %v1359
        %1363 = vrot.lane.b32.xlu0 %v1361, 124
        %v1364 = vpop.permute.xlu0 %1363
        %v1366 = vadd.f32 %v1353, %v1364
        %vm1367 = vcmp.le.f32.partialorder %v1244, %v1309
        %v1368 = vsel %vm1367, 1, 0
        %v1369 = vcvt.s32.f32 %v1368
        %1371 = vrot.lane.b32.xlu0 %v1369, 5
        %v1372 = vpop.permute.xlu0 %1371
        %v1374 = vmul.f32 %v1112, %v1372
        %1376 = vrot.lane.b32.xlu0 %v1374, 123
        %v1377 = vpop.permute.xlu0 %1376
        %v1379 = vadd.f32 %v1366, %v1377
        %vm1380 = vcmp.le.f32.partialorder %v1269, %v1309
        %v1381 = vsel %vm1380, 1, 0
        %v1382 = vcvt.s32.f32 %v1381
        %1384 = vrot.lane.b32.xlu0 %v1382, 6
        %v1385 = vpop.permute.xlu0 %1384
        %v1387 = vmul.f32 %v1112, %v1385
        %1389 = vrot.lane.b32.xlu0 %v1387, 122
        %v1390 = vpop.permute.xlu0 %1389
        %v1392 = vadd.f32 %v1379, %v1390
        %vm1393 = vcmp.le.f32.partialorder %v1294, %v1309
        %v1394 = vsel %vm1393, 1, 0
        %v1395 = vcvt.s32.f32 %v1394
        %1397 = vrot.lane.b32.xlu0 %v1395, 7
        %v1398 = vpop.permute.xlu0 %1397
        %v1400 = vmul.f32 %v1112, %v1398
        %1402 = vrot.lane.b32.xlu0 %v1400, 121
        %v1403 = vpop.permute.xlu0 %1402
        %v1405 = vadd.f32 %v1392, %v1403
        %v1406 = vsub.f32 %v1405, 1.0
        %v1407 = vrcp.pop %v1309
        %v1408 = vmul.f32 %v1309, %v1407
        %v1409 = vsub.f32 1.0, %v1408
        %v1410 = vmul.f32 %v1407, %v1409
        %v1411 = vadd.f32 %v1407, %v1410
        %vm1412 = vweird.f32 %v1309
        %vm1413 = vweird.f32 %v1407
        %vm1414 = vmor %vm1412, %vm1413
        %v1415 = vsel %vm1414, %v1407, %v1411
        %v1416 = vand.u32 2147483647, %v1309
        %vm1417 = vcmp.eq.f32.partialorder %v1416, 8.507059e+37
        %v1418 = vand.u32 %v1309, 2147483648
        %v1419 = vor.u32 1.1754944e-38, %v1418
        %v1420 = vsel %vm1417, %v1419, %v1415
        %v1421 = vmul.f32 %v1406, %v1420
        %1423 = vset.pattern.permute.xlu0 0
        %1424 = vperm.xlu0 %1423, %v1421
        %v1425 = vpop.permute.xlu0 %1424
        %v1427 = vsub.f32 %v1112, %v1425
        %v1428 = vmax.f32 %v1427, 0.0
        %v1429 = vsel %vm367, 0.0, %v1428
        %1430 = vrot.lane.b32.xlu0 %v330, 64
        %v1431 = vpop.permute.xlu0 %1430
        %v1434 = vsel %vm334, %v1429, 0
        %1436 = vmatpush.msra.mxu0 0.0
        %1437 = vmatpush.msra.mxu0 0.0
        %1438 = vmatpush.msra.mxu0 0.0
        %1439 = vmatpush.msra.mxu0 0.0
        %1440 = vmatpush.msra.mxu0 0.0
        %1441 = vmatpush.msra.mxu0 0.0
        %1442 = vmatpush.msra.mxu0 0.0
        %1443 = vmatpush.msra.mxu0 0.0
        %1444 = vmatpush.msra.mxu0 0.0
        %1445 = vmatpush.msra.mxu0 0.0
        %1446 = vmatpush.msra.mxu0 0.0
        %1447 = vmatpush.msra.mxu0 0.0
        %1448 = vmatpush.msra.mxu0 0.0
        %1449 = vmatpush.msra.mxu0 0.0
        %1450 = vmatpush.msra.mxu0 0.0
        %1451 = vmatpush.msra.mxu0 %v1431
        %1452 = vmatmul.f32.gmra.mxu0 %v1434
        %v1453 = vpop.f32.mrf.mxu0
        %v1454 = vadd.f32 0.0, %v1453
        %1455 = vdwg.mxu0
        %1456 = vrot.lane.b32.xlu0 %v332, 32
        %v1457 = vpop.permute.xlu0 %1456
        %1458 = vrot.lane.b32.xlu0 %v310, 32
        %v1459 = vpop.permute.xlu0 %1458
        %v1460 = vsel %vm268, %v1457, 0
        %v1462 = vsel %vm268, %v1459, 0
        %1464 = vmatpush.xpose.msra.mxu0 0.0
        %1465 = vmatpush.xpose.msra.mxu0 0.0
        %1466 = vmatpush.xpose.msra.mxu0 0.0
        %1467 = vmatpush.xpose.msra.mxu0 0.0
        %1468 = vmatpush.xpose.msra.mxu0 0.0
        %1469 = vmatpush.xpose.msra.mxu0 0.0
        %1470 = vmatpush.xpose.msra.mxu0 0.0
        %1471 = vmatpush.xpose.msra.mxu0 0.0
        %1472 = vmatpush.xpose.msra.mxu0 0.0
        %1473 = vmatpush.xpose.msra.mxu0 0.0
        %1474 = vmatpush.xpose.msra.mxu0 0.0
        %1475 = vmatpush.xpose.msra.mxu0 0.0
        %1476 = vmatpush.xpose.msra.mxu0 0.0
        %1477 = vmatpush.xpose.msra.mxu0 0.0
        %1478 = vmatpush.xpose.msra.mxu0 0.0
        %1479 = vmatpush.xpose.msra.mxu0 %v1462
        %1480 = vmatmul.f32.gmra.mxu0 %v1460
        %v1481 = vpop.f32.mrf.mxu0
        %v1482 = vadd.f32 0.0, %v1481
        %1483 = vdwg.mxu0
        %v1484 = vsel %vm333, -1e+30, %v1482
        %v1485 = vsel %vm367, 0.0, %v1484
        %1487 = vset.pattern.permute.xlu0 0
        %1488 = vperm.xlu0 %1487, %v1485
        %v1489 = vpop.permute.xlu0 %1488
        %vm1491 = vcmp.ge.f32.partialorder %v1485, %v1489
        %v1492 = vsel %vm1491, 1, 0
        %v1493 = vcvt.s32.f32 %v1492
        %v1494 = vsel %vm334, %v1493, 0.0
        %1495 = vadd.xlane.f32.xlu0 %v1494
        %v1496 = vpop.xlane.xlu0 %1495
        %v1497 = vmul.f32 %v1493, %v1485
        %v1498 = vsel %vm334, %v1497, 0.0
        %1499 = vadd.xlane.f32.xlu0 %v1498
        %v1500 = vpop.xlane.xlu0 %1499
        %v1501 = vmul.f32 %v1496, %v1485
        %v1502 = vadd.f32 %v1501, 1.0
        %vm1503 = vcmp.gt.f32.partialorder %v1502, %v1500
        %v1504 = vsel %vm1503, 1, 0
        %v1505 = vcvt.s32.f32 %v1504
        %v1506 = vmul.f32 %v1496, %v1505
        %v1507 = vmax.f32 %v1506, 0.0
        %1508 = vset.pattern.permute.xlu0 1
        %1509 = vperm.xlu0 %1508, %v1485
        %v1510 = vpop.permute.xlu0 %1509
        %vm1512 = vcmp.ge.f32.partialorder %v1485, %v1510
        %v1513 = vsel %vm1512, 1, 0
        %v1514 = vcvt.s32.f32 %v1513
        %v1515 = vsel %vm334, %v1514, 0.0
        %1516 = vadd.xlane.f32.xlu0 %v1515
        %v1517 = vpop.xlane.xlu0 %1516
        %v1518 = vmul.f32 %v1514, %v1485
        %v1519 = vsel %vm334, %v1518, 0.0
        %1520 = vadd.xlane.f32.xlu0 %v1519
        %v1521 = vpop.xlane.xlu0 %1520
        %v1522 = vmul.f32 %v1517, %v1485
        %v1523 = vadd.f32 %v1522, 1.0
        %vm1524 = vcmp.gt.f32.partialorder %v1523, %v1521
        %v1525 = vsel %vm1524, 1, 0
        %v1526 = vcvt.s32.f32 %v1525
        %v1527 = vmul.f32 %v1517, %v1526
        %1529 = vrot.lane.b32.xlu0 %v1527, 127
        %v1530 = vpop.permute.xlu0 %1529
        %v1532 = vmax.f32 %v1507, %v1530
        %1533 = vset.pattern.permute.xlu0 2
        %1534 = vperm.xlu0 %1533, %v1485
        %v1535 = vpop.permute.xlu0 %1534
        %vm1537 = vcmp.ge.f32.partialorder %v1485, %v1535
        %v1538 = vsel %vm1537, 1, 0
        %v1539 = vcvt.s32.f32 %v1538
        %v1540 = vsel %vm334, %v1539, 0.0
        %1541 = vadd.xlane.f32.xlu0 %v1540
        %v1542 = vpop.xlane.xlu0 %1541
        %v1543 = vmul.f32 %v1539, %v1485
        %v1544 = vsel %vm334, %v1543, 0.0
        %1545 = vadd.xlane.f32.xlu0 %v1544
        %v1546 = vpop.xlane.xlu0 %1545
        %v1547 = vmul.f32 %v1542, %v1485
        %v1548 = vadd.f32 %v1547, 1.0
        %vm1549 = vcmp.gt.f32.partialorder %v1548, %v1546
        %v1550 = vsel %vm1549, 1, 0
        %v1551 = vcvt.s32.f32 %v1550
        %v1552 = vmul.f32 %v1542, %v1551
        %1554 = vrot.lane.b32.xlu0 %v1552, 126
        %v1555 = vpop.permute.xlu0 %1554
        %v1557 = vmax.f32 %v1532, %v1555
        %1558 = vset.pattern.permute.xlu0 3
        %1559 = vperm.xlu0 %1558, %v1485
        %v1560 = vpop.permute.xlu0 %1559
        %vm1562 = vcmp.ge.f32.partialorder %v1485, %v1560
        %v1563 = vsel %vm1562, 1, 0
        %v1564 = vcvt.s32.f32 %v1563
        %v1565 = vsel %vm334, %v1564, 0.0
        %1566 = vadd.xlane.f32.xlu0 %v1565
        %v1567 = vpop.xlane.xlu0 %1566
        %v1568 = vmul.f32 %v1564, %v1485
        %v1569 = vsel %vm334, %v1568, 0.0
        %1570 = vadd.xlane.f32.xlu0 %v1569
        %v1571 = vpop.xlane.xlu0 %1570
        %v1572 = vmul.f32 %v1567, %v1485
        %v1573 = vadd.f32 %v1572, 1.0
        %vm1574 = vcmp.gt.f32.partialorder %v1573, %v1571
        %v1575 = vsel %vm1574, 1, 0
        %v1576 = vcvt.s32.f32 %v1575
        %v1577 = vmul.f32 %v1567, %v1576
        %1579 = vrot.lane.b32.xlu0 %v1577, 125
        %v1580 = vpop.permute.xlu0 %1579
        %v1582 = vmax.f32 %v1557, %v1580
        %1583 = vset.pattern.permute.xlu0 4
        %1584 = vperm.xlu0 %1583, %v1485
        %v1585 = vpop.permute.xlu0 %1584
        %vm1587 = vcmp.ge.f32.partialorder %v1485, %v1585
        %v1588 = vsel %vm1587, 1, 0
        %v1589 = vcvt.s32.f32 %v1588
        %v1590 = vsel %vm334, %v1589, 0.0
        %1591 = vadd.xlane.f32.xlu0 %v1590
        %v1592 = vpop.xlane.xlu0 %1591
        %v1593 = vmul.f32 %v1589, %v1485
        %v1594 = vsel %vm334, %v1593, 0.0
        %1595 = vadd.xlane.f32.xlu0 %v1594
        %v1596 = vpop.xlane.xlu0 %1595
        %v1597 = vmul.f32 %v1592, %v1485
        %v1598 = vadd.f32 %v1597, 1.0
        %vm1599 = vcmp.gt.f32.partialorder %v1598, %v1596
        %v1600 = vsel %vm1599, 1, 0
        %v1601 = vcvt.s32.f32 %v1600
        %v1602 = vmul.f32 %v1592, %v1601
        %1604 = vrot.lane.b32.xlu0 %v1602, 124
        %v1605 = vpop.permute.xlu0 %1604
        %v1607 = vmax.f32 %v1582, %v1605
        %1608 = vset.pattern.permute.xlu0 5
        %1609 = vperm.xlu0 %1608, %v1485
        %v1610 = vpop.permute.xlu0 %1609
        %vm1612 = vcmp.ge.f32.partialorder %v1485, %v1610
        %v1613 = vsel %vm1612, 1, 0
        %v1614 = vcvt.s32.f32 %v1613
        %v1615 = vsel %vm334, %v1614, 0.0
        %1616 = vadd.xlane.f32.xlu0 %v1615
        %v1617 = vpop.xlane.xlu0 %1616
        %v1618 = vmul.f32 %v1614, %v1485
        %v1619 = vsel %vm334, %v1618, 0.0
        %1620 = vadd.xlane.f32.xlu0 %v1619
        %v1621 = vpop.xlane.xlu0 %1620
        %v1622 = vmul.f32 %v1617, %v1485
        %v1623 = vadd.f32 %v1622, 1.0
        %vm1624 = vcmp.gt.f32.partialorder %v1623, %v1621
        %v1625 = vsel %vm1624, 1, 0
        %v1626 = vcvt.s32.f32 %v1625
        %v1627 = vmul.f32 %v1617, %v1626
        %1629 = vrot.lane.b32.xlu0 %v1627, 123
        %v1630 = vpop.permute.xlu0 %1629
        %v1632 = vmax.f32 %v1607, %v1630
        %1633 = vset.pattern.permute.xlu0 6
        %1634 = vperm.xlu0 %1633, %v1485
        %v1635 = vpop.permute.xlu0 %1634
        %vm1637 = vcmp.ge.f32.partialorder %v1485, %v1635
        %v1638 = vsel %vm1637, 1, 0
        %v1639 = vcvt.s32.f32 %v1638
        %v1640 = vsel %vm334, %v1639, 0.0
        %1641 = vadd.xlane.f32.xlu0 %v1640
        %v1642 = vpop.xlane.xlu0 %1641
        %v1643 = vmul.f32 %v1639, %v1485
        %v1644 = vsel %vm334, %v1643, 0.0
        %1645 = vadd.xlane.f32.xlu0 %v1644
        %v1646 = vpop.xlane.xlu0 %1645
        %v1647 = vmul.f32 %v1642, %v1485
        %v1648 = vadd.f32 %v1647, 1.0
        %vm1649 = vcmp.gt.f32.partialorder %v1648, %v1646
        %v1650 = vsel %vm1649, 1, 0
        %v1651 = vcvt.s32.f32 %v1650
        %v1652 = vmul.f32 %v1642, %v1651
        %1654 = vrot.lane.b32.xlu0 %v1652, 122
        %v1655 = vpop.permute.xlu0 %1654
        %v1657 = vmax.f32 %v1632, %v1655
        %1658 = vset.pattern.permute.xlu0 7
        %1659 = vperm.xlu0 %1658, %v1485
        %v1660 = vpop.permute.xlu0 %1659
        %vm1662 = vcmp.ge.f32.partialorder %v1485, %v1660
        %v1663 = vsel %vm1662, 1, 0
        %v1664 = vcvt.s32.f32 %v1663
        %v1665 = vsel %vm334, %v1664, 0.0
        %1666 = vadd.xlane.f32.xlu0 %v1665
        %v1667 = vpop.xlane.xlu0 %1666
        %v1668 = vmul.f32 %v1664, %v1485
        %v1669 = vsel %vm334, %v1668, 0.0
        %1670 = vadd.xlane.f32.xlu0 %v1669
        %v1671 = vpop.xlane.xlu0 %1670
        %v1672 = vmul.f32 %v1667, %v1485
        %v1673 = vadd.f32 %v1672, 1.0
        %vm1674 = vcmp.gt.f32.partialorder %v1673, %v1671
        %v1675 = vsel %vm1674, 1, 0
        %v1676 = vcvt.s32.f32 %v1675
        %v1677 = vmul.f32 %v1667, %v1676
        %1679 = vrot.lane.b32.xlu0 %v1677, 121
        %v1680 = vpop.permute.xlu0 %1679
        %v1682 = vmax.f32 %v1657, %v1680
        %vm1683 = vcmp.le.f32.partialorder %v1496, %v1682
        %v1684 = vsel %vm1683, 1, 0
        %v1685 = vcvt.s32.f32 %v1684
        %v1686 = vmul.f32 %v1485, %v1685
        %v1687 = vadd.f32 %v1686, 0.0
        %vm1688 = vcmp.le.f32.partialorder %v1517, %v1682
        %v1689 = vsel %vm1688, 1, 0
        %v1690 = vcvt.s32.f32 %v1689
        %1692 = vrot.lane.b32.xlu0 %v1690, 1
        %v1693 = vpop.permute.xlu0 %1692
        %v1695 = vmul.f32 %v1485, %v1693
        %1697 = vrot.lane.b32.xlu0 %v1695, 127
        %v1698 = vpop.permute.xlu0 %1697
        %v1700 = vadd.f32 %v1687, %v1698
        %vm1701 = vcmp.le.f32.partialorder %v1542, %v1682
        %v1702 = vsel %vm1701, 1, 0
        %v1703 = vcvt.s32.f32 %v1702
        %1705 = vrot.lane.b32.xlu0 %v1703, 2
        %v1706 = vpop.permute.xlu0 %1705
        %v1708 = vmul.f32 %v1485, %v1706
        %1710 = vrot.lane.b32.xlu0 %v1708, 126
        %v1711 = vpop.permute.xlu0 %1710
        %v1713 = vadd.f32 %v1700, %v1711
        %vm1714 = vcmp.le.f32.partialorder %v1567, %v1682
        %v1715 = vsel %vm1714, 1, 0
        %v1716 = vcvt.s32.f32 %v1715
        %1718 = vrot.lane.b32.xlu0 %v1716, 3
        %v1719 = vpop.permute.xlu0 %1718
        %v1721 = vmul.f32 %v1485, %v1719
        %1723 = vrot.lane.b32.xlu0 %v1721, 125
        %v1724 = vpop.permute.xlu0 %1723
        %v1726 = vadd.f32 %v1713, %v1724
        %vm1727 = vcmp.le.f32.partialorder %v1592, %v1682
        %v1728 = vsel %vm1727, 1, 0
        %v1729 = vcvt.s32.f32 %v1728
        %1731 = vrot.lane.b32.xlu0 %v1729, 4
        %v1732 = vpop.permute.xlu0 %1731
        %v1734 = vmul.f32 %v1485, %v1732
        %1736 = vrot.lane.b32.xlu0 %v1734, 124
        %v1737 = vpop.permute.xlu0 %1736
        %v1739 = vadd.f32 %v1726, %v1737
        %vm1740 = vcmp.le.f32.partialorder %v1617, %v1682
        %v1741 = vsel %vm1740, 1, 0
        %v1742 = vcvt.s32.f32 %v1741
        %1744 = vrot.lane.b32.xlu0 %v1742, 5
        %v1745 = vpop.permute.xlu0 %1744
        %v1747 = vmul.f32 %v1485, %v1745
        %1749 = vrot.lane.b32.xlu0 %v1747, 123
        %v1750 = vpop.permute.xlu0 %1749
        %v1752 = vadd.f32 %v1739, %v1750
        %vm1753 = vcmp.le.f32.partialorder %v1642, %v1682
        %v1754 = vsel %vm1753, 1, 0
        %v1755 = vcvt.s32.f32 %v1754
        %1757 = vrot.lane.b32.xlu0 %v1755, 6
        %v1758 = vpop.permute.xlu0 %1757
        %v1760 = vmul.f32 %v1485, %v1758
        %1762 = vrot.lane.b32.xlu0 %v1760, 122
        %v1763 = vpop.permute.xlu0 %1762
        %v1765 = vadd.f32 %v1752, %v1763
        %vm1766 = vcmp.le.f32.partialorder %v1667, %v1682
        %v1767 = vsel %vm1766, 1, 0
        %v1768 = vcvt.s32.f32 %v1767
        %1770 = vrot.lane.b32.xlu0 %v1768, 7
        %v1771 = vpop.permute.xlu0 %1770
        %v1773 = vmul.f32 %v1485, %v1771
        %1775 = vrot.lane.b32.xlu0 %v1773, 121
        %v1776 = vpop.permute.xlu0 %1775
        %v1778 = vadd.f32 %v1765, %v1776
        %v1779 = vsub.f32 %v1778, 1.0
        %v1780 = vrcp.pop %v1682
        %v1781 = vmul.f32 %v1682, %v1780
        %v1782 = vsub.f32 1.0, %v1781
        %v1783 = vmul.f32 %v1780, %v1782
        %v1784 = vadd.f32 %v1780, %v1783
        %vm1785 = vweird.f32 %v1682
        %vm1786 = vweird.f32 %v1780
        %vm1787 = vmor %vm1785, %vm1786
        %v1788 = vsel %vm1787, %v1780, %v1784
        %v1789 = vand.u32 2147483647, %v1682
        %vm1790 = vcmp.eq.f32.partialorder %v1789, 8.507059e+37
        %v1791 = vand.u32 %v1682, 2147483648
        %v1792 = vor.u32 1.1754944e-38, %v1791
        %v1793 = vsel %vm1790, %v1792, %v1788
        %v1794 = vmul.f32 %v1779, %v1793
        %1796 = vset.pattern.permute.xlu0 0
        %1797 = vperm.xlu0 %1796, %v1794
        %v1798 = vpop.permute.xlu0 %1797
        %v1800 = vsub.f32 %v1485, %v1798
        %v1801 = vmax.f32 %v1800, 0.0
        %v1802 = vsel %vm367, 0.0, %v1801
        %1803 = vrot.lane.b32.xlu0 %v330, 32
        %v1804 = vpop.permute.xlu0 %1803
        %v1807 = vsel %vm334, %v1802, 0
        %1809 = vmatpush.msra.mxu0 0.0
        %1810 = vmatpush.msra.mxu0 0.0
        %1811 = vmatpush.msra.mxu0 0.0
        %1812 = vmatpush.msra.mxu0 0.0
        %1813 = vmatpush.msra.mxu0 0.0
        %1814 = vmatpush.msra.mxu0 0.0
        %1815 = vmatpush.msra.mxu0 0.0
        %1816 = vmatpush.msra.mxu0 0.0
        %1817 = vmatpush.msra.mxu0 0.0
        %1818 = vmatpush.msra.mxu0 0.0
        %1819 = vmatpush.msra.mxu0 0.0
        %1820 = vmatpush.msra.mxu0 0.0
        %1821 = vmatpush.msra.mxu0 0.0
        %1822 = vmatpush.msra.mxu0 0.0
        %1823 = vmatpush.msra.mxu0 0.0
        %1824 = vmatpush.msra.mxu0 %v1804
        %1825 = vmatmul.f32.gmra.mxu0 %v1807
        %v1826 = vpop.f32.mrf.mxu0
        %v1827 = vadd.f32 0.0, %v1826
        %1828 = vdwg.mxu0
        %v1829 = vsub.f32 1.0, %v255
        %v1831 = vsel %vm334, %v1829, 0
        %1833 = vmatpush.msra.mxu0 0.0
        %1834 = vmatpush.msra.mxu0 0.0
        %1835 = vmatpush.msra.mxu0 0.0
        %1836 = vmatpush.msra.mxu0 0.0
        %1837 = vmatpush.msra.mxu0 0.0
        %1838 = vmatpush.msra.mxu0 0.0
        %1839 = vmatpush.msra.mxu0 0.0
        %1840 = vmatpush.msra.mxu0 0.0
        %1841 = vmatpush.msra.mxu0 0.0
        %1842 = vmatpush.msra.mxu0 0.0
        %1843 = vmatpush.msra.mxu0 0.0
        %1844 = vmatpush.msra.mxu0 0.0
        %1845 = vmatpush.msra.mxu0 0.0
        %1846 = vmatpush.msra.mxu0 0.0
        %1847 = vmatpush.msra.mxu0 0.0
        %1848 = vmatpush.msra.mxu0 %v254
        %1849 = vmatmul.f32.gmra.mxu0 %v1831
        %v1850 = vpop.f32.mrf.mxu0
        %v1851 = vadd.f32 0.0, %v1850
        %1852 = vdwg.mxu0
        %v1853 = vld [vmem:[%s3] sm:$0xff]
        %v1854 = vld [vmem:[%s3 + $0x8] sm:$0xff]
        %v1855 = vld [vmem:[%s3 + $0x10] sm:$0xff]
        %v1856 = vld [vmem:[%s3 + $0x18] sm:$0xff]
        %v1857 = vld [vmem:[%s4] sm:$0x1]
        %v1859 = vperm.slane %v1857, 0
        %v1862 = vsel %vm268, %v1851, 0
        %1864 = vmatpush.msra.mxu0 0.0
        %1865 = vmatpush.msra.mxu0 0.0
        %1866 = vmatpush.msra.mxu0 0.0
        %1867 = vmatpush.msra.mxu0 0.0
        %1868 = vmatpush.msra.mxu0 0.0
        %1869 = vmatpush.msra.mxu0 0.0
        %1870 = vmatpush.msra.mxu0 0.0
        %1871 = vmatpush.msra.mxu0 0.0
        %1872 = vmatpush.msra.mxu0 0.0
        %1873 = vmatpush.msra.mxu0 0.0
        %1874 = vmatpush.msra.mxu0 0.0
        %1875 = vmatpush.msra.mxu0 0.0
        %1876 = vmatpush.msra.mxu0 %v1856
        %1877 = vmatpush.msra.mxu0 %v1855
        %1878 = vmatpush.msra.mxu0 %v1854
        %1879 = vmatpush.msra.mxu0 %v1853
        %1880 = vmatmul.f32.gmra.mxu0 %v1862
        %v1881 = vpop.f32.mrf.mxu0
        %v1882 = vadd.f32 %v1859, %v1881
        %1883 = vdwg.mxu0
        %vm1884 = vcmask 26624
        %v1885 = vsel %vm1884, %v1882, -inf
        %1886 = vmax.xlane.f32.xlu0 %v1885
        %v1887 = vpop.xlane.xlu0 %1886
        %v1888 = vsub.f32 %v1882, %v1887
        %v1889 = vmul.f32 %v1888, 1.442695
        %v1890 = vpow.pop %v1889
        %v1891 = vsel %vm1884, %v1890, 0.0
        %1892 = vadd.xlane.f32.xlu0 %v1891
        %v1893 = vpop.xlane.xlu0 %1892
        %v1894 = vrcp.pop %v1893
        %v1895 = vmul.f32 %v1893, %v1894
        %v1896 = vsub.f32 1.0, %v1895
        %v1897 = vmul.f32 %v1894, %v1896
        %v1898 = vadd.f32 %v1894, %v1897
        %vm1899 = vweird.f32 %v1893
        %vm1900 = vweird.f32 %v1894
        %vm1901 = vmor %vm1899, %vm1900
        %v1902 = vsel %vm1901, %v1894, %v1898
        %v1903 = vand.u32 2147483647, %v1893
        %vm1904 = vcmp.eq.f32.partialorder %v1903, 8.507059e+37
        %v1905 = vand.u32 %v1893, 2147483648
        %v1906 = vor.u32 1.1754944e-38, %v1905
        %v1907 = vsel %vm1904, %v1906, %v1902
        %v1908 = vmul.f32 %v1890, %v1907
        %1910 = vset.pattern.permute.xlu0 0
        %1911 = vperm.xlu0 %1910, %v1908
        %v1912 = vpop.permute.xlu0 %1911
        %v1914 = vmul.f32 %v1912, %v707
        %v1915 = vadd.f32 %v1914, 0.0
        %1916 = vset.pattern.permute.xlu0 1
        %1917 = vperm.xlu0 %1916, %v1908
        %v1918 = vpop.permute.xlu0 %1917
        %v1920 = vmul.f32 %v1918, %v1081
        %v1921 = vadd.f32 %v1915, %v1920
        %1922 = vset.pattern.permute.xlu0 2
        %1923 = vperm.xlu0 %1922, %v1908
        %v1924 = vpop.permute.xlu0 %1923
        %v1926 = vmul.f32 %v1924, %v1454
        %v1927 = vadd.f32 %v1921, %v1926
        %1928 = vset.pattern.permute.xlu0 3
        %1929 = vperm.xlu0 %1928, %v1908
        %v1930 = vpop.permute.xlu0 %1929
        %v1932 = vmul.f32 %v1930, %v1827
        %v1933 = vadd.f32 %v1927, %v1932
        %vm1934 = vcmask 256000
        %1935 = vst.msk [vmem:[%s245] sm:$0x7] %vm1934, %v1933
        %v1936 = vadd.f32 %v707, 0.0
        %v1937 = vadd.f32 %v1936, %v1081
        %v1938 = vadd.f32 %v1937, %v1454
        %v1939 = vadd.f32 %v1938, %v1827
        %v1940 = vmul.f32 %v1939, 0.25
        %vm1941 = vcmask 261123
        %1942 = vst.msk [vmem:[%s245] sm:$0xf8] %vm1941, %v1940
        %s1943 = sand.u32 %s143, 1
        %s1944 = scalar_lea.sflag [#allocation4], %s1943
        %s1945 = sand.u32 %s143, 1
        %s1946 = smul.addr %s1945, 8
        %s1947 = scalar_lea.vmem [#allocation5], %s1946
        // Predicated region
        $region45: #{tpu_custom_call.1} parent=39 // pred_check
          %p1948 = pneg %p153
        $region46: #{tpu_custom_call.1} parent=39 // pred_check_branch
          %1950 = sbr.rel (%p1948) target = $region48
        $region47: #{tpu_custom_call.1} parent=39 // pred_region
          %1952 = vsyncadd %s1944, 0
          %s1953 = smul.addr %s20, 8
          %s1954 = scalar_lea.hbm %s5, %s1953
          %s1956 = sshll.u32 %s1947, 4
          %s1957 = int_to_ptr.vmem [resolvable:$true] %s1956
          %s1958 = sshll.u32 %s1954, 4
          %s1959 = int_to_ptr.hbm [resolvable:$true] %s1958
          %1961 = dma.vmem_to_hbm [thread:$0]  %s1957, 128, %s1959, %s1944
        $region48: #{tpu_custom_call.1} parent=39 // pred_fallthru
          _
      $region40: #{tpu_custom_call.1} parent=5 // pred_fallthru
        _
      %p1962 = scmp.le.s32.totalorder 2, %s15
      // Predicated region
      $region49: #{tpu_custom_call.1} parent=5 // pred_check
        %p1963 = pneg %p1962
      $region50: #{tpu_custom_call.1} parent=5 // pred_check_branch
        %1965 = sbr.rel (%p1963) target = $region52
      $region51: #{tpu_custom_call.1} parent=5 // pred_region
        %s1966 = ssub.s32 %s15, 2
        // Predicated region
        $region53: #{tpu_custom_call.1} parent=51 // pred_check
          %p1967 = pneg %p159
        $region54: #{tpu_custom_call.1} parent=51 // pred_check_branch
          %1969 = sbr.rel (%p1967) target = $region56
        $region55: #{tpu_custom_call.1} parent=51 // pred_region
          %s1970 = sand.u32 %s144, 1
          %s1971 = scalar_lea.sflag [#allocation4], %s1970
          %s1972 = sand.u32 %s144, 1
          %s1973 = smul.addr %s1972, 8
          %s1974 = scalar_lea.vmem [#allocation5], %s1973
          %1976 = dma.done %s1971, 128
        $region56: #{tpu_custom_call.1} parent=51 // pred_fallthru
          _
      $region52: #{tpu_custom_call.1} parent=5 // pred_fallthru
        _
    $region6: #{tpu_custom_call.1} parent=1 // loop_footer
      %s19 = sadd.s32 1, %s15
    $region7: #{tpu_custom_call.1} parent=1 // loop_footer_branch
      %14 = sbr.rel target = $region3
    $region8: #{tpu_custom_call.1} parent=1 // loop_exit
      _
    %1977 = vsyncpa [#allocation3], 1
    %s1978 = scalar_lea.sflag [#allocation3], 1
    %1979 = vsyncpa %s1978, 1
    %1980 = vsyncpa [#allocation4], 1
    %s1981 = scalar_lea.sflag [#allocation4], 1
    %1982 = vsyncpa %s1981, 1

</llo_original>
